<compile_context>
chip_gen: v6e
topology: v6e:2x2x1
jax: 0.10.0
libtpu: 0.0.40
codegen_flags: <defaults>
</compile_context>

<pallas_src>
import math
import functools

import jax
import jax.numpy as jnp
from jax.experimental import pallas as pl
from jax.experimental.pallas import tpu as pltpu

NEG_INF = -1e9


# --------------------------- fused whole-model kernel ---------------------------

def _model_kernel(x_ref, mask_ref, pe_ref, embed_w_ref, embed_b_ref,
                  wqkv_ref, wo_ref, w1_ref, w2_ref, vecs_ref, o_ref,
                  *, num_heads, num_layers, eps):
    S = x_ref.shape[0]
    E = wo_ref.shape[-1]
    F = w1_ref.shape[-1]
    Dh = E // num_heads
    scale = 1.0 / math.sqrt(Dh)

    # ---- embedding linear + positional encoding (PE indexed by BATCH: reference quirk) ----
    h = jnp.dot(x_ref[...].astype(jnp.bfloat16), embed_w_ref[...],
                preferred_element_type=jnp.float32)
    h = h + embed_b_ref[...] + pe_ref[...]                              # (S, E) f32
    # dropout layers -> identity (inference mode)

    # additive key-padding bias built in-kernel from the (1, S) mask row (0 valid / -1e9 pad)
    key_bias = jnp.where(mask_ref[...] > 0.5, 0.0, NEG_INF)            # (1, S) f32

    # statically-unrolled layer loop; all weights stay VMEM-resident across layers & batch
    for l in range(num_layers):
        vecs = vecs_ref[l]                                              # (8, VMAX) f32
        bqkv = vecs[0:1, :3 * E]
        bo   = vecs[1:2, :E]
        ln1g = vecs[2:3, :E]
        ln1b = vecs[3:4, :E]
        b1   = vecs[4:5, :F]
        b2   = vecs[5:6, :E]
        ln2g = vecs[6:7, :E]
        ln2b = vecs[7:8, :E]

        # --- fused QKV projection: one (S,E)x(E,3E) matmul (bf16 in, f32 acc) ---
        qkv = jnp.dot(h.astype(jnp.bfloat16), wqkv_ref[l],
                      preferred_element_type=jnp.float32) + bqkv        # (S, 3E) f32
        # fold 1/sqrt(Dh) into q; cast q/k/v slabs to bf16 once (not per head)
        q_all = (qkv[:, :E] * scale).astype(jnp.bfloat16)
        k_all = qkv[:, E:2 * E].astype(jnp.bfloat16)
        v_all = qkv[:, 2 * E:3 * E].astype(jnp.bfloat16)

        wo_l = wo_ref[l]                                                # (E, E) bf16

        # --- multi-head attention, concat-free out-projection accumulation ---
        # TODO(synk): for long sequences, tile this flash-style over key blocks (and the FFN
        # over S/F blocks) and halve the S tile for v7x's 64 MiB VMEM; the full (S,S) score
        # tile is fine at these shapes.
        attn = bo                                                       # (1, E) broadcasts
        for hh in range(num_heads):
            q = q_all[:, hh * Dh:(hh + 1) * Dh]                         # (S, Dh)
            k = k_all[:, hh * Dh:(hh + 1) * Dh]
            v = v_all[:, hh * Dh:(hh + 1) * Dh]
            s = jax.lax.dot_general(q, k, (((1,), (1,)), ((), ())),
                                    preferred_element_type=jnp.float32)  # (S, S)
            s = s + key_bias
            s = s - jnp.max(s, axis=-1, keepdims=True)
            p = jnp.exp(s)
            p = p * pl.reciprocal(jnp.sum(p, axis=-1, keepdims=True),
                                  approx=True)                           # EUP reciprocal
            ho = jnp.dot(p.astype(jnp.bfloat16), v,
                         preferred_element_type=jnp.float32)              # (S, Dh)
            attn = attn + jnp.dot(ho.astype(jnp.bfloat16),
                                  wo_l[hh * Dh:(hh + 1) * Dh, :],
                                  preferred_element_type=jnp.float32)     # (S, E)

        # --- post-norm residual 1: LN1(h + SA(h)) ---
        y = h + attn
        mu = jnp.mean(y, axis=-1, keepdims=True)
        var = jnp.mean(jnp.square(y - mu), axis=-1, keepdims=True)
        y = (y - mu) * jax.lax.rsqrt(var + eps) * ln1g + ln1b

        # --- FFN: relu(y @ w1 + b1) @ w2 + b2 ---
        ff = jnp.dot(y.astype(jnp.bfloat16), w1_ref[l],
                     preferred_element_type=jnp.float32) + b1
        ff = jnp.maximum(ff, 0.0)
        ff = jnp.dot(ff.astype(jnp.bfloat16), w2_ref[l],
                     preferred_element_type=jnp.float32) + b2

        # --- post-norm residual 2: LN2(y + FFN(y)) ---
        z = y + ff
        mu = jnp.mean(z, axis=-1, keepdims=True)
        var = jnp.mean(jnp.square(z - mu), axis=-1, keepdims=True)
        h = (z - mu) * jax.lax.rsqrt(var + eps) * ln2g + ln2b

    # --- fused AdaptiveAvgPool1d(1): mean over the sequence (padding included, like ref) ---
    o_ref[...] = jnp.mean(h, axis=0, keepdims=True).astype(o_ref.dtype)  # (1, E)


def transformer_sequence_embedding(params, x, mask, num_heads):
    B, S, IN = x.shape
    L, E, _ = params["wo"].shape
    F = params["w1"].shape[2]
    VMAX = params["vecs"].shape[2]

    pe_b = params["pe"][:B]                                 # (B, 1, E) — batch-indexed PE quirk
    maskf = mask.astype(jnp.float32).reshape(B, 1, S)       # tiny; bias is built in-kernel

    kernel = functools.partial(_model_kernel, num_heads=num_heads,
                               num_layers=L, eps=1e-5)

    def const2(shp):
        return pl.BlockSpec(shp, lambda b: (0, 0))

    def const3(shp):
        return pl.BlockSpec(shp, lambda b: (0, 0, 0))

    out = pl.pallas_call(
        kernel,
        out_shape=jax.ShapeDtypeStruct((B, 1, E), jnp.float32),
        grid=(B,),
        in_specs=[
            pl.BlockSpec((None, S, IN), lambda b: (b, 0, 0)),   # x[b]
            pl.BlockSpec((None, 1, S), lambda b: (b, 0, 0)),    # mask row
            pl.BlockSpec((None, 1, E), lambda b: (b, 0, 0)),    # pe row (BATCH-indexed)
            const2((IN, E)),                                    # embedding weight (bf16)
            const2((1, E)),                                     # embedding bias
            const3((L, E, 3 * E)),                              # stacked fused QKV weights
            const3((L, E, E)),                                  # stacked out-proj weights
            const3((L, E, F)),                                  # stacked FFN w1
            const3((L, F, E)),                                  # stacked FFN w2
            const3((L, 8, VMAX)),                               # stacked biases + LN params
        ],
        out_specs=pl.BlockSpec((None, 1, E), lambda b: (b, 0, 0)),
        compiler_params=pltpu.CompilerParams(
            dimension_semantics=("parallel",)),                 # batch splits across v7x TCs
    )(x, maskf, pe_b,
      params["embed_w"], params["embed_b"].reshape(1, E),
      params["wqkv"], params["wo"], params["w1"], params["w2"], params["vecs"])

    return out.reshape(B, E)


# ------------------------------ parameter packing -----------------------------

def init_params(key, input_dim, embed_dim, num_heads, num_layers, ffn_dim, max_len=64):
    E, F = embed_dim, ffn_dim
    VMAX = max(3 * E, F)

    def dense(k, fan_in, fan_out):
        kw, kb = jax.random.split(k)
        w = jax.random.normal(kw, (fan_in, fan_out), jnp.float32) * 0.02
        b = jax.random.normal(kb, (fan_out,), jnp.float32) * 0.02
        return w, b

    keys = jax.random.split(key, num_layers + 1)
    embed_w, embed_b = dense(keys[0], input_dim, E)

    # Positional-encoding table — same formula as the PyTorch PositionalEncoding buffer.
    position = jnp.arange(max_len, dtype=jnp.float32)[:, None]
    div_term = jnp.exp(jnp.arange(0, E, 2, dtype=jnp.float32) * -(math.log(10000.0) / E))
    pe = jnp.zeros((max_len, 1, E), jnp.float32)
    pe = pe.at[:, 0, 0::2].set(jnp.sin(position * div_term))
    pe = pe.at[:, 0, 1::2].set(jnp.cos(position * div_term))

    wqkv_l, wo_l, w1_l, w2_l, vecs_l = [], [], [], [], []
    for i in range(num_layers):
        lk = jax.random.split(keys[i + 1], 6)
        wq, bq = dense(lk[0], E, E)
        wk, bk = dense(lk[1], E, E)
        wv, bv = dense(lk[2], E, E)
        wo, bo = dense(lk[3], E, E)
        w1, b1 = dense(lk[4], E, F)
        w2, b2 = dense(lk[5], F, E)

        # MXU operands stored bf16 (f32 accumulation in-kernel); biases/LN stay f32.
        wqkv_l.append(jnp.concatenate([wq, wk, wv], axis=1).astype(jnp.bfloat16))
        wo_l.append(wo.astype(jnp.bfloat16))
        w1_l.append(w1.astype(jnp.bfloat16))
        w2_l.append(w2.astype(jnp.bfloat16))

        # Eight tiny per-layer vectors merged into one (8, VMAX) slab (fewer DMA descriptors).
        vecs = jnp.zeros((8, VMAX), jnp.float32)
        vecs = vecs.at[0, :3 * E].set(jnp.concatenate([bq, bk, bv], axis=0))
        vecs = vecs.at[1, :E].set(bo)
        vecs = vecs.at[2, :E].set(jnp.ones((E,), jnp.float32))    # LN1 gamma
        vecs = vecs.at[3, :E].set(jnp.zeros((E,), jnp.float32))   # LN1 beta
        vecs = vecs.at[4, :F].set(b1)
        vecs = vecs.at[5, :E].set(b2)
        vecs = vecs.at[6, :E].set(jnp.ones((E,), jnp.float32))    # LN2 gamma
        vecs = vecs.at[7, :E].set(jnp.zeros((E,), jnp.float32))   # LN2 beta
        vecs_l.append(vecs)

    return dict(
        embed_w=embed_w.astype(jnp.bfloat16), embed_b=embed_b, pe=pe,
        wqkv=jnp.stack(wqkv_l),    # (L, E, 3E) bf16
        wo=jnp.stack(wo_l),        # (L, E, E)  bf16
        w1=jnp.stack(w1_l),        # (L, E, F)  bf16
        w2=jnp.stack(w2_l),        # (L, F, E)  bf16
        vecs=jnp.stack(vecs_l),    # (L, 8, VMAX) f32
    )


# ----------------------------------- main -----------------------------------

if __name__ == "__main__":
    # Scaled-down hyper-parameters consistent with the module's structure.
    # E=128 / F=256 keep every tile and the pooled output lane-dense (multiples of 128).
    B, S = 2, 8
    INPUT_DIM, EMBED_DIM, NUM_HEADS, NUM_LAYERS, FFN_DIM = 32, 128, 4, 2, 256

    key = jax.random.PRNGKey(0)
    k_param, k_x = jax.random.split(key)

    params = init_params(k_param, INPUT_DIM, EMBED_DIM, NUM_HEADS, NUM_LAYERS, FFN_DIM)
    x = jax.random.normal(k_x, (B, S, INPUT_DIM), jnp.float32)
    # mask: True = valid token (seq 0 fully valid, seq 1 has 6 valid tokens)
    lengths = jnp.array([S, 6], dtype=jnp.int32)
    mask = jnp.arange(S)[None, :] < lengths[:, None]

    out = transformer_sequence_embedding(params, x, mask, NUM_HEADS)
    out = jax.block_until_ready(out)

    assert out.shape == (B, EMBED_DIM), out.shape
    assert bool(jnp.all(jnp.isfinite(out)))
    print("KERNEL_OK")
</pallas_src>

<mosaic_0001>
module attributes {stable_mosaic.version = 11 : i64} {
  func.func @_model_kernel(%arg0: i32, %arg1: memref<1x8x32xf32, #tpu.memory_space<vmem>>, %arg2: memref<1x1x8xf32, #tpu.memory_space<vmem>>, %arg3: memref<1x1x128xf32, #tpu.memory_space<vmem>>, %arg4: memref<32x128xbf16, #tpu.memory_space<vmem>>, %arg5: memref<1x128xf32, #tpu.memory_space<vmem>>, %arg6: memref<2x128x384xbf16, #tpu.memory_space<vmem>>, %arg7: memref<2x128x128xbf16, #tpu.memory_space<vmem>>, %arg8: memref<2x128x256xbf16, #tpu.memory_space<vmem>>, %arg9: memref<2x256x128xbf16, #tpu.memory_space<vmem>>, %arg10: memref<2x8x384xf32, #tpu.memory_space<vmem>>, %arg11: memref<1x1x128xf32, #tpu.memory_space<vmem>>) attributes {dimension_semantics = [#tpu.dimension_semantics<parallel>], iteration_bounds = array<i64: 2>, scalar_prefetch = 0 : i64, scratch_operands = 0 : i64, tpu.core_type = #tpu.core_type<tc>, window_params = [{transform_indices = @transform_0, window_bounds = array<i64: 1, 8, 32>}, {transform_indices = @transform_1, window_bounds = array<i64: 1, 1, 8>}, {transform_indices = @transform_2, window_bounds = array<i64: 1, 1, 128>}, {pipeline_mode = #tpu.pipeline_mode<synchronous>, transform_indices = @transform_3, window_bounds = array<i64: 32, 128>}, {pipeline_mode = #tpu.pipeline_mode<synchronous>, transform_indices = @transform_4, window_bounds = array<i64: 1, 128>}, {pipeline_mode = #tpu.pipeline_mode<synchronous>, transform_indices = @transform_5, window_bounds = array<i64: 2, 128, 384>}, {pipeline_mode = #tpu.pipeline_mode<synchronous>, transform_indices = @transform_6, window_bounds = array<i64: 2, 128, 128>}, {pipeline_mode = #tpu.pipeline_mode<synchronous>, transform_indices = @transform_7, window_bounds = array<i64: 2, 128, 256>}, {pipeline_mode = #tpu.pipeline_mode<synchronous>, transform_indices = @transform_8, window_bounds = array<i64: 2, 256, 128>}, {pipeline_mode = #tpu.pipeline_mode<synchronous>, transform_indices = @transform_9, window_bounds = array<i64: 2, 8, 384>}, {transform_indices = @transform_10, window_bounds = array<i64: 1, 1, 128>}]} {
    %c0 = arith.constant 0 : index
    %c0_0 = arith.constant 0 : index
    %c0_1 = arith.constant 0 : index
    %0 = vector.load %arg1[%c0, %c0_0, %c0_1] : memref<1x8x32xf32, #tpu.memory_space<vmem>>, vector<1x8x32xf32>
    %1 = vector.shape_cast %0 : vector<1x8x32xf32> to vector<8x32xf32>
    %2 = arith.truncf %1 : vector<8x32xf32> to vector<8x32xbf16>
    %c0_2 = arith.constant 0 : index
    %c0_3 = arith.constant 0 : index
    %3 = vector.load %arg4[%c0_2, %c0_3] : memref<32x128xbf16, #tpu.memory_space<vmem>>, vector<32x128xbf16>
    %cst = arith.constant dense<0.000000e+00> : vector<8x128xf32>
    %4 = tpu.matmul %2, %3, %cst {dimension_numbers = #tpu.dot_dimension_numbers<[1], [0], [0], [1], [0, 0, 1, 1], [], []>} : vector<8x32xbf16>, vector<32x128xbf16>, vector<8x128xf32> -> vector<8x128xf32>
    %c0_4 = arith.constant 0 : index
    %c0_5 = arith.constant 0 : index
    %5 = vector.load %arg5[%c0_4, %c0_5] : memref<1x128xf32, #tpu.memory_space<vmem>>, vector<1x128xf32>
    %6 = vector.broadcast %5 : vector<1x128xf32> to vector<8x128xf32>
    %7 = arith.addf %4, %6 : vector<8x128xf32>
    %c0_6 = arith.constant 0 : index
    %c0_7 = arith.constant 0 : index
    %c0_8 = arith.constant 0 : index
    %8 = vector.load %arg3[%c0_6, %c0_7, %c0_8] : memref<1x1x128xf32, #tpu.memory_space<vmem>>, vector<1x1x128xf32>
    %9 = vector.shape_cast %8 : vector<1x1x128xf32> to vector<1x128xf32>
    %10 = vector.broadcast %9 : vector<1x128xf32> to vector<8x128xf32>
    %11 = arith.addf %7, %10 : vector<8x128xf32>
    %c0_9 = arith.constant 0 : index
    %c0_10 = arith.constant 0 : index
    %c0_11 = arith.constant 0 : index
    %12 = vector.load %arg2[%c0_9, %c0_10, %c0_11] : memref<1x1x8xf32, #tpu.memory_space<vmem>>, vector<1x1x8xf32>
    %13 = vector.shape_cast %12 : vector<1x1x8xf32> to vector<1x8xf32>
    %cst_12 = arith.constant 5.000000e-01 : f32
    %14 = vector.broadcast %cst_12 : f32 to vector<1x8xf32>
    %15 = arith.cmpf ogt, %13, %14 : vector<1x8xf32>
    %cst_13 = arith.constant 0.000000e+00 : f32
    %cst_14 = arith.constant -1.000000e+09 : f32
    %16 = vector.broadcast %cst_13 : f32 to vector<1x8xf32>
    %17 = vector.broadcast %cst_14 : f32 to vector<1x8xf32>
    %18 = arith.select %15, %16, %17 : vector<1x8xi1>, vector<1x8xf32>
    %c0_15 = arith.constant 0 : index
    %c0_16 = arith.constant 0 : index
    %c0_17 = arith.constant 0 : index
    %19 = vector.load %arg10[%c0_15, %c0_16, %c0_17] : memref<2x8x384xf32, #tpu.memory_space<vmem>>, vector<1x8x384xf32>
    %20 = vector.shape_cast %19 : vector<1x8x384xf32> to vector<8x384xf32>
    %21 = vector.extract_strided_slice %20 {offsets = [0, 0], sizes = [1, 384], strides = [1, 1]} : vector<8x384xf32> to vector<1x384xf32>
    %22 = vector.extract_strided_slice %20 {offsets = [1, 0], sizes = [1, 128], strides = [1, 1]} : vector<8x384xf32> to vector<1x128xf32>
    %23 = vector.extract_strided_slice %20 {offsets = [2, 0], sizes = [1, 128], strides = [1, 1]} : vector<8x384xf32> to vector<1x128xf32>
    %24 = vector.extract_strided_slice %20 {offsets = [3, 0], sizes = [1, 128], strides = [1, 1]} : vector<8x384xf32> to vector<1x128xf32>
    %25 = vector.extract_strided_slice %20 {offsets = [4, 0], sizes = [1, 256], strides = [1, 1]} : vector<8x384xf32> to vector<1x256xf32>
    %26 = vector.extract_strided_slice %20 {offsets = [5, 0], sizes = [1, 128], strides = [1, 1]} : vector<8x384xf32> to vector<1x128xf32>
    %27 = vector.extract_strided_slice %20 {offsets = [6, 0], sizes = [1, 128], strides = [1, 1]} : vector<8x384xf32> to vector<1x128xf32>
    %28 = vector.extract_strided_slice %20 {offsets = [7, 0], sizes = [1, 128], strides = [1, 1]} : vector<8x384xf32> to vector<1x128xf32>
    %29 = arith.truncf %11 : vector<8x128xf32> to vector<8x128xbf16>
    %c0_18 = arith.constant 0 : index
    %c0_19 = arith.constant 0 : index
    %c0_20 = arith.constant 0 : index
    %30 = vector.load %arg6[%c0_18, %c0_19, %c0_20] : memref<2x128x384xbf16, #tpu.memory_space<vmem>>, vector<1x128x384xbf16>
    %31 = vector.shape_cast %30 : vector<1x128x384xbf16> to vector<128x384xbf16>
    %cst_21 = arith.constant dense<0.000000e+00> : vector<8x384xf32>
    %32 = tpu.matmul %29, %31, %cst_21 {dimension_numbers = #tpu.dot_dimension_numbers<[1], [0], [0], [1], [0, 0, 1, 1], [], []>} : vector<8x128xbf16>, vector<128x384xbf16>, vector<8x384xf32> -> vector<8x384xf32>
    %33 = vector.broadcast %21 : vector<1x384xf32> to vector<8x384xf32>
    %34 = arith.addf %32, %33 : vector<8x384xf32>
    %35 = vector.extract_strided_slice %34 {offsets = [0, 0], sizes = [8, 128], strides = [1, 1]} : vector<8x384xf32> to vector<8x128xf32>
    %cst_22 = arith.constant 0.176776692 : f32
    %36 = vector.broadcast %cst_22 : f32 to vector<8x128xf32>
    %37 = arith.mulf %35, %36 : vector<8x128xf32>
    %38 = arith.truncf %37 : vector<8x128xf32> to vector<8x128xbf16>
    %39 = vector.extract_strided_slice %34 {offsets = [0, 128], sizes = [8, 128], strides = [1, 1]} : vector<8x384xf32> to vector<8x128xf32>
    %40 = arith.truncf %39 : vector<8x128xf32> to vector<8x128xbf16>
    %41 = vector.extract_strided_slice %34 {offsets = [0, 256], sizes = [8, 128], strides = [1, 1]} : vector<8x384xf32> to vector<8x128xf32>
    %42 = arith.truncf %41 : vector<8x128xf32> to vector<8x128xbf16>
    %c0_23 = arith.constant 0 : index
    %c0_24 = arith.constant 0 : index
    %c0_25 = arith.constant 0 : index
    %43 = vector.load %arg7[%c0_23, %c0_24, %c0_25] : memref<2x128x128xbf16, #tpu.memory_space<vmem>>, vector<1x128x128xbf16>
    %44 = vector.shape_cast %43 : vector<1x128x128xbf16> to vector<128x128xbf16>
    %45 = vector.extract_strided_slice %38 {offsets = [0, 0], sizes = [8, 32], strides = [1, 1]} : vector<8x128xbf16> to vector<8x32xbf16>
    %46 = vector.extract_strided_slice %40 {offsets = [0, 0], sizes = [8, 32], strides = [1, 1]} : vector<8x128xbf16> to vector<8x32xbf16>
    %47 = vector.extract_strided_slice %42 {offsets = [0, 0], sizes = [8, 32], strides = [1, 1]} : vector<8x128xbf16> to vector<8x32xbf16>
    %cst_26 = arith.constant dense<0.000000e+00> : vector<8x8xf32>
    %48 = tpu.matmul %45, %46, %cst_26 {dimension_numbers = #tpu.dot_dimension_numbers<[1], [1], [0], [0], [0, 0, 1, 0], [], []>} : vector<8x32xbf16>, vector<8x32xbf16>, vector<8x8xf32> -> vector<8x8xf32>
    %49 = vector.broadcast %18 : vector<1x8xf32> to vector<8x8xf32>
    %50 = arith.addf %48, %49 : vector<8x8xf32>
    %cst_27 = arith.constant dense<0xFF800000> : vector<8xf32>
    %51 = vector.multi_reduction <maximumf>, %50, %cst_27 [1] : vector<8x8xf32> to vector<8xf32>
    %52 = vector.shape_cast %51 : vector<8xf32> to vector<8x1xf32>
    %53 = vector.broadcast %52 : vector<8x1xf32> to vector<8x8xf32>
    %54 = arith.subf %50, %53 : vector<8x8xf32>
    %55 = math.exp %54 : vector<8x8xf32>
    %cst_28 = arith.constant dense<0.000000e+00> : vector<8xf32>
    %56 = vector.multi_reduction <add>, %55, %cst_28 [1] : vector<8x8xf32> to vector<8xf32>
    %57 = vector.shape_cast %56 : vector<8xf32> to vector<8x1xf32>
    %58 = tpu.reciprocal %57 {approx = true} : vector<8x1xf32> -> vector<8x1xf32>
    %59 = vector.broadcast %58 : vector<8x1xf32> to vector<8x8xf32>
    %60 = arith.mulf %55, %59 : vector<8x8xf32>
    %61 = arith.truncf %60 : vector<8x8xf32> to vector<8x8xbf16>
    %cst_29 = arith.constant dense<0.000000e+00> : vector<8x32xf32>
    %62 = tpu.matmul %61, %47, %cst_29 {dimension_numbers = #tpu.dot_dimension_numbers<[1], [0], [0], [1], [0, 0, 1, 1], [], []>} : vector<8x8xbf16>, vector<8x32xbf16>, vector<8x32xf32> -> vector<8x32xf32>
    %63 = arith.truncf %62 : vector<8x32xf32> to vector<8x32xbf16>
    %64 = vector.extract_strided_slice %44 {offsets = [0, 0], sizes = [32, 128], strides = [1, 1]} : vector<128x128xbf16> to vector<32x128xbf16>
    %cst_30 = arith.constant dense<0.000000e+00> : vector<8x128xf32>
    %65 = tpu.matmul %63, %64, %cst_30 {dimension_numbers = #tpu.dot_dimension_numbers<[1], [0], [0], [1], [0, 0, 1, 1], [], []>} : vector<8x32xbf16>, vector<32x128xbf16>, vector<8x128xf32> -> vector<8x128xf32>
    %66 = vector.broadcast %22 : vector<1x128xf32> to vector<8x128xf32>
    %67 = arith.addf %66, %65 : vector<8x128xf32>
    %68 = vector.extract_strided_slice %38 {offsets = [0, 32], sizes = [8, 32], strides = [1, 1]} : vector<8x128xbf16> to vector<8x32xbf16>
    %69 = vector.extract_strided_slice %40 {offsets = [0, 32], sizes = [8, 32], strides = [1, 1]} : vector<8x128xbf16> to vector<8x32xbf16>
    %70 = vector.extract_strided_slice %42 {offsets = [0, 32], sizes = [8, 32], strides = [1, 1]} : vector<8x128xbf16> to vector<8x32xbf16>
    %cst_31 = arith.constant dense<0.000000e+00> : vector<8x8xf32>
    %71 = tpu.matmul %68, %69, %cst_31 {dimension_numbers = #tpu.dot_dimension_numbers<[1], [1], [0], [0], [0, 0, 1, 0], [], []>} : vector<8x32xbf16>, vector<8x32xbf16>, vector<8x8xf32> -> vector<8x8xf32>
    %72 = vector.broadcast %18 : vector<1x8xf32> to vector<8x8xf32>
    %73 = arith.addf %71, %72 : vector<8x8xf32>
    %cst_32 = arith.constant dense<0xFF800000> : vector<8xf32>
    %74 = vector.multi_reduction <maximumf>, %73, %cst_32 [1] : vector<8x8xf32> to vector<8xf32>
    %75 = vector.shape_cast %74 : vector<8xf32> to vector<8x1xf32>
    %76 = vector.broadcast %75 : vector<8x1xf32> to vector<8x8xf32>
    %77 = arith.subf %73, %76 : vector<8x8xf32>
    %78 = math.exp %77 : vector<8x8xf32>
    %cst_33 = arith.constant dense<0.000000e+00> : vector<8xf32>
    %79 = vector.multi_reduction <add>, %78, %cst_33 [1] : vector<8x8xf32> to vector<8xf32>
    %80 = vector.shape_cast %79 : vector<8xf32> to vector<8x1xf32>
    %81 = tpu.reciprocal %80 {approx = true} : vector<8x1xf32> -> vector<8x1xf32>
    %82 = vector.broadcast %81 : vector<8x1xf32> to vector<8x8xf32>
    %83 = arith.mulf %78, %82 : vector<8x8xf32>
    %84 = arith.truncf %83 : vector<8x8xf32> to vector<8x8xbf16>
    %cst_34 = arith.constant dense<0.000000e+00> : vector<8x32xf32>
    %85 = tpu.matmul %84, %70, %cst_34 {dimension_numbers = #tpu.dot_dimension_numbers<[1], [0], [0], [1], [0, 0, 1, 1], [], []>} : vector<8x8xbf16>, vector<8x32xbf16>, vector<8x32xf32> -> vector<8x32xf32>
    %86 = arith.truncf %85 : vector<8x32xf32> to vector<8x32xbf16>
    %87 = vector.extract_strided_slice %44 {offsets = [32, 0], sizes = [32, 128], strides = [1, 1]} : vector<128x128xbf16> to vector<32x128xbf16>
    %cst_35 = arith.constant dense<0.000000e+00> : vector<8x128xf32>
    %88 = tpu.matmul %86, %87, %cst_35 {dimension_numbers = #tpu.dot_dimension_numbers<[1], [0], [0], [1], [0, 0, 1, 1], [], []>} : vector<8x32xbf16>, vector<32x128xbf16>, vector<8x128xf32> -> vector<8x128xf32>
    %89 = arith.addf %67, %88 : vector<8x128xf32>
    %90 = vector.extract_strided_slice %38 {offsets = [0, 64], sizes = [8, 32], strides = [1, 1]} : vector<8x128xbf16> to vector<8x32xbf16>
    %91 = vector.extract_strided_slice %40 {offsets = [0, 64], sizes = [8, 32], strides = [1, 1]} : vector<8x128xbf16> to vector<8x32xbf16>
    %92 = vector.extract_strided_slice %42 {offsets = [0, 64], sizes = [8, 32], strides = [1, 1]} : vector<8x128xbf16> to vector<8x32xbf16>
    %cst_36 = arith.constant dense<0.000000e+00> : vector<8x8xf32>
    %93 = tpu.matmul %90, %91, %cst_36 {dimension_numbers = #tpu.dot_dimension_numbers<[1], [1], [0], [0], [0, 0, 1, 0], [], []>} : vector<8x32xbf16>, vector<8x32xbf16>, vector<8x8xf32> -> vector<8x8xf32>
    %94 = vector.broadcast %18 : vector<1x8xf32> to vector<8x8xf32>
    %95 = arith.addf %93, %94 : vector<8x8xf32>
    %cst_37 = arith.constant dense<0xFF800000> : vector<8xf32>
    %96 = vector.multi_reduction <maximumf>, %95, %cst_37 [1] : vector<8x8xf32> to vector<8xf32>
    %97 = vector.shape_cast %96 : vector<8xf32> to vector<8x1xf32>
    %98 = vector.broadcast %97 : vector<8x1xf32> to vector<8x8xf32>
    %99 = arith.subf %95, %98 : vector<8x8xf32>
    %100 = math.exp %99 : vector<8x8xf32>
    %cst_38 = arith.constant dense<0.000000e+00> : vector<8xf32>
    %101 = vector.multi_reduction <add>, %100, %cst_38 [1] : vector<8x8xf32> to vector<8xf32>
    %102 = vector.shape_cast %101 : vector<8xf32> to vector<8x1xf32>
    %103 = tpu.reciprocal %102 {approx = true} : vector<8x1xf32> -> vector<8x1xf32>
    %104 = vector.broadcast %103 : vector<8x1xf32> to vector<8x8xf32>
    %105 = arith.mulf %100, %104 : vector<8x8xf32>
    %106 = arith.truncf %105 : vector<8x8xf32> to vector<8x8xbf16>
    %cst_39 = arith.constant dense<0.000000e+00> : vector<8x32xf32>
    %107 = tpu.matmul %106, %92, %cst_39 {dimension_numbers = #tpu.dot_dimension_numbers<[1], [0], [0], [1], [0, 0, 1, 1], [], []>} : vector<8x8xbf16>, vector<8x32xbf16>, vector<8x32xf32> -> vector<8x32xf32>
    %108 = arith.truncf %107 : vector<8x32xf32> to vector<8x32xbf16>
    %109 = vector.extract_strided_slice %44 {offsets = [64, 0], sizes = [32, 128], strides = [1, 1]} : vector<128x128xbf16> to vector<32x128xbf16>
    %cst_40 = arith.constant dense<0.000000e+00> : vector<8x128xf32>
    %110 = tpu.matmul %108, %109, %cst_40 {dimension_numbers = #tpu.dot_dimension_numbers<[1], [0], [0], [1], [0, 0, 1, 1], [], []>} : vector<8x32xbf16>, vector<32x128xbf16>, vector<8x128xf32> -> vector<8x128xf32>
    %111 = arith.addf %89, %110 : vector<8x128xf32>
    %112 = vector.extract_strided_slice %38 {offsets = [0, 96], sizes = [8, 32], strides = [1, 1]} : vector<8x128xbf16> to vector<8x32xbf16>
    %113 = vector.extract_strided_slice %40 {offsets = [0, 96], sizes = [8, 32], strides = [1, 1]} : vector<8x128xbf16> to vector<8x32xbf16>
    %114 = vector.extract_strided_slice %42 {offsets = [0, 96], sizes = [8, 32], strides = [1, 1]} : vector<8x128xbf16> to vector<8x32xbf16>
    %cst_41 = arith.constant dense<0.000000e+00> : vector<8x8xf32>
    %115 = tpu.matmul %112, %113, %cst_41 {dimension_numbers = #tpu.dot_dimension_numbers<[1], [1], [0], [0], [0, 0, 1, 0], [], []>} : vector<8x32xbf16>, vector<8x32xbf16>, vector<8x8xf32> -> vector<8x8xf32>
    %116 = vector.broadcast %18 : vector<1x8xf32> to vector<8x8xf32>
    %117 = arith.addf %115, %116 : vector<8x8xf32>
    %cst_42 = arith.constant dense<0xFF800000> : vector<8xf32>
    %118 = vector.multi_reduction <maximumf>, %117, %cst_42 [1] : vector<8x8xf32> to vector<8xf32>
    %119 = vector.shape_cast %118 : vector<8xf32> to vector<8x1xf32>
    %120 = vector.broadcast %119 : vector<8x1xf32> to vector<8x8xf32>
    %121 = arith.subf %117, %120 : vector<8x8xf32>
    %122 = math.exp %121 : vector<8x8xf32>
    %cst_43 = arith.constant dense<0.000000e+00> : vector<8xf32>
    %123 = vector.multi_reduction <add>, %122, %cst_43 [1] : vector<8x8xf32> to vector<8xf32>
    %124 = vector.shape_cast %123 : vector<8xf32> to vector<8x1xf32>
    %125 = tpu.reciprocal %124 {approx = true} : vector<8x1xf32> -> vector<8x1xf32>
    %126 = vector.broadcast %125 : vector<8x1xf32> to vector<8x8xf32>
    %127 = arith.mulf %122, %126 : vector<8x8xf32>
    %128 = arith.truncf %127 : vector<8x8xf32> to vector<8x8xbf16>
    %cst_44 = arith.constant dense<0.000000e+00> : vector<8x32xf32>
    %129 = tpu.matmul %128, %114, %cst_44 {dimension_numbers = #tpu.dot_dimension_numbers<[1], [0], [0], [1], [0, 0, 1, 1], [], []>} : vector<8x8xbf16>, vector<8x32xbf16>, vector<8x32xf32> -> vector<8x32xf32>
    %130 = arith.truncf %129 : vector<8x32xf32> to vector<8x32xbf16>
    %131 = vector.extract_strided_slice %44 {offsets = [96, 0], sizes = [32, 128], strides = [1, 1]} : vector<128x128xbf16> to vector<32x128xbf16>
    %cst_45 = arith.constant dense<0.000000e+00> : vector<8x128xf32>
    %132 = tpu.matmul %130, %131, %cst_45 {dimension_numbers = #tpu.dot_dimension_numbers<[1], [0], [0], [1], [0, 0, 1, 1], [], []>} : vector<8x32xbf16>, vector<32x128xbf16>, vector<8x128xf32> -> vector<8x128xf32>
    %133 = arith.addf %111, %132 : vector<8x128xf32>
    %134 = arith.addf %11, %133 : vector<8x128xf32>
    %cst_46 = arith.constant dense<0.000000e+00> : vector<8xf32>
    %135 = vector.multi_reduction <add>, %134, %cst_46 [1] : vector<8x128xf32> to vector<8xf32>
    %136 = vector.shape_cast %135 : vector<8xf32> to vector<8x1xf32>
    %cst_47 = arith.constant 1.280000e+02 : f32
    %137 = vector.broadcast %cst_47 : f32 to vector<8x1xf32>
    %138 = arith.divf %136, %137 : vector<8x1xf32>
    %139 = vector.broadcast %138 : vector<8x1xf32> to vector<8x128xf32>
    %140 = arith.subf %134, %139 : vector<8x128xf32>
    %141 = arith.mulf %140, %140 : vector<8x128xf32>
    %cst_48 = arith.constant dense<0.000000e+00> : vector<8xf32>
    %142 = vector.multi_reduction <add>, %141, %cst_48 [1] : vector<8x128xf32> to vector<8xf32>
    %143 = vector.shape_cast %142 : vector<8xf32> to vector<8x1xf32>
    %cst_49 = arith.constant 1.280000e+02 : f32
    %144 = vector.broadcast %cst_49 : f32 to vector<8x1xf32>
    %145 = arith.divf %143, %144 : vector<8x1xf32>
    %146 = vector.broadcast %138 : vector<8x1xf32> to vector<8x128xf32>
    %147 = arith.subf %134, %146 : vector<8x128xf32>
    %cst_50 = arith.constant 9.99999974E-6 : f32
    %148 = vector.broadcast %cst_50 : f32 to vector<8x1xf32>
    %149 = arith.addf %145, %148 : vector<8x1xf32>
    %150 = math.rsqrt %149 : vector<8x1xf32>
    %151 = vector.broadcast %150 : vector<8x1xf32> to vector<8x128xf32>
    %152 = arith.mulf %147, %151 : vector<8x128xf32>
    %153 = vector.broadcast %23 : vector<1x128xf32> to vector<8x128xf32>
    %154 = arith.mulf %152, %153 : vector<8x128xf32>
    %155 = vector.broadcast %24 : vector<1x128xf32> to vector<8x128xf32>
    %156 = arith.addf %154, %155 : vector<8x128xf32>
    %157 = arith.truncf %156 : vector<8x128xf32> to vector<8x128xbf16>
    %c0_51 = arith.constant 0 : index
    %c0_52 = arith.constant 0 : index
    %c0_53 = arith.constant 0 : index
    %158 = vector.load %arg8[%c0_51, %c0_52, %c0_53] : memref<2x128x256xbf16, #tpu.memory_space<vmem>>, vector<1x128x256xbf16>
    %159 = vector.shape_cast %158 : vector<1x128x256xbf16> to vector<128x256xbf16>
    %cst_54 = arith.constant dense<0.000000e+00> : vector<8x256xf32>
    %160 = tpu.matmul %157, %159, %cst_54 {dimension_numbers = #tpu.dot_dimension_numbers<[1], [0], [0], [1], [0, 0, 1, 1], [], []>} : vector<8x128xbf16>, vector<128x256xbf16>, vector<8x256xf32> -> vector<8x256xf32>
    %161 = vector.broadcast %25 : vector<1x256xf32> to vector<8x256xf32>
    %162 = arith.addf %160, %161 : vector<8x256xf32>
    %cst_55 = arith.constant 0.000000e+00 : f32
    %163 = vector.broadcast %cst_55 : f32 to vector<8x256xf32>
    %164 = arith.maximumf %162, %163 : vector<8x256xf32>
    %165 = arith.truncf %164 : vector<8x256xf32> to vector<8x256xbf16>
    %c0_56 = arith.constant 0 : index
    %c0_57 = arith.constant 0 : index
    %c0_58 = arith.constant 0 : index
    %166 = vector.load %arg9[%c0_56, %c0_57, %c0_58] : memref<2x256x128xbf16, #tpu.memory_space<vmem>>, vector<1x256x128xbf16>
    %167 = vector.shape_cast %166 : vector<1x256x128xbf16> to vector<256x128xbf16>
    %cst_59 = arith.constant dense<0.000000e+00> : vector<8x128xf32>
    %168 = tpu.matmul %165, %167, %cst_59 {dimension_numbers = #tpu.dot_dimension_numbers<[1], [0], [0], [1], [0, 0, 1, 1], [], []>} : vector<8x256xbf16>, vector<256x128xbf16>, vector<8x128xf32> -> vector<8x128xf32>
    %169 = vector.broadcast %26 : vector<1x128xf32> to vector<8x128xf32>
    %170 = arith.addf %168, %169 : vector<8x128xf32>
    %171 = arith.addf %156, %170 : vector<8x128xf32>
    %cst_60 = arith.constant dense<0.000000e+00> : vector<8xf32>
    %172 = vector.multi_reduction <add>, %171, %cst_60 [1] : vector<8x128xf32> to vector<8xf32>
    %173 = vector.shape_cast %172 : vector<8xf32> to vector<8x1xf32>
    %cst_61 = arith.constant 1.280000e+02 : f32
    %174 = vector.broadcast %cst_61 : f32 to vector<8x1xf32>
    %175 = arith.divf %173, %174 : vector<8x1xf32>
    %176 = vector.broadcast %175 : vector<8x1xf32> to vector<8x128xf32>
    %177 = arith.subf %171, %176 : vector<8x128xf32>
    %178 = arith.mulf %177, %177 : vector<8x128xf32>
    %cst_62 = arith.constant dense<0.000000e+00> : vector<8xf32>
    %179 = vector.multi_reduction <add>, %178, %cst_62 [1] : vector<8x128xf32> to vector<8xf32>
    %180 = vector.shape_cast %179 : vector<8xf32> to vector<8x1xf32>
    %cst_63 = arith.constant 1.280000e+02 : f32
    %181 = vector.broadcast %cst_63 : f32 to vector<8x1xf32>
    %182 = arith.divf %180, %181 : vector<8x1xf32>
    %183 = vector.broadcast %175 : vector<8x1xf32> to vector<8x128xf32>
    %184 = arith.subf %171, %183 : vector<8x128xf32>
    %cst_64 = arith.constant 9.99999974E-6 : f32
    %185 = vector.broadcast %cst_64 : f32 to vector<8x1xf32>
    %186 = arith.addf %182, %185 : vector<8x1xf32>
    %187 = math.rsqrt %186 : vector<8x1xf32>
    %188 = vector.broadcast %187 : vector<8x1xf32> to vector<8x128xf32>
    %189 = arith.mulf %184, %188 : vector<8x128xf32>
    %190 = vector.broadcast %27 : vector<1x128xf32> to vector<8x128xf32>
    %191 = arith.mulf %189, %190 : vector<8x128xf32>
    %192 = vector.broadcast %28 : vector<1x128xf32> to vector<8x128xf32>
    %193 = arith.addf %191, %192 : vector<8x128xf32>
    %c1 = arith.constant 1 : index
    %c0_65 = arith.constant 0 : index
    %c0_66 = arith.constant 0 : index
    %194 = vector.load %arg10[%c1, %c0_65, %c0_66] : memref<2x8x384xf32, #tpu.memory_space<vmem>>, vector<1x8x384xf32>
    %195 = vector.shape_cast %194 : vector<1x8x384xf32> to vector<8x384xf32>
    %196 = vector.extract_strided_slice %195 {offsets = [0, 0], sizes = [1, 384], strides = [1, 1]} : vector<8x384xf32> to vector<1x384xf32>
    %197 = vector.extract_strided_slice %195 {offsets = [1, 0], sizes = [1, 128], strides = [1, 1]} : vector<8x384xf32> to vector<1x128xf32>
    %198 = vector.extract_strided_slice %195 {offsets = [2, 0], sizes = [1, 128], strides = [1, 1]} : vector<8x384xf32> to vector<1x128xf32>
    %199 = vector.extract_strided_slice %195 {offsets = [3, 0], sizes = [1, 128], strides = [1, 1]} : vector<8x384xf32> to vector<1x128xf32>
    %200 = vector.extract_strided_slice %195 {offsets = [4, 0], sizes = [1, 256], strides = [1, 1]} : vector<8x384xf32> to vector<1x256xf32>
    %201 = vector.extract_strided_slice %195 {offsets = [5, 0], sizes = [1, 128], strides = [1, 1]} : vector<8x384xf32> to vector<1x128xf32>
    %202 = vector.extract_strided_slice %195 {offsets = [6, 0], sizes = [1, 128], strides = [1, 1]} : vector<8x384xf32> to vector<1x128xf32>
    %203 = vector.extract_strided_slice %195 {offsets = [7, 0], sizes = [1, 128], strides = [1, 1]} : vector<8x384xf32> to vector<1x128xf32>
    %204 = arith.truncf %193 : vector<8x128xf32> to vector<8x128xbf16>
    %c1_67 = arith.constant 1 : index
    %c0_68 = arith.constant 0 : index
    %c0_69 = arith.constant 0 : index
    %205 = vector.load %arg6[%c1_67, %c0_68, %c0_69] : memref<2x128x384xbf16, #tpu.memory_space<vmem>>, vector<1x128x384xbf16>
    %206 = vector.shape_cast %205 : vector<1x128x384xbf16> to vector<128x384xbf16>
    %cst_70 = arith.constant dense<0.000000e+00> : vector<8x384xf32>
    %207 = tpu.matmul %204, %206, %cst_70 {dimension_numbers = #tpu.dot_dimension_numbers<[1], [0], [0], [1], [0, 0, 1, 1], [], []>} : vector<8x128xbf16>, vector<128x384xbf16>, vector<8x384xf32> -> vector<8x384xf32>
    %208 = vector.broadcast %196 : vector<1x384xf32> to vector<8x384xf32>
    %209 = arith.addf %207, %208 : vector<8x384xf32>
    %210 = vector.extract_strided_slice %209 {offsets = [0, 0], sizes = [8, 128], strides = [1, 1]} : vector<8x384xf32> to vector<8x128xf32>
    %cst_71 = arith.constant 0.176776692 : f32
    %211 = vector.broadcast %cst_71 : f32 to vector<8x128xf32>
    %212 = arith.mulf %210, %211 : vector<8x128xf32>
    %213 = arith.truncf %212 : vector<8x128xf32> to vector<8x128xbf16>
    %214 = vector.extract_strided_slice %209 {offsets = [0, 128], sizes = [8, 128], strides = [1, 1]} : vector<8x384xf32> to vector<8x128xf32>
    %215 = arith.truncf %214 : vector<8x128xf32> to vector<8x128xbf16>
    %216 = vector.extract_strided_slice %209 {offsets = [0, 256], sizes = [8, 128], strides = [1, 1]} : vector<8x384xf32> to vector<8x128xf32>
    %217 = arith.truncf %216 : vector<8x128xf32> to vector<8x128xbf16>
    %c1_72 = arith.constant 1 : index
    %c0_73 = arith.constant 0 : index
    %c0_74 = arith.constant 0 : index
    %218 = vector.load %arg7[%c1_72, %c0_73, %c0_74] : memref<2x128x128xbf16, #tpu.memory_space<vmem>>, vector<1x128x128xbf16>
    %219 = vector.shape_cast %218 : vector<1x128x128xbf16> to vector<128x128xbf16>
    %220 = vector.extract_strided_slice %213 {offsets = [0, 0], sizes = [8, 32], strides = [1, 1]} : vector<8x128xbf16> to vector<8x32xbf16>
    %221 = vector.extract_strided_slice %215 {offsets = [0, 0], sizes = [8, 32], strides = [1, 1]} : vector<8x128xbf16> to vector<8x32xbf16>
    %222 = vector.extract_strided_slice %217 {offsets = [0, 0], sizes = [8, 32], strides = [1, 1]} : vector<8x128xbf16> to vector<8x32xbf16>
    %cst_75 = arith.constant dense<0.000000e+00> : vector<8x8xf32>
    %223 = tpu.matmul %220, %221, %cst_75 {dimension_numbers = #tpu.dot_dimension_numbers<[1], [1], [0], [0], [0, 0, 1, 0], [], []>} : vector<8x32xbf16>, vector<8x32xbf16>, vector<8x8xf32> -> vector<8x8xf32>
    %224 = vector.broadcast %18 : vector<1x8xf32> to vector<8x8xf32>
    %225 = arith.addf %223, %224 : vector<8x8xf32>
    %cst_76 = arith.constant dense<0xFF800000> : vector<8xf32>
    %226 = vector.multi_reduction <maximumf>, %225, %cst_76 [1] : vector<8x8xf32> to vector<8xf32>
    %227 = vector.shape_cast %226 : vector<8xf32> to vector<8x1xf32>
    %228 = vector.broadcast %227 : vector<8x1xf32> to vector<8x8xf32>
    %229 = arith.subf %225, %228 : vector<8x8xf32>
    %230 = math.exp %229 : vector<8x8xf32>
    %cst_77 = arith.constant dense<0.000000e+00> : vector<8xf32>
    %231 = vector.multi_reduction <add>, %230, %cst_77 [1] : vector<8x8xf32> to vector<8xf32>
    %232 = vector.shape_cast %231 : vector<8xf32> to vector<8x1xf32>
    %233 = tpu.reciprocal %232 {approx = true} : vector<8x1xf32> -> vector<8x1xf32>
    %234 = vector.broadcast %233 : vector<8x1xf32> to vector<8x8xf32>
    %235 = arith.mulf %230, %234 : vector<8x8xf32>
    %236 = arith.truncf %235 : vector<8x8xf32> to vector<8x8xbf16>
    %cst_78 = arith.constant dense<0.000000e+00> : vector<8x32xf32>
    %237 = tpu.matmul %236, %222, %cst_78 {dimension_numbers = #tpu.dot_dimension_numbers<[1], [0], [0], [1], [0, 0, 1, 1], [], []>} : vector<8x8xbf16>, vector<8x32xbf16>, vector<8x32xf32> -> vector<8x32xf32>
    %238 = arith.truncf %237 : vector<8x32xf32> to vector<8x32xbf16>
    %239 = vector.extract_strided_slice %219 {offsets = [0, 0], sizes = [32, 128], strides = [1, 1]} : vector<128x128xbf16> to vector<32x128xbf16>
    %cst_79 = arith.constant dense<0.000000e+00> : vector<8x128xf32>
    %240 = tpu.matmul %238, %239, %cst_79 {dimension_numbers = #tpu.dot_dimension_numbers<[1], [0], [0], [1], [0, 0, 1, 1], [], []>} : vector<8x32xbf16>, vector<32x128xbf16>, vector<8x128xf32> -> vector<8x128xf32>
    %241 = vector.broadcast %197 : vector<1x128xf32> to vector<8x128xf32>
    %242 = arith.addf %241, %240 : vector<8x128xf32>
    %243 = vector.extract_strided_slice %213 {offsets = [0, 32], sizes = [8, 32], strides = [1, 1]} : vector<8x128xbf16> to vector<8x32xbf16>
    %244 = vector.extract_strided_slice %215 {offsets = [0, 32], sizes = [8, 32], strides = [1, 1]} : vector<8x128xbf16> to vector<8x32xbf16>
    %245 = vector.extract_strided_slice %217 {offsets = [0, 32], sizes = [8, 32], strides = [1, 1]} : vector<8x128xbf16> to vector<8x32xbf16>
    %cst_80 = arith.constant dense<0.000000e+00> : vector<8x8xf32>
    %246 = tpu.matmul %243, %244, %cst_80 {dimension_numbers = #tpu.dot_dimension_numbers<[1], [1], [0], [0], [0, 0, 1, 0], [], []>} : vector<8x32xbf16>, vector<8x32xbf16>, vector<8x8xf32> -> vector<8x8xf32>
    %247 = vector.broadcast %18 : vector<1x8xf32> to vector<8x8xf32>
    %248 = arith.addf %246, %247 : vector<8x8xf32>
    %cst_81 = arith.constant dense<0xFF800000> : vector<8xf32>
    %249 = vector.multi_reduction <maximumf>, %248, %cst_81 [1] : vector<8x8xf32> to vector<8xf32>
    %250 = vector.shape_cast %249 : vector<8xf32> to vector<8x1xf32>
    %251 = vector.broadcast %250 : vector<8x1xf32> to vector<8x8xf32>
    %252 = arith.subf %248, %251 : vector<8x8xf32>
    %253 = math.exp %252 : vector<8x8xf32>
    %cst_82 = arith.constant dense<0.000000e+00> : vector<8xf32>
    %254 = vector.multi_reduction <add>, %253, %cst_82 [1] : vector<8x8xf32> to vector<8xf32>
    %255 = vector.shape_cast %254 : vector<8xf32> to vector<8x1xf32>
    %256 = tpu.reciprocal %255 {approx = true} : vector<8x1xf32> -> vector<8x1xf32>
    %257 = vector.broadcast %256 : vector<8x1xf32> to vector<8x8xf32>
    %258 = arith.mulf %253, %257 : vector<8x8xf32>
    %259 = arith.truncf %258 : vector<8x8xf32> to vector<8x8xbf16>
    %cst_83 = arith.constant dense<0.000000e+00> : vector<8x32xf32>
    %260 = tpu.matmul %259, %245, %cst_83 {dimension_numbers = #tpu.dot_dimension_numbers<[1], [0], [0], [1], [0, 0, 1, 1], [], []>} : vector<8x8xbf16>, vector<8x32xbf16>, vector<8x32xf32> -> vector<8x32xf32>
    %261 = arith.truncf %260 : vector<8x32xf32> to vector<8x32xbf16>
    %262 = vector.extract_strided_slice %219 {offsets = [32, 0], sizes = [32, 128], strides = [1, 1]} : vector<128x128xbf16> to vector<32x128xbf16>
    %cst_84 = arith.constant dense<0.000000e+00> : vector<8x128xf32>
    %263 = tpu.matmul %261, %262, %cst_84 {dimension_numbers = #tpu.dot_dimension_numbers<[1], [0], [0], [1], [0, 0, 1, 1], [], []>} : vector<8x32xbf16>, vector<32x128xbf16>, vector<8x128xf32> -> vector<8x128xf32>
    %264 = arith.addf %242, %263 : vector<8x128xf32>
    %265 = vector.extract_strided_slice %213 {offsets = [0, 64], sizes = [8, 32], strides = [1, 1]} : vector<8x128xbf16> to vector<8x32xbf16>
    %266 = vector.extract_strided_slice %215 {offsets = [0, 64], sizes = [8, 32], strides = [1, 1]} : vector<8x128xbf16> to vector<8x32xbf16>
    %267 = vector.extract_strided_slice %217 {offsets = [0, 64], sizes = [8, 32], strides = [1, 1]} : vector<8x128xbf16> to vector<8x32xbf16>
    %cst_85 = arith.constant dense<0.000000e+00> : vector<8x8xf32>
    %268 = tpu.matmul %265, %266, %cst_85 {dimension_numbers = #tpu.dot_dimension_numbers<[1], [1], [0], [0], [0, 0, 1, 0], [], []>} : vector<8x32xbf16>, vector<8x32xbf16>, vector<8x8xf32> -> vector<8x8xf32>
    %269 = vector.broadcast %18 : vector<1x8xf32> to vector<8x8xf32>
    %270 = arith.addf %268, %269 : vector<8x8xf32>
    %cst_86 = arith.constant dense<0xFF800000> : vector<8xf32>
    %271 = vector.multi_reduction <maximumf>, %270, %cst_86 [1] : vector<8x8xf32> to vector<8xf32>
    %272 = vector.shape_cast %271 : vector<8xf32> to vector<8x1xf32>
    %273 = vector.broadcast %272 : vector<8x1xf32> to vector<8x8xf32>
    %274 = arith.subf %270, %273 : vector<8x8xf32>
    %275 = math.exp %274 : vector<8x8xf32>
    %cst_87 = arith.constant dense<0.000000e+00> : vector<8xf32>
    %276 = vector.multi_reduction <add>, %275, %cst_87 [1] : vector<8x8xf32> to vector<8xf32>
    %277 = vector.shape_cast %276 : vector<8xf32> to vector<8x1xf32>
    %278 = tpu.reciprocal %277 {approx = true} : vector<8x1xf32> -> vector<8x1xf32>
    %279 = vector.broadcast %278 : vector<8x1xf32> to vector<8x8xf32>
    %280 = arith.mulf %275, %279 : vector<8x8xf32>
    %281 = arith.truncf %280 : vector<8x8xf32> to vector<8x8xbf16>
    %cst_88 = arith.constant dense<0.000000e+00> : vector<8x32xf32>
    %282 = tpu.matmul %281, %267, %cst_88 {dimension_numbers = #tpu.dot_dimension_numbers<[1], [0], [0], [1], [0, 0, 1, 1], [], []>} : vector<8x8xbf16>, vector<8x32xbf16>, vector<8x32xf32> -> vector<8x32xf32>
    %283 = arith.truncf %282 : vector<8x32xf32> to vector<8x32xbf16>
    %284 = vector.extract_strided_slice %219 {offsets = [64, 0], sizes = [32, 128], strides = [1, 1]} : vector<128x128xbf16> to vector<32x128xbf16>
    %cst_89 = arith.constant dense<0.000000e+00> : vector<8x128xf32>
    %285 = tpu.matmul %283, %284, %cst_89 {dimension_numbers = #tpu.dot_dimension_numbers<[1], [0], [0], [1], [0, 0, 1, 1], [], []>} : vector<8x32xbf16>, vector<32x128xbf16>, vector<8x128xf32> -> vector<8x128xf32>
    %286 = arith.addf %264, %285 : vector<8x128xf32>
    %287 = vector.extract_strided_slice %213 {offsets = [0, 96], sizes = [8, 32], strides = [1, 1]} : vector<8x128xbf16> to vector<8x32xbf16>
    %288 = vector.extract_strided_slice %215 {offsets = [0, 96], sizes = [8, 32], strides = [1, 1]} : vector<8x128xbf16> to vector<8x32xbf16>
    %289 = vector.extract_strided_slice %217 {offsets = [0, 96], sizes = [8, 32], strides = [1, 1]} : vector<8x128xbf16> to vector<8x32xbf16>
    %cst_90 = arith.constant dense<0.000000e+00> : vector<8x8xf32>
    %290 = tpu.matmul %287, %288, %cst_90 {dimension_numbers = #tpu.dot_dimension_numbers<[1], [1], [0], [0], [0, 0, 1, 0], [], []>} : vector<8x32xbf16>, vector<8x32xbf16>, vector<8x8xf32> -> vector<8x8xf32>
    %291 = vector.broadcast %18 : vector<1x8xf32> to vector<8x8xf32>
    %292 = arith.addf %290, %291 : vector<8x8xf32>
    %cst_91 = arith.constant dense<0xFF800000> : vector<8xf32>
    %293 = vector.multi_reduction <maximumf>, %292, %cst_91 [1] : vector<8x8xf32> to vector<8xf32>
    %294 = vector.shape_cast %293 : vector<8xf32> to vector<8x1xf32>
    %295 = vector.broadcast %294 : vector<8x1xf32> to vector<8x8xf32>
    %296 = arith.subf %292, %295 : vector<8x8xf32>
    %297 = math.exp %296 : vector<8x8xf32>
    %cst_92 = arith.constant dense<0.000000e+00> : vector<8xf32>
    %298 = vector.multi_reduction <add>, %297, %cst_92 [1] : vector<8x8xf32> to vector<8xf32>
    %299 = vector.shape_cast %298 : vector<8xf32> to vector<8x1xf32>
    %300 = tpu.reciprocal %299 {approx = true} : vector<8x1xf32> -> vector<8x1xf32>
    %301 = vector.broadcast %300 : vector<8x1xf32> to vector<8x8xf32>
    %302 = arith.mulf %297, %301 : vector<8x8xf32>
    %303 = arith.truncf %302 : vector<8x8xf32> to vector<8x8xbf16>
    %cst_93 = arith.constant dense<0.000000e+00> : vector<8x32xf32>
    %304 = tpu.matmul %303, %289, %cst_93 {dimension_numbers = #tpu.dot_dimension_numbers<[1], [0], [0], [1], [0, 0, 1, 1], [], []>} : vector<8x8xbf16>, vector<8x32xbf16>, vector<8x32xf32> -> vector<8x32xf32>
    %305 = arith.truncf %304 : vector<8x32xf32> to vector<8x32xbf16>
    %306 = vector.extract_strided_slice %219 {offsets = [96, 0], sizes = [32, 128], strides = [1, 1]} : vector<128x128xbf16> to vector<32x128xbf16>
    %cst_94 = arith.constant dense<0.000000e+00> : vector<8x128xf32>
    %307 = tpu.matmul %305, %306, %cst_94 {dimension_numbers = #tpu.dot_dimension_numbers<[1], [0], [0], [1], [0, 0, 1, 1], [], []>} : vector<8x32xbf16>, vector<32x128xbf16>, vector<8x128xf32> -> vector<8x128xf32>
    %308 = arith.addf %286, %307 : vector<8x128xf32>
    %309 = arith.addf %193, %308 : vector<8x128xf32>
    %cst_95 = arith.constant dense<0.000000e+00> : vector<8xf32>
    %310 = vector.multi_reduction <add>, %309, %cst_95 [1] : vector<8x128xf32> to vector<8xf32>
    %311 = vector.shape_cast %310 : vector<8xf32> to vector<8x1xf32>
    %cst_96 = arith.constant 1.280000e+02 : f32
    %312 = vector.broadcast %cst_96 : f32 to vector<8x1xf32>
    %313 = arith.divf %311, %312 : vector<8x1xf32>
    %314 = vector.broadcast %313 : vector<8x1xf32> to vector<8x128xf32>
    %315 = arith.subf %309, %314 : vector<8x128xf32>
    %316 = arith.mulf %315, %315 : vector<8x128xf32>
    %cst_97 = arith.constant dense<0.000000e+00> : vector<8xf32>
    %317 = vector.multi_reduction <add>, %316, %cst_97 [1] : vector<8x128xf32> to vector<8xf32>
    %318 = vector.shape_cast %317 : vector<8xf32> to vector<8x1xf32>
    %cst_98 = arith.constant 1.280000e+02 : f32
    %319 = vector.broadcast %cst_98 : f32 to vector<8x1xf32>
    %320 = arith.divf %318, %319 : vector<8x1xf32>
    %321 = vector.broadcast %313 : vector<8x1xf32> to vector<8x128xf32>
    %322 = arith.subf %309, %321 : vector<8x128xf32>
    %cst_99 = arith.constant 9.99999974E-6 : f32
    %323 = vector.broadcast %cst_99 : f32 to vector<8x1xf32>
    %324 = arith.addf %320, %323 : vector<8x1xf32>
    %325 = math.rsqrt %324 : vector<8x1xf32>
    %326 = vector.broadcast %325 : vector<8x1xf32> to vector<8x128xf32>
    %327 = arith.mulf %322, %326 : vector<8x128xf32>
    %328 = vector.broadcast %198 : vector<1x128xf32> to vector<8x128xf32>
    %329 = arith.mulf %327, %328 : vector<8x128xf32>
    %330 = vector.broadcast %199 : vector<1x128xf32> to vector<8x128xf32>
    %331 = arith.addf %329, %330 : vector<8x128xf32>
    %332 = arith.truncf %331 : vector<8x128xf32> to vector<8x128xbf16>
    %c1_100 = arith.constant 1 : index
    %c0_101 = arith.constant 0 : index
    %c0_102 = arith.constant 0 : index
    %333 = vector.load %arg8[%c1_100, %c0_101, %c0_102] : memref<2x128x256xbf16, #tpu.memory_space<vmem>>, vector<1x128x256xbf16>
    %334 = vector.shape_cast %333 : vector<1x128x256xbf16> to vector<128x256xbf16>
    %cst_103 = arith.constant dense<0.000000e+00> : vector<8x256xf32>
    %335 = tpu.matmul %332, %334, %cst_103 {dimension_numbers = #tpu.dot_dimension_numbers<[1], [0], [0], [1], [0, 0, 1, 1], [], []>} : vector<8x128xbf16>, vector<128x256xbf16>, vector<8x256xf32> -> vector<8x256xf32>
    %336 = vector.broadcast %200 : vector<1x256xf32> to vector<8x256xf32>
    %337 = arith.addf %335, %336 : vector<8x256xf32>
    %cst_104 = arith.constant 0.000000e+00 : f32
    %338 = vector.broadcast %cst_104 : f32 to vector<8x256xf32>
    %339 = arith.maximumf %337, %338 : vector<8x256xf32>
    %340 = arith.truncf %339 : vector<8x256xf32> to vector<8x256xbf16>
    %c1_105 = arith.constant 1 : index
    %c0_106 = arith.constant 0 : index
    %c0_107 = arith.constant 0 : index
    %341 = vector.load %arg9[%c1_105, %c0_106, %c0_107] : memref<2x256x128xbf16, #tpu.memory_space<vmem>>, vector<1x256x128xbf16>
    %342 = vector.shape_cast %341 : vector<1x256x128xbf16> to vector<256x128xbf16>
    %cst_108 = arith.constant dense<0.000000e+00> : vector<8x128xf32>
    %343 = tpu.matmul %340, %342, %cst_108 {dimension_numbers = #tpu.dot_dimension_numbers<[1], [0], [0], [1], [0, 0, 1, 1], [], []>} : vector<8x256xbf16>, vector<256x128xbf16>, vector<8x128xf32> -> vector<8x128xf32>
    %344 = vector.broadcast %201 : vector<1x128xf32> to vector<8x128xf32>
    %345 = arith.addf %343, %344 : vector<8x128xf32>
    %346 = arith.addf %331, %345 : vector<8x128xf32>
    %cst_109 = arith.constant dense<0.000000e+00> : vector<8xf32>
    %347 = vector.multi_reduction <add>, %346, %cst_109 [1] : vector<8x128xf32> to vector<8xf32>
    %348 = vector.shape_cast %347 : vector<8xf32> to vector<8x1xf32>
    %cst_110 = arith.constant 1.280000e+02 : f32
    %349 = vector.broadcast %cst_110 : f32 to vector<8x1xf32>
    %350 = arith.divf %348, %349 : vector<8x1xf32>
    %351 = vector.broadcast %350 : vector<8x1xf32> to vector<8x128xf32>
    %352 = arith.subf %346, %351 : vector<8x128xf32>
    %353 = arith.mulf %352, %352 : vector<8x128xf32>
    %cst_111 = arith.constant dense<0.000000e+00> : vector<8xf32>
    %354 = vector.multi_reduction <add>, %353, %cst_111 [1] : vector<8x128xf32> to vector<8xf32>
    %355 = vector.shape_cast %354 : vector<8xf32> to vector<8x1xf32>
    %cst_112 = arith.constant 1.280000e+02 : f32
    %356 = vector.broadcast %cst_112 : f32 to vector<8x1xf32>
    %357 = arith.divf %355, %356 : vector<8x1xf32>
    %358 = vector.broadcast %350 : vector<8x1xf32> to vector<8x128xf32>
    %359 = arith.subf %346, %358 : vector<8x128xf32>
    %cst_113 = arith.constant 9.99999974E-6 : f32
    %360 = vector.broadcast %cst_113 : f32 to vector<8x1xf32>
    %361 = arith.addf %357, %360 : vector<8x1xf32>
    %362 = math.rsqrt %361 : vector<8x1xf32>
    %363 = vector.broadcast %362 : vector<8x1xf32> to vector<8x128xf32>
    %364 = arith.mulf %359, %363 : vector<8x128xf32>
    %365 = vector.broadcast %202 : vector<1x128xf32> to vector<8x128xf32>
    %366 = arith.mulf %364, %365 : vector<8x128xf32>
    %367 = vector.broadcast %203 : vector<1x128xf32> to vector<8x128xf32>
    %368 = arith.addf %366, %367 : vector<8x128xf32>
    %cst_114 = arith.constant dense<0.000000e+00> : vector<128xf32>
    %369 = vector.multi_reduction <add>, %368, %cst_114 [0] : vector<8x128xf32> to vector<128xf32>
    %370 = vector.shape_cast %369 : vector<128xf32> to vector<1x128xf32>
    %cst_115 = arith.constant 8.000000e+00 : f32
    %371 = vector.broadcast %cst_115 : f32 to vector<1x128xf32>
    %372 = arith.divf %370, %371 : vector<1x128xf32>
    %c0_116 = arith.constant 0 : index
    %c0_117 = arith.constant 0 : index
    %c0_118 = arith.constant 0 : index
    %373 = vector.load %arg11[%c0_116, %c0_117, %c0_118] : memref<1x1x128xf32, #tpu.memory_space<vmem>>, vector<1x1x128xf32>
    %374 = vector.shape_cast %373 : vector<1x1x128xf32> to vector<1x128xf32>
    %375 = vector.shape_cast %372 : vector<1x128xf32> to vector<1x1x128xf32>
    tpu.vector_store %arg11[%c0_116, %c0_117, %c0_118], %375 {strides = array<i32>} : memref<1x1x128xf32, #tpu.memory_space<vmem>>, vector<1x1x128xf32>,
    return
  }
  func.func @transform_0(%arg0: i32) -> (i32, i32, i32) {
    %c0_i32 = arith.constant 0 : i32
    %c0_i32_0 = arith.constant 0 : i32
    %c0_i32_1 = arith.constant 0 : i32
    return %arg0, %c0_i32, %c0_i32_0 : i32, i32, i32
  }
  func.func @transform_1(%arg0: i32) -> (i32, i32, i32) {
    %c0_i32 = arith.constant 0 : i32
    %c0_i32_0 = arith.constant 0 : i32
    %c0_i32_1 = arith.constant 0 : i32
    return %arg0, %c0_i32, %c0_i32_0 : i32, i32, i32
  }
  func.func @transform_2(%arg0: i32) -> (i32, i32, i32) {
    %c0_i32 = arith.constant 0 : i32
    %c0_i32_0 = arith.constant 0 : i32
    %c0_i32_1 = arith.constant 0 : i32
    return %arg0, %c0_i32, %c0_i32_0 : i32, i32, i32
  }
  func.func @transform_3(%arg0: i32) -> (i32, i32) {
    %c0_i32 = arith.constant 0 : i32
    %c0_i32_0 = arith.constant 0 : i32
    %c0_i32_1 = arith.constant 0 : i32
    return %c0_i32, %c0_i32_0 : i32, i32
  }
  func.func @transform_4(%arg0: i32) -> (i32, i32) {
    %c0_i32 = arith.constant 0 : i32
    %c0_i32_0 = arith.constant 0 : i32
    %c0_i32_1 = arith.constant 0 : i32
    return %c0_i32, %c0_i32_0 : i32, i32
  }
  func.func @transform_5(%arg0: i32) -> (i32, i32, i32) {
    %c0_i32 = arith.constant 0 : i32
    %c0_i32_0 = arith.constant 0 : i32
    %c0_i32_1 = arith.constant 0 : i32
    %c0_i32_2 = arith.constant 0 : i32
    return %c0_i32, %c0_i32_0, %c0_i32_1 : i32, i32, i32
  }
  func.func @transform_6(%arg0: i32) -> (i32, i32, i32) {
    %c0_i32 = arith.constant 0 : i32
    %c0_i32_0 = arith.constant 0 : i32
    %c0_i32_1 = arith.constant 0 : i32
    %c0_i32_2 = arith.constant 0 : i32
    return %c0_i32, %c0_i32_0, %c0_i32_1 : i32, i32, i32
  }
  func.func @transform_7(%arg0: i32) -> (i32, i32, i32) {
    %c0_i32 = arith.constant 0 : i32
    %c0_i32_0 = arith.constant 0 : i32
    %c0_i32_1 = arith.constant 0 : i32
    %c0_i32_2 = arith.constant 0 : i32
    return %c0_i32, %c0_i32_0, %c0_i32_1 : i32, i32, i32
  }
  func.func @transform_8(%arg0: i32) -> (i32, i32, i32) {
    %c0_i32 = arith.constant 0 : i32
    %c0_i32_0 = arith.constant 0 : i32
    %c0_i32_1 = arith.constant 0 : i32
    %c0_i32_2 = arith.constant 0 : i32
    return %c0_i32, %c0_i32_0, %c0_i32_1 : i32, i32, i32
  }
  func.func @transform_9(%arg0: i32) -> (i32, i32, i32) {
    %c0_i32 = arith.constant 0 : i32
    %c0_i32_0 = arith.constant 0 : i32
    %c0_i32_1 = arith.constant 0 : i32
    %c0_i32_2 = arith.constant 0 : i32
    return %c0_i32, %c0_i32_0, %c0_i32_1 : i32, i32, i32
  }
  func.func @transform_10(%arg0: i32) -> (i32, i32, i32) {
    %c0_i32 = arith.constant 0 : i32
    %c0_i32_0 = arith.constant 0 : i32
    %c0_i32_1 = arith.constant 0 : i32
    return %arg0, %c0_i32, %c0_i32_0 : i32, i32, i32
  }
}

</mosaic_0001>

<llo_original>
// kernel: tpu_custom_call.1
$region0: #{tpu_custom_call.1}
  #allocation0 [shape = 'u32[]', space=smem, size = 0x4, offset = 0x4, fixed_abs, tag = 'smem constant byte address 0x4 - core index']
  #allocation1 [shape = 'u32[144,128]{1,0:T(1,128)}', space=vmem, size = 0x12000, scoped, tag = 'internal scratch']
  %s0 = inlined_call_operand.hbm [shape: f32[2,8,32], index: 0, kind: input, shape index: {}]
  %s1 = inlined_call_operand.hbm [shape: f32[2,1,8], index: 1, kind: input, shape index: {}]
  %s2 = inlined_call_operand.vmem [shape: f32[2,1,128], index: 2, kind: input, shape index: {}]
  %s3 = inlined_call_operand.hbm [shape: bf16[32,128], index: 3, kind: input, shape index: {}]
  %s4 = inlined_call_operand.vmem [shape: f32[1,128], index: 4, kind: input, shape index: {}]
  %s5 = inlined_call_operand.hbm [shape: bf16[2,128,384], index: 5, kind: input, shape index: {}]
  %s6 = inlined_call_operand.hbm [shape: bf16[2,128,128], index: 6, kind: input, shape index: {}]
  %s7 = inlined_call_operand.hbm [shape: bf16[2,128,256], index: 7, kind: input, shape index: {}]
  %s8 = inlined_call_operand.hbm [shape: bf16[2,256,128], index: 8, kind: input, shape index: {}]
  %s9 = inlined_call_operand.hbm [shape: f32[2,8,384], index: 9, kind: input, shape index: {}]
  %s10 = inlined_call_operand.hbm [shape: f32[2,1,128], index: 10, kind: output, shape index: {}]
  %s11 = sld [smem:[#allocation0]]
  $region105: #{tpu_custom_call.1} parent=0
    _
  %s13 = ssub.s32 1, %s11
  %s14 = scalar_select 0, %s13, %s11
  $region1: #{tpu_custom_call.1} parent=0
    #allocation2 [shape = 'u8[8192]{0}', space=vmem, size = 0x2000, scoped, tag = 'input window, operand 0']
    #allocation3 [shape = 's32[2]{0}', space=sflag, size = 0x8, scoped, tag = 'scoped memory for tpu_custom_call.1']
    #allocation4 [shape = 's32[2]{0}', space=sflag, size = 0x8, scoped, tag = 'scoped memory for tpu_custom_call.1']
    #allocation5 [shape = 'u8[1024]{0}', space=vmem, size = 0x400, scoped, tag = 'input window, operand 1']
    #allocation6 [shape = 's32[2]{0}', space=sflag, size = 0x8, scoped, tag = 'scoped memory for tpu_custom_call.1']
    #allocation7 [shape = 'u8[8192]{0}', space=vmem, size = 0x2000, scoped, tag = 'input window, operand 3, single buffered']
    #allocation8 [shape = 'u8[196608]{0}', space=vmem, size = 0x30000, scoped, tag = 'input window, operand 5, single buffered']
    #allocation9 [shape = 's32[1]{0}', space=sflag, size = 0x4, scoped, tag = 'scoped memory for tpu_custom_call.1']
    #allocation10 [shape = 'u8[65536]{0}', space=vmem, size = 0x10000, scoped, tag = 'input window, operand 6, single buffered']
    #allocation11 [shape = 'u8[131072]{0}', space=vmem, size = 0x20000, scoped, tag = 'input window, operand 7, single buffered']
    #allocation12 [shape = 's32[1]{0}', space=sflag, size = 0x4, scoped, tag = 'scoped memory for tpu_custom_call.1']
    #allocation13 [shape = 'u8[131072]{0}', space=vmem, size = 0x20000, scoped, tag = 'input window, operand 8, single buffered']
    #allocation14 [shape = 'u8[24576]{0}', space=vmem, size = 0x6000, scoped, tag = 'input window, operand 9, single buffered']
    #allocation15 [shape = 's32[1]{0}', space=sflag, size = 0x4, scoped, tag = 'scoped memory for tpu_custom_call.1']
    #allocation16 [shape = 'u8[1024]{0}', space=vmem, size = 0x400, scoped, tag = 'output window, operand 0']
    %15 = vsyncpa [#allocation3], 0
    %s16 = scalar_lea.sflag [#allocation3], 1
    %17 = vsyncpa %s16, 0
    %18 = vsyncpa [#allocation6], 0
    %s19 = scalar_lea.sflag [#allocation6], 1
    %20 = vsyncpa %s19, 0
    %21 = vsyncpa [#allocation9], 0
    %22 = vsyncpa [#allocation12], 0
    %23 = vsyncpa [#allocation15], 0
    %24 = vsyncpa [#allocation4], 0
    %s25 = scalar_lea.sflag [#allocation4], 1
    %26 = vsyncpa %s25, 0
    loop: start=0, step=1, limit=4
    $region2: #{tpu_custom_call.1} parent=1 // loop_pre_header
      _
    $region3: #{tpu_custom_call.1} parent=1 // loop_header
      %s28 = sphi 0, %s32
      %p29 = scmp.ge.s32.totalorder %s28, 4
      %s38 = sphi 0, %s40
      %s41 = sphi 0, %s38
      %s42 = sphi 0, %s41
      %s58 = sphi 0, %s42
      %s64 = sphi 0, %s66
      %s67 = sphi 0, %s64
      %s68 = sphi 0, %s67
      %s84 = sphi 0, %s68
      %s90 = sphi 0, %s92
      %s93 = sphi 0, %s90
      %s94 = sphi 0, %s93
      %s110 = sphi 0, %s94
      %s114 = sphi 0, %s114
      %s116 = sphi 0, %s114
      %s117 = sphi 0, %s116
      %s131 = sphi 0, %s117
      %s135 = sphi 0, %s135
      %s137 = sphi 0, %s135
      %s138 = sphi 0, %s137
      %s152 = sphi 0, %s138
      %s156 = sphi 0, %s156
      %s158 = sphi 0, %s156
      %s159 = sphi 0, %s158
      %s173 = sphi 0, %s159
      %s177 = sphi 0, %s177
      %s179 = sphi 0, %s177
      %s180 = sphi 0, %s179
      %s194 = sphi 0, %s180
      %s198 = sphi 0, %s198
      %s200 = sphi 0, %s198
      %s201 = sphi 0, %s200
      %s215 = sphi 0, %s201
      %s219 = sphi 0, %s219
      %s221 = sphi 0, %s219
      %s222 = sphi 0, %s221
      %s236 = sphi 0, %s222
      %s240 = sphi 0, %s240
      %s242 = sphi 0, %s240
      %s243 = sphi 0, %s242
      %s257 = sphi 0, %s243
      %s263 = sphi 0, %s265
      %s266 = sphi 0, %s263
      %s267 = sphi 0, %s266
      %s283 = sphi 0, %s267
    $region4: #{tpu_custom_call.1} parent=1 // loop_header_branch
      %31 = sbr.rel (%p29) target = $region8
    $region5: #{tpu_custom_call.1} parent=1 // loop_body
      %s33 = ssub.s32 %s28, 1
      %s34 = ssub.s32 %s28, 2
      %s35 = sadd.s32 %s28, 1
      %s36 = ssub.s32 %s28, %s35
      %p37 = scmp.eq.s32.totalorder %s36, 0
      %s39 = sadd.s32 %s38, 1
      %s40 = scalar_select %p37, %s38, %s39
      %p43 = pneg %p37
      %p44 = scmp.eq.s32.totalorder %s28, 1
      %p45 = por %p43, %p44
      %p46 = scmp.ne.s32.totalorder %s38, %s41
      %p47 = scmp.eq.s32.totalorder %s28, 0
      %p48 = por %p46, %p47
      %p49 = scmp.ne.s32.totalorder %s38, %s41
      %p50 = scmp.eq.s32.totalorder %s33, 1
      %p51 = por %p49, %p50
      %p52 = scmp.ne.s32.totalorder %s41, %s42
      %p53 = scmp.eq.s32.totalorder %s33, 0
      %p54 = por %p52, %p53
      %p55 = scmp.ne.s32.totalorder %s41, %s42
      %p56 = scmp.eq.s32.totalorder %s34, 1
      %p57 = por %p55, %p56
      %p59 = scmp.ne.s32.totalorder %s42, %s58
      %p60 = scmp.eq.s32.totalorder %s34, 0
      %p61 = por %p59, %p60
      %s62 = ssub.s32 %s28, %s35
      %p63 = scmp.eq.s32.totalorder %s62, 0
      %s65 = sadd.s32 %s64, 1
      %s66 = scalar_select %p63, %s64, %s65
      %p69 = pneg %p63
      %p70 = scmp.eq.s32.totalorder %s28, 1
      %p71 = por %p69, %p70
      %p72 = scmp.ne.s32.totalorder %s64, %s67
      %p73 = scmp.eq.s32.totalorder %s28, 0
      %p74 = por %p72, %p73
      %p75 = scmp.ne.s32.totalorder %s64, %s67
      %p76 = scmp.eq.s32.totalorder %s33, 1
      %p77 = por %p75, %p76
      %p78 = scmp.ne.s32.totalorder %s67, %s68
      %p79 = scmp.eq.s32.totalorder %s33, 0
      %p80 = por %p78, %p79
      %p81 = scmp.ne.s32.totalorder %s67, %s68
      %p82 = scmp.eq.s32.totalorder %s34, 1
      %p83 = por %p81, %p82
      %p85 = scmp.ne.s32.totalorder %s68, %s84
      %p86 = scmp.eq.s32.totalorder %s34, 0
      %p87 = por %p85, %p86
      %s88 = ssub.s32 %s28, %s35
      %p89 = scmp.eq.s32.totalorder %s88, 0
      %s91 = sadd.s32 %s90, 1
      %s92 = scalar_select %p89, %s90, %s91
      %p95 = pneg %p89
      %p96 = scmp.eq.s32.totalorder %s28, 1
      %p97 = por %p95, %p96
      %p98 = scmp.ne.s32.totalorder %s90, %s93
      %p99 = scmp.eq.s32.totalorder %s28, 0
      %p100 = por %p98, %p99
      %p101 = scmp.ne.s32.totalorder %s90, %s93
      %p102 = scmp.eq.s32.totalorder %s33, 1
      %p103 = por %p101, %p102
      %p104 = scmp.ne.s32.totalorder %s93, %s94
      %p105 = scmp.eq.s32.totalorder %s33, 0
      %p106 = por %p104, %p105
      %p107 = scmp.ne.s32.totalorder %s93, %s94
      %p108 = scmp.eq.s32.totalorder %s34, 1
      %p109 = por %p107, %p108
      %p111 = scmp.ne.s32.totalorder %s94, %s110
      %p112 = scmp.eq.s32.totalorder %s34, 0
      %p113 = por %p111, %p112
      %s115 = sadd.s32 %s114, 1
      %p118 = scmp.eq.s32.totalorder %s28, 1
      %p119 = scmp.ne.s32.totalorder %s114, %s116
      %p120 = scmp.eq.s32.totalorder %s28, 0
      %p121 = por %p119, %p120
      %p122 = scmp.ne.s32.totalorder %s114, %s116
      %p123 = scmp.eq.s32.totalorder %s33, 1
      %p124 = por %p122, %p123
      %p125 = scmp.ne.s32.totalorder %s116, %s117
      %p126 = scmp.eq.s32.totalorder %s33, 0
      %p127 = por %p125, %p126
      %p128 = scmp.ne.s32.totalorder %s116, %s117
      %p129 = scmp.eq.s32.totalorder %s34, 1
      %p130 = por %p128, %p129
      %p132 = scmp.ne.s32.totalorder %s117, %s131
      %p133 = scmp.eq.s32.totalorder %s34, 0
      %p134 = por %p132, %p133
      %s136 = sadd.s32 %s135, 1
      %p139 = scmp.eq.s32.totalorder %s28, 1
      %p140 = scmp.ne.s32.totalorder %s135, %s137
      %p141 = scmp.eq.s32.totalorder %s28, 0
      %p142 = por %p140, %p141
      %p143 = scmp.ne.s32.totalorder %s135, %s137
      %p144 = scmp.eq.s32.totalorder %s33, 1
      %p145 = por %p143, %p144
      %p146 = scmp.ne.s32.totalorder %s137, %s138
      %p147 = scmp.eq.s32.totalorder %s33, 0
      %p148 = por %p146, %p147
      %p149 = scmp.ne.s32.totalorder %s137, %s138
      %p150 = scmp.eq.s32.totalorder %s34, 1
      %p151 = por %p149, %p150
      %p153 = scmp.ne.s32.totalorder %s138, %s152
      %p154 = scmp.eq.s32.totalorder %s34, 0
      %p155 = por %p153, %p154
      %s157 = sadd.s32 %s156, 1
      %p160 = scmp.eq.s32.totalorder %s28, 1
      %p161 = scmp.ne.s32.totalorder %s156, %s158
      %p162 = scmp.eq.s32.totalorder %s28, 0
      %p163 = por %p161, %p162
      %p164 = scmp.ne.s32.totalorder %s156, %s158
      %p165 = scmp.eq.s32.totalorder %s33, 1
      %p166 = por %p164, %p165
      %p167 = scmp.ne.s32.totalorder %s158, %s159
      %p168 = scmp.eq.s32.totalorder %s33, 0
      %p169 = por %p167, %p168
      %p170 = scmp.ne.s32.totalorder %s158, %s159
      %p171 = scmp.eq.s32.totalorder %s34, 1
      %p172 = por %p170, %p171
      %p174 = scmp.ne.s32.totalorder %s159, %s173
      %p175 = scmp.eq.s32.totalorder %s34, 0
      %p176 = por %p174, %p175
      %s178 = sadd.s32 %s177, 1
      %p181 = scmp.eq.s32.totalorder %s28, 1
      %p182 = scmp.ne.s32.totalorder %s177, %s179
      %p183 = scmp.eq.s32.totalorder %s28, 0
      %p184 = por %p182, %p183
      %p185 = scmp.ne.s32.totalorder %s177, %s179
      %p186 = scmp.eq.s32.totalorder %s33, 1
      %p187 = por %p185, %p186
      %p188 = scmp.ne.s32.totalorder %s179, %s180
      %p189 = scmp.eq.s32.totalorder %s33, 0
      %p190 = por %p188, %p189
      %p191 = scmp.ne.s32.totalorder %s179, %s180
      %p192 = scmp.eq.s32.totalorder %s34, 1
      %p193 = por %p191, %p192
      %p195 = scmp.ne.s32.totalorder %s180, %s194
      %p196 = scmp.eq.s32.totalorder %s34, 0
      %p197 = por %p195, %p196
      %s199 = sadd.s32 %s198, 1
      %p202 = scmp.eq.s32.totalorder %s28, 1
      %p203 = scmp.ne.s32.totalorder %s198, %s200
      %p204 = scmp.eq.s32.totalorder %s28, 0
      %p205 = por %p203, %p204
      %p206 = scmp.ne.s32.totalorder %s198, %s200
      %p207 = scmp.eq.s32.totalorder %s33, 1
      %p208 = por %p206, %p207
      %p209 = scmp.ne.s32.totalorder %s200, %s201
      %p210 = scmp.eq.s32.totalorder %s33, 0
      %p211 = por %p209, %p210
      %p212 = scmp.ne.s32.totalorder %s200, %s201
      %p213 = scmp.eq.s32.totalorder %s34, 1
      %p214 = por %p212, %p213
      %p216 = scmp.ne.s32.totalorder %s201, %s215
      %p217 = scmp.eq.s32.totalorder %s34, 0
      %p218 = por %p216, %p217
      %s220 = sadd.s32 %s219, 1
      %p223 = scmp.eq.s32.totalorder %s28, 1
      %p224 = scmp.ne.s32.totalorder %s219, %s221
      %p225 = scmp.eq.s32.totalorder %s28, 0
      %p226 = por %p224, %p225
      %p227 = scmp.ne.s32.totalorder %s219, %s221
      %p228 = scmp.eq.s32.totalorder %s33, 1
      %p229 = por %p227, %p228
      %p230 = scmp.ne.s32.totalorder %s221, %s222
      %p231 = scmp.eq.s32.totalorder %s33, 0
      %p232 = por %p230, %p231
      %p233 = scmp.ne.s32.totalorder %s221, %s222
      %p234 = scmp.eq.s32.totalorder %s34, 1
      %p235 = por %p233, %p234
      %p237 = scmp.ne.s32.totalorder %s222, %s236
      %p238 = scmp.eq.s32.totalorder %s34, 0
      %p239 = por %p237, %p238
      %s241 = sadd.s32 %s240, 1
      %p244 = scmp.eq.s32.totalorder %s28, 1
      %p245 = scmp.ne.s32.totalorder %s240, %s242
      %p246 = scmp.eq.s32.totalorder %s28, 0
      %p247 = por %p245, %p246
      %p248 = scmp.ne.s32.totalorder %s240, %s242
      %p249 = scmp.eq.s32.totalorder %s33, 1
      %p250 = por %p248, %p249
      %p251 = scmp.ne.s32.totalorder %s242, %s243
      %p252 = scmp.eq.s32.totalorder %s33, 0
      %p253 = por %p251, %p252
      %p254 = scmp.ne.s32.totalorder %s242, %s243
      %p255 = scmp.eq.s32.totalorder %s34, 1
      %p256 = por %p254, %p255
      %p258 = scmp.ne.s32.totalorder %s243, %s257
      %p259 = scmp.eq.s32.totalorder %s34, 0
      %p260 = por %p258, %p259
      %s261 = ssub.s32 %s28, %s35
      %p262 = scmp.eq.s32.totalorder %s261, 0
      %s264 = sadd.s32 %s263, 1
      %s265 = scalar_select %p262, %s263, %s264
      %p268 = pneg %p262
      %p269 = scmp.eq.s32.totalorder %s28, 1
      %p270 = por %p268, %p269
      %p271 = scmp.ne.s32.totalorder %s263, %s266
      %p272 = scmp.eq.s32.totalorder %s28, 0
      %p273 = por %p271, %p272
      %p274 = scmp.ne.s32.totalorder %s263, %s266
      %p275 = scmp.eq.s32.totalorder %s33, 1
      %p276 = por %p274, %p275
      %p277 = scmp.ne.s32.totalorder %s266, %s267
      %p278 = scmp.eq.s32.totalorder %s33, 0
      %p279 = por %p277, %p278
      %p280 = scmp.ne.s32.totalorder %s266, %s267
      %p281 = scmp.eq.s32.totalorder %s34, 1
      %p282 = por %p280, %p281
      %p284 = scmp.ne.s32.totalorder %s267, %s283
      %p285 = scmp.eq.s32.totalorder %s34, 0
      %p286 = por %p284, %p285
      %p287 = scmp.le.s32.totalorder 1, %s28
      %p288 = scmp.lt.s32.totalorder %s28, 3
      %p289 = pnand %p287, %p288
      %p290 = pneg %p289
      // Predicated region
      $region9: #{tpu_custom_call.1} parent=5 // pred_check
        _
      $region10: #{tpu_custom_call.1} parent=5 // pred_check_branch
        %292 = sbr.rel (%p289) target = $region12
      $region11: #{tpu_custom_call.1} parent=5 // pred_region
        %s293 = ssub.s32 %s28, 1
        // Predicated region
        $region13: #{tpu_custom_call.1} parent=11 // pred_check
          %p294 = pneg %p127
        $region14: #{tpu_custom_call.1} parent=11 // pred_check_branch
          %296 = sbr.rel (%p294) target = $region16
        $region15: #{tpu_custom_call.1} parent=11 // pred_region
          %s298 = ssub.s32 256, 256
          %299 = vsyncadd [#allocation6], %s298
          %s300 = sshll.u32 [#allocation7], 4
          %s301 = int_to_ptr.vmem [resolvable:$true] %s300
          %306 = dma.hbm_to_vmem [thread:$0]  %s3, 256, %s301, [#allocation6], 64, 64, 4
        $region16: #{tpu_custom_call.1} parent=11 // pred_fallthru
          _
        // Predicated region
        $region17: #{tpu_custom_call.1} parent=11 // pred_check
          %p307 = pneg %p148
        $region18: #{tpu_custom_call.1} parent=11 // pred_check_branch
          %309 = sbr.rel (%p307) target = $region20
        $region19: #{tpu_custom_call.1} parent=11 // pred_region
          _
        $region20: #{tpu_custom_call.1} parent=11 // pred_fallthru
          _
        // Predicated region
        $region21: #{tpu_custom_call.1} parent=11 // pred_check
          %p310 = pneg %p169
        $region22: #{tpu_custom_call.1} parent=11 // pred_check_branch
          %312 = sbr.rel (%p310) target = $region24
        $region23: #{tpu_custom_call.1} parent=11 // pred_region
          %s314 = ssub.s32 6144, 6144
          %315 = vsyncadd [#allocation9], %s314
          %s316 = sshll.u32 [#allocation8], 4
          %s317 = int_to_ptr.vmem [resolvable:$true] %s316
          %322 = dma.hbm_to_vmem [thread:$0]  %s5, 6144, %s317, [#allocation9], 192, 192, 12
        $region24: #{tpu_custom_call.1} parent=11 // pred_fallthru
          _
        // Predicated region
        $region25: #{tpu_custom_call.1} parent=11 // pred_check
          %p323 = pneg %p190
        $region26: #{tpu_custom_call.1} parent=11 // pred_check_branch
          %325 = sbr.rel (%p323) target = $region28
        $region27: #{tpu_custom_call.1} parent=11 // pred_region
          %s327 = ssub.s32 2048, 2048
          %328 = vsyncadd [#allocation9], %s327
          %s329 = sshll.u32 [#allocation10], 4
          %s330 = int_to_ptr.vmem [resolvable:$true] %s329
          %335 = dma.hbm_to_vmem [thread:$0]  %s6, 2048, %s330, [#allocation9], 64, 64, 4
        $region28: #{tpu_custom_call.1} parent=11 // pred_fallthru
          _
        // Predicated region
        $region29: #{tpu_custom_call.1} parent=11 // pred_check
          %p336 = pneg %p211
        $region30: #{tpu_custom_call.1} parent=11 // pred_check_branch
          %338 = sbr.rel (%p336) target = $region32
        $region31: #{tpu_custom_call.1} parent=11 // pred_region
          %s340 = ssub.s32 4096, 4096
          %341 = vsyncadd [#allocation12], %s340
          %s342 = sshll.u32 [#allocation11], 4
          %s343 = int_to_ptr.vmem [resolvable:$true] %s342
          %348 = dma.hbm_to_vmem [thread:$0]  %s7, 4096, %s343, [#allocation12], 128, 128, 8
        $region32: #{tpu_custom_call.1} parent=11 // pred_fallthru
          _
        // Predicated region
        $region33: #{tpu_custom_call.1} parent=11 // pred_check
          %p349 = pneg %p232
        $region34: #{tpu_custom_call.1} parent=11 // pred_check_branch
          %351 = sbr.rel (%p349) target = $region36
        $region35: #{tpu_custom_call.1} parent=11 // pred_region
          %s353 = ssub.s32 4096, 4096
          %354 = vsyncadd [#allocation12], %s353
          %s355 = sshll.u32 [#allocation13], 4
          %s356 = int_to_ptr.vmem [resolvable:$true] %s355
          %361 = dma.hbm_to_vmem [thread:$0]  %s8, 4096, %s356, [#allocation12], 64, 64, 4
        $region36: #{tpu_custom_call.1} parent=11 // pred_fallthru
          _
        // Predicated region
        $region37: #{tpu_custom_call.1} parent=11 // pred_check
          %p362 = pneg %p253
        $region38: #{tpu_custom_call.1} parent=11 // pred_check_branch
          %364 = sbr.rel (%p362) target = $region40
        $region39: #{tpu_custom_call.1} parent=11 // pred_region
          %s366 = ssub.s32 768, 768
          %367 = vsyncadd [#allocation15], %s366
          %s368 = sshll.u32 [#allocation14], 4
          %s369 = int_to_ptr.vmem [resolvable:$true] %s368
          %374 = dma.hbm_to_vmem [thread:$0]  %s9, 768, %s369, [#allocation15], 384, 384, 24
        $region40: #{tpu_custom_call.1} parent=11 // pred_fallthru
          _
      $region12: #{tpu_custom_call.1} parent=5 // pred_fallthru
        _
      %p375 = scmp.lt.s32.totalorder %s28, 2
      // Predicated region
      $region41: #{tpu_custom_call.1} parent=5 // pred_check
        %p376 = pneg %p375
      $region42: #{tpu_custom_call.1} parent=5 // pred_check_branch
        %378 = sbr.rel (%p376) target = $region44
      $region43: #{tpu_custom_call.1} parent=5 // pred_region
        // Predicated region
        $region45: #{tpu_custom_call.1} parent=43 // pred_check
          %p379 = pneg %p48
        $region46: #{tpu_custom_call.1} parent=43 // pred_check_branch
          %381 = sbr.rel (%p379) target = $region48
        $region47: #{tpu_custom_call.1} parent=43 // pred_region
          %s382 = sand.u32 %s38, 1
          %s383 = scalar_lea.sflag [#allocation3], %s382
          %s384 = sand.u32 %s38, 1
          %s385 = smul.addr %s384, 8
          %s386 = scalar_lea.vmem [#allocation2], %s385
          %s388 = ssub.s32 128, 128
          %389 = vsyncadd %s383, %s388
          %s390 = smul.addr %s28, 128
          %s391 = scalar_lea.hbm %s0, %s390
          %s393 = sshll.u32 %s386, 4
          %s394 = int_to_ptr.vmem [resolvable:$true] %s393
          %396 = dma.hbm_to_vmem [thread:$0]  %s391, 128, %s394, %s383
        $region48: #{tpu_custom_call.1} parent=43 // pred_fallthru
          _
        // Predicated region
        $region49: #{tpu_custom_call.1} parent=43 // pred_check
          %p397 = pneg %p74
        $region50: #{tpu_custom_call.1} parent=43 // pred_check_branch
          %399 = sbr.rel (%p397) target = $region52
        $region51: #{tpu_custom_call.1} parent=43 // pred_region
          %s400 = sand.u32 %s28, 1
          %s401 = scalar_lea.sflag [#allocation6], %s400
          %s402 = sand.u32 %s64, 1
          %s403 = scalar_lea.vmem [#allocation5], %s402
          %s405 = ssub.s32 16, 16
          %406 = vsyncadd %s401, %s405
          %s407 = smul.addr %s28, 16
          %s408 = scalar_lea.hbm %s1, %s407
          %s410 = sshll.u32 %s403, 4
          %s411 = int_to_ptr.vmem [resolvable:$true] %s410
          %413 = dma.hbm_to_vmem [thread:$0]  %s408, 16, %s411, %s401
        $region52: #{tpu_custom_call.1} parent=43 // pred_fallthru
          _
        // Predicated region
        $region53: #{tpu_custom_call.1} parent=43 // pred_check
          %p414 = pneg %p100
        $region54: #{tpu_custom_call.1} parent=43 // pred_check_branch
          %416 = sbr.rel (%p414) target = $region56
        $region55: #{tpu_custom_call.1} parent=43 // pred_region
          %p417 = scmp.lt.s32.totalorder %s28, 1
          %s418 = scalar_select %p417, %s28, 1
          %s419 = scalar_lea.vmem %s2, %s418
        $region56: #{tpu_custom_call.1} parent=43 // pred_fallthru
          _
      $region44: #{tpu_custom_call.1} parent=5 // pred_fallthru
        _
      %p420 = scmp.le.s32.totalorder 1, %s28
      %p421 = scmp.lt.s32.totalorder %s28, 3
      %p422 = pnand %p420, %p421
      %p423 = pneg %p422
      // Predicated region
      $region57: #{tpu_custom_call.1} parent=5 // pred_check
        _
      $region58: #{tpu_custom_call.1} parent=5 // pred_check_branch
        %425 = sbr.rel (%p422) target = $region60
      $region59: #{tpu_custom_call.1} parent=5 // pred_region
        %s426 = ssub.s32 %s28, 1
        %s427 = sand.u32 %s41, 1
        %s428 = scalar_lea.sflag [#allocation3], %s427
        %s429 = sand.u32 %s41, 1
        %s430 = smul.addr %s429, 8
        %s431 = scalar_lea.vmem [#allocation2], %s430
        // Predicated region
        $region61: #{tpu_custom_call.1} parent=59 // pred_check
          %p432 = pneg %p54
        $region62: #{tpu_custom_call.1} parent=59 // pred_check_branch
          %434 = sbr.rel (%p432) target = $region64
        $region63: #{tpu_custom_call.1} parent=59 // pred_region
          %435 = dma.done %s428, 128
        $region64: #{tpu_custom_call.1} parent=59 // pred_fallthru
          _
        %s436 = sand.u32 %s33, 1
        %s437 = scalar_lea.sflag [#allocation6], %s436
        %s438 = sand.u32 %s67, 1
        %s439 = scalar_lea.vmem [#allocation5], %s438
        // Predicated region
        $region65: #{tpu_custom_call.1} parent=59 // pred_check
          %p440 = pneg %p80
        $region66: #{tpu_custom_call.1} parent=59 // pred_check_branch
          %442 = sbr.rel (%p440) target = $region68
        $region67: #{tpu_custom_call.1} parent=59 // pred_region
          %443 = dma.done %s437, 16
        $region68: #{tpu_custom_call.1} parent=59 // pred_fallthru
          _
        // Predicated region
        $region69: #{tpu_custom_call.1} parent=59 // pred_check
          %p444 = pneg %p127
        $region70: #{tpu_custom_call.1} parent=59 // pred_check_branch
          %446 = sbr.rel (%p444) target = $region72
        $region71: #{tpu_custom_call.1} parent=59 // pred_region
          %447 = dma.done [#allocation6], 256
        $region72: #{tpu_custom_call.1} parent=59 // pred_fallthru
          _
        // Predicated region
        $region73: #{tpu_custom_call.1} parent=59 // pred_check
          %p448 = pneg %p169
        $region74: #{tpu_custom_call.1} parent=59 // pred_check_branch
          %450 = sbr.rel (%p448) target = $region76
        $region75: #{tpu_custom_call.1} parent=59 // pred_region
          %451 = dma.done [#allocation9], 6144
        $region76: #{tpu_custom_call.1} parent=59 // pred_fallthru
          _
        // Predicated region
        $region77: #{tpu_custom_call.1} parent=59 // pred_check
          %p452 = pneg %p190
        $region78: #{tpu_custom_call.1} parent=59 // pred_check_branch
          %454 = sbr.rel (%p452) target = $region80
        $region79: #{tpu_custom_call.1} parent=59 // pred_region
          %455 = dma.done [#allocation9], 2048
        $region80: #{tpu_custom_call.1} parent=59 // pred_fallthru
          _
        // Predicated region
        $region81: #{tpu_custom_call.1} parent=59 // pred_check
          %p456 = pneg %p211
        $region82: #{tpu_custom_call.1} parent=59 // pred_check_branch
          %458 = sbr.rel (%p456) target = $region84
        $region83: #{tpu_custom_call.1} parent=59 // pred_region
          %459 = dma.done [#allocation12], 4096
        $region84: #{tpu_custom_call.1} parent=59 // pred_fallthru
          _
        // Predicated region
        $region85: #{tpu_custom_call.1} parent=59 // pred_check
          %p460 = pneg %p232
        $region86: #{tpu_custom_call.1} parent=59 // pred_check_branch
          %462 = sbr.rel (%p460) target = $region88
        $region87: #{tpu_custom_call.1} parent=59 // pred_region
          %463 = dma.done [#allocation12], 4096
        $region88: #{tpu_custom_call.1} parent=59 // pred_fallthru
          _
        // Predicated region
        $region89: #{tpu_custom_call.1} parent=59 // pred_check
          %p464 = pneg %p253
        $region90: #{tpu_custom_call.1} parent=59 // pred_check_branch
          %466 = sbr.rel (%p464) target = $region92
        $region91: #{tpu_custom_call.1} parent=59 // pred_region
          %467 = dma.done [#allocation15], 768
        $region92: #{tpu_custom_call.1} parent=59 // pred_fallthru
          _
        %s468 = sand.u32 %s41, 1
        %s469 = scalar_lea.sflag [#allocation3], %s468
        %s470 = sand.u32 %s41, 1
        %s471 = smul.addr %s470, 8
        %s472 = scalar_lea.vmem [#allocation2], %s471
        %p473 = pneg %p54
        %p474 = pneg %p51
        %s475 = sand.u32 %s33, 1
        %s476 = scalar_lea.sflag [#allocation6], %s475
        %s477 = sand.u32 %s67, 1
        %s478 = scalar_lea.vmem [#allocation5], %s477
        %p479 = pneg %p80
        %p480 = pneg %p77
        %p481 = scmp.lt.s32.totalorder %s33, 1
        %s482 = scalar_select %p481, %s33, 1
        %s483 = scalar_lea.vmem %s2, %s482
        %p484 = pneg %p106
        %p485 = pneg %p103
        %p486 = pneg %p127
        %p487 = pneg %p124
        %p488 = pneg %p148
        %p489 = pneg %p145
        %p490 = pneg %p169
        %p491 = pneg %p166
        %p492 = pneg %p190
        %p493 = pneg %p187
        %p494 = pneg %p211
        %p495 = pneg %p208
        %p496 = pneg %p232
        %p497 = pneg %p229
        %p498 = pneg %p253
        %p499 = pneg %p250
        %p500 = pneg %p279
        %p501 = pneg %p276
        %s502 = sand.u32 %s266, 1
        %s503 = scalar_lea.sflag [#allocation4], %s502
        %s504 = sand.u32 %s266, 1
        %s505 = scalar_lea.vmem [#allocation16], %s504
        %p506 = scmp.lt.s32.totalorder %s33, 1
        %s507 = scalar_select %p506, %s33, 1
        %s508 = scalar_lea.vmem %s2, %s507
        %v510 = vld [vmem:[%s431] sm:$0xff]
        %v511 = vpack.c.bf16 %v510, %v510
        %v512 = vld [vmem:[#allocation7] sm:$0xf]
        %v513 = vld [vmem:[#allocation7 + $0x4] sm:$0xf]
        %v514 = vld [vmem:[#allocation7 + $0x8] sm:$0xf]
        %v515 = vld [vmem:[#allocation7 + $0xc] sm:$0xf]
        %v516 = vld [vmem:[%s4] sm:$0x1]
        %v518 = vlaneseq
        %v519 = vshrl.u32 %v518, 7
        %v520 = vsub.s32 0, %v519
        %v521 = vrot.slane %v516, %v520
        %v527 = vunpack.c.l.b16 %v512
        %v528 = vunpack.c.l.b16 %v513
        %v529 = vunpack.c.l.b16 %v514
        %v530 = vunpack.c.l.b16 %v515
        %v531 = vpack.c.b16 %v528, %v527
        %v532 = vpack.c.b16 %v530, %v529
        %vm535 = vcmask 261120
        %v537 = vsel %vm535, %v511, 0
        %539 = vmatprep.subr.bf16.mxu0 0
        %540 = vmatpush1.bf16.msra.mxu0 0
        %541 = vmatprep.subr.bf16.mxu0 0
        %542 = vmatpush1.bf16.msra.mxu0 0
        %543 = vmatprep.subr.bf16.mxu0 0
        %544 = vmatpush1.bf16.msra.mxu0 0
        %545 = vmatprep.subr.bf16.mxu0 0
        %546 = vmatpush1.bf16.msra.mxu0 0
        %547 = vmatprep.subr.bf16.mxu0 0
        %548 = vmatpush1.bf16.msra.mxu0 0
        %549 = vmatprep.subr.bf16.mxu0 0
        %550 = vmatpush1.bf16.msra.mxu0 0
        %551 = vmatprep.subr.bf16.mxu0 0
        %552 = vmatpush1.bf16.msra.mxu0 %v532
        %553 = vmatprep.subr.bf16.mxu0 0
        %554 = vmatpush1.bf16.msra.mxu0 %v531
        %555 = vmatprep.subr.bf16.mxu0 0
        %556 = vmatpush2.bf16.msra.mxu0 0
        %557 = vmatprep.subr.bf16.mxu0 0
        %558 = vmatpush2.bf16.msra.mxu0 0
        %559 = vmatprep.subr.bf16.mxu0 0
        %560 = vmatpush2.bf16.msra.mxu0 0
        %561 = vmatprep.subr.bf16.mxu0 0
        %562 = vmatpush2.bf16.msra.mxu0 0
        %563 = vmatprep.subr.bf16.mxu0 0
        %564 = vmatpush2.bf16.msra.mxu0 0
        %565 = vmatprep.subr.bf16.mxu0 0
        %566 = vmatpush2.bf16.msra.mxu0 0
        %567 = vmatprep.subr.bf16.mxu0 0
        %568 = vmatpush2.bf16.msra.mxu0 0
        %569 = vmatprep.subr.bf16.mxu0 0
        %570 = vmatpush2.bf16.msra.mxu0 0
        %571 = vmatprep.mubr.bf16.mxu0 0
        %572 = vmatmul.mubr.bf16.gmra.mxu0 %v537
        %v573 = vpop.f32.mrf.mxu0
        %v574 = vadd.f32 %v521, %v573
        %v575 = vpop.f32.mrf.mxu0
        %v576 = vpop.f32.mrf.mxu0
        %v577 = vpop.f32.mrf.mxu0
        %578 = vdwg.mxu0
        %v579 = vld [vmem:[%s508] sm:$0x1]
        %v581 = vlaneseq
        %v582 = vshrl.u32 %v581, 7
        %v583 = vsub.s32 0, %v582
        %v584 = vrot.slane %v579, %v583
        %v586 = vadd.f32 %v574, %v584
        %v587 = vld [vmem:[%s439] sm:$0x1]
        %vm588 = vcmp.gt.f32.partialorder %v587, 0.5
        %v589 = vsel %vm588, 0.0, -1e+09
        %v590 = vld [vmem:[#allocation14] sm:$0xff]
        %v591 = vld [vmem:[#allocation14 + $0x8] sm:$0xff]
        %v592 = vld [vmem:[#allocation14 + $0x10] sm:$0xff]
        %v593 = vpack.c.bf16 %v586, %v586
        %v594 = vld [vmem:[#allocation8] sm:$0xff]
        %v595 = vld [vmem:[#allocation8 + $0x8] sm:$0xf]
        %v596 = vld [vmem:[#allocation8 + $0xc] sm:$0xff]
        %v597 = vld [vmem:[#allocation8 + $0x14] sm:$0xf]
        %v598 = vld [vmem:[#allocation8 + $0x18] sm:$0xff]
        %v599 = vld [vmem:[#allocation8 + $0x20] sm:$0xf]
        %v600 = vld [vmem:[#allocation8 + $0x24] sm:$0xff]
        %v601 = vld [vmem:[#allocation8 + $0x2c] sm:$0xf]
        %v602 = vld [vmem:[#allocation8 + $0x30] sm:$0xff]
        %v603 = vld [vmem:[#allocation8 + $0x38] sm:$0xf]
        %v604 = vld [vmem:[#allocation8 + $0x3c] sm:$0xff]
        %v605 = vld [vmem:[#allocation8 + $0x44] sm:$0xf]
        %v606 = vld [vmem:[#allocation8 + $0x48] sm:$0xff]
        %v607 = vld [vmem:[#allocation8 + $0x50] sm:$0xf]
        %v608 = vld [vmem:[#allocation8 + $0x54] sm:$0xff]
        %v609 = vld [vmem:[#allocation8 + $0x5c] sm:$0xf]
        %v610 = vld [vmem:[#allocation8 + $0x60] sm:$0xff]
        %v611 = vld [vmem:[#allocation8 + $0x68] sm:$0xf]
        %v612 = vld [vmem:[#allocation8 + $0x6c] sm:$0xff]
        %v613 = vld [vmem:[#allocation8 + $0x74] sm:$0xf]
        %v614 = vld [vmem:[#allocation8 + $0x78] sm:$0xff]
        %v615 = vld [vmem:[#allocation8 + $0x80] sm:$0xf]
        %v616 = vld [vmem:[#allocation8 + $0x84] sm:$0xff]
        %v617 = vld [vmem:[#allocation8 + $0x8c] sm:$0xf]
        %v618 = vld [vmem:[#allocation8 + $0x90] sm:$0xff]
        %v619 = vld [vmem:[#allocation8 + $0x98] sm:$0xf]
        %v620 = vld [vmem:[#allocation8 + $0x9c] sm:$0xff]
        %v621 = vld [vmem:[#allocation8 + $0xa4] sm:$0xf]
        %v622 = vld [vmem:[#allocation8 + $0xa8] sm:$0xff]
        %v623 = vld [vmem:[#allocation8 + $0xb0] sm:$0xf]
        %v624 = vld [vmem:[#allocation8 + $0xb4] sm:$0xff]
        %v625 = vld [vmem:[#allocation8 + $0xbc] sm:$0xf]
        %v626 = vlaneseq
        %v627 = vshrl.u32 %v626, 7
        %v628 = vsub.s32 0, %v627
        %v629 = vrot.slane %v590, %v628
        %v630 = vlaneseq
        %v631 = vshrl.u32 %v630, 7
        %v632 = vsub.s32 0, %v631
        %v633 = vrot.slane %v591, %v632
        %v634 = vlaneseq
        %v635 = vshrl.u32 %v634, 7
        %v636 = vsub.s32 0, %v635
        %v637 = vrot.slane %v592, %v636
        %v670 = vunpack.c.l.b16 %v594
        %v671 = vunpack.c.h.b16 %v594
        %v672 = vunpack.c.l.b16 %v595
        %v673 = vunpack.c.l.b16 %v596
        %v674 = vunpack.c.h.b16 %v596
        %v675 = vunpack.c.l.b16 %v597
        %v676 = vunpack.c.l.b16 %v598
        %v677 = vunpack.c.h.b16 %v598
        %v678 = vunpack.c.l.b16 %v599
        %v679 = vunpack.c.l.b16 %v600
        %v680 = vunpack.c.h.b16 %v600
        %v681 = vunpack.c.l.b16 %v601
        %v682 = vunpack.c.l.b16 %v602
        %v683 = vunpack.c.h.b16 %v602
        %v684 = vunpack.c.l.b16 %v603
        %v685 = vunpack.c.l.b16 %v604
        %v686 = vunpack.c.h.b16 %v604
        %v687 = vunpack.c.l.b16 %v605
        %v688 = vunpack.c.l.b16 %v606
        %v689 = vunpack.c.h.b16 %v606
        %v690 = vunpack.c.l.b16 %v607
        %v691 = vunpack.c.l.b16 %v608
        %v692 = vunpack.c.h.b16 %v608
        %v693 = vunpack.c.l.b16 %v609
        %v694 = vunpack.c.l.b16 %v610
        %v695 = vunpack.c.h.b16 %v610
        %v696 = vunpack.c.l.b16 %v611
        %v697 = vunpack.c.l.b16 %v612
        %v698 = vunpack.c.h.b16 %v612
        %v699 = vunpack.c.l.b16 %v613
        %v700 = vunpack.c.l.b16 %v614
        %v701 = vunpack.c.h.b16 %v614
        %v702 = vunpack.c.l.b16 %v615
        %v703 = vunpack.c.l.b16 %v616
        %v704 = vunpack.c.h.b16 %v616
        %v705 = vunpack.c.l.b16 %v617
        %v706 = vunpack.c.l.b16 %v618
        %v707 = vunpack.c.h.b16 %v618
        %v708 = vunpack.c.l.b16 %v619
        %v709 = vunpack.c.l.b16 %v620
        %v710 = vunpack.c.h.b16 %v620
        %v711 = vunpack.c.l.b16 %v621
        %v712 = vunpack.c.l.b16 %v622
        %v713 = vunpack.c.h.b16 %v622
        %v714 = vunpack.c.l.b16 %v623
        %v715 = vunpack.c.l.b16 %v624
        %v716 = vunpack.c.h.b16 %v624
        %v717 = vunpack.c.l.b16 %v625
        %v718 = vpack.c.b16 %v673, %v670
        %v719 = vpack.c.b16 %v674, %v671
        %v720 = vpack.c.b16 %v675, %v672
        %v721 = vpack.c.b16 %v679, %v676
        %v722 = vpack.c.b16 %v680, %v677
        %v723 = vpack.c.b16 %v681, %v678
        %v724 = vpack.c.b16 %v685, %v682
        %v725 = vpack.c.b16 %v686, %v683
        %v726 = vpack.c.b16 %v687, %v684
        %v727 = vpack.c.b16 %v691, %v688
        %v728 = vpack.c.b16 %v692, %v689
        %v729 = vpack.c.b16 %v693, %v690
        %v730 = vpack.c.b16 %v697, %v694
        %v731 = vpack.c.b16 %v698, %v695
        %v732 = vpack.c.b16 %v699, %v696
        %v733 = vpack.c.b16 %v703, %v700
        %v734 = vpack.c.b16 %v704, %v701
        %v735 = vpack.c.b16 %v705, %v702
        %v736 = vpack.c.b16 %v709, %v706
        %v737 = vpack.c.b16 %v710, %v707
        %v738 = vpack.c.b16 %v711, %v708
        %v739 = vpack.c.b16 %v715, %v712
        %v740 = vpack.c.b16 %v716, %v713
        %v741 = vpack.c.b16 %v717, %v714
        %766 = vmatprep.subr.bf16.mxu0 %v740
        %767 = vmatpush1.bf16.msra.mxu0 %v739
        %768 = vmatprep.subr.bf16.mxu0 %v737
        %769 = vmatpush1.bf16.msra.mxu0 %v736
        %770 = vmatprep.subr.bf16.mxu0 %v734
        %771 = vmatpush1.bf16.msra.mxu0 %v733
        %772 = vmatprep.subr.bf16.mxu0 %v731
        %773 = vmatpush1.bf16.msra.mxu0 %v730
        %774 = vmatprep.subr.bf16.mxu0 %v728
        %775 = vmatpush1.bf16.msra.mxu0 %v727
        %776 = vmatprep.subr.bf16.mxu0 %v725
        %777 = vmatpush1.bf16.msra.mxu0 %v724
        %778 = vmatprep.subr.bf16.mxu0 %v722
        %779 = vmatpush1.bf16.msra.mxu0 %v721
        %780 = vmatprep.subr.bf16.mxu0 %v719
        %781 = vmatpush1.bf16.msra.mxu0 %v718
        %782 = vmatprep.subr.bf16.mxu0 0
        %783 = vmatpush2.bf16.msra.mxu0 0
        %784 = vmatprep.subr.bf16.mxu0 0
        %785 = vmatpush2.bf16.msra.mxu0 0
        %786 = vmatprep.subr.bf16.mxu0 0
        %787 = vmatpush2.bf16.msra.mxu0 0
        %788 = vmatprep.subr.bf16.mxu0 0
        %789 = vmatpush2.bf16.msra.mxu0 0
        %790 = vmatprep.subr.bf16.mxu0 0
        %791 = vmatpush2.bf16.msra.mxu0 0
        %792 = vmatprep.subr.bf16.mxu0 0
        %793 = vmatpush2.bf16.msra.mxu0 0
        %794 = vmatprep.subr.bf16.mxu0 0
        %795 = vmatpush2.bf16.msra.mxu0 0
        %796 = vmatprep.subr.bf16.mxu0 0
        %797 = vmatpush2.bf16.msra.mxu0 0
        %798 = vmatprep.mubr.bf16.mxu0 0
        %799 = vmatmul.mubr.bf16.gmra.mxu0 %v593
        %v800 = vpop.f32.mrf.mxu0
        %v801 = vadd.f32 %v629, %v800
        %v802 = vpop.f32.mrf.mxu0
        %v803 = vadd.f32 %v633, %v802
        %v804 = vpop.f32.mrf.mxu0
        %v805 = vpop.f32.mrf.mxu0
        %806 = vdwg.mxu0
        %807 = vmatprep.subr.bf16.mxu0 0
        %808 = vmatpush1.bf16.msra.mxu0 %v741
        %809 = vmatprep.subr.bf16.mxu0 0
        %810 = vmatpush1.bf16.msra.mxu0 %v738
        %811 = vmatprep.subr.bf16.mxu0 0
        %812 = vmatpush1.bf16.msra.mxu0 %v735
        %813 = vmatprep.subr.bf16.mxu0 0
        %814 = vmatpush1.bf16.msra.mxu0 %v732
        %815 = vmatprep.subr.bf16.mxu0 0
        %816 = vmatpush1.bf16.msra.mxu0 %v729
        %817 = vmatprep.subr.bf16.mxu0 0
        %818 = vmatpush1.bf16.msra.mxu0 %v726
        %819 = vmatprep.subr.bf16.mxu0 0
        %820 = vmatpush1.bf16.msra.mxu0 %v723
        %821 = vmatprep.subr.bf16.mxu0 0
        %822 = vmatpush1.bf16.msra.mxu0 %v720
        %823 = vmatprep.subr.bf16.mxu0 0
        %824 = vmatpush2.bf16.msra.mxu0 0
        %825 = vmatprep.subr.bf16.mxu0 0
        %826 = vmatpush2.bf16.msra.mxu0 0
        %827 = vmatprep.subr.bf16.mxu0 0
        %828 = vmatpush2.bf16.msra.mxu0 0
        %829 = vmatprep.subr.bf16.mxu0 0
        %830 = vmatpush2.bf16.msra.mxu0 0
        %831 = vmatprep.subr.bf16.mxu0 0
        %832 = vmatpush2.bf16.msra.mxu0 0
        %833 = vmatprep.subr.bf16.mxu0 0
        %834 = vmatpush2.bf16.msra.mxu0 0
        %835 = vmatprep.subr.bf16.mxu0 0
        %836 = vmatpush2.bf16.msra.mxu0 0
        %837 = vmatprep.subr.bf16.mxu0 0
        %838 = vmatpush2.bf16.msra.mxu0 0
        %839 = vmatprep.mubr.bf16.mxu0 0
        %840 = vmatmul.mubr.bf16.gmra.mxu0 %v593
        %v841 = vpop.f32.mrf.mxu0
        %v842 = vadd.f32 %v637, %v841
        %v843 = vpop.f32.mrf.mxu0
        %v844 = vpop.f32.mrf.mxu0
        %v845 = vpop.f32.mrf.mxu0
        %846 = vdwg.mxu0
        %v847 = vmul.f32 %v801, 0.17677669
        %v848 = vpack.c.bf16 %v847, %v847
        %v849 = vpack.c.bf16 %v803, %v803
        %v850 = vpack.c.bf16 %v842, %v842
        %v851 = vld [vmem:[#allocation10] sm:$0xf]
        %v852 = vld [vmem:[#allocation10 + $0x4] sm:$0xf]
        %v853 = vld [vmem:[#allocation10 + $0x8] sm:$0xf]
        %v854 = vld [vmem:[#allocation10 + $0xc] sm:$0xf]
        %v855 = vld [vmem:[#allocation10 + $0x10] sm:$0xf]
        %v856 = vld [vmem:[#allocation10 + $0x14] sm:$0xf]
        %v857 = vld [vmem:[#allocation10 + $0x18] sm:$0xf]
        %v858 = vld [vmem:[#allocation10 + $0x1c] sm:$0xf]
        %v859 = vld [vmem:[#allocation10 + $0x20] sm:$0xf]
        %v860 = vld [vmem:[#allocation10 + $0x24] sm:$0xf]
        %v861 = vld [vmem:[#allocation10 + $0x28] sm:$0xf]
        %v862 = vld [vmem:[#allocation10 + $0x2c] sm:$0xf]
        %v863 = vld [vmem:[#allocation10 + $0x30] sm:$0xf]
        %v864 = vld [vmem:[#allocation10 + $0x34] sm:$0xf]
        %v865 = vld [vmem:[#allocation10 + $0x38] sm:$0xf]
        %v866 = vld [vmem:[#allocation10 + $0x3c] sm:$0xf]
        %v868 = vlaneseq
        %v869 = vshrl.u32 %v868, 7
        %v870 = vsub.s32 0, %v869
        %v871 = vrot.slane %v589, %v870
        %v874 = vsel %vm535, %v848, 0
        %v877 = vsel %vm535, %v849, 0
        %879 = vmatprep.subr.bf16.mxu0 0
        %880 = vmatpush1.bf16.xpose.msra.mxu0 0
        %881 = vmatprep.subr.bf16.mxu0 0
        %882 = vmatpush1.bf16.xpose.msra.mxu0 0
        %883 = vmatprep.subr.bf16.mxu0 0
        %884 = vmatpush1.bf16.xpose.msra.mxu0 0
        %885 = vmatprep.subr.bf16.mxu0 0
        %886 = vmatpush1.bf16.xpose.msra.mxu0 0
        %887 = vmatprep.subr.bf16.mxu0 0
        %888 = vmatpush1.bf16.xpose.msra.mxu0 0
        %889 = vmatprep.subr.bf16.mxu0 0
        %890 = vmatpush1.bf16.xpose.msra.mxu0 0
        %891 = vmatprep.subr.bf16.mxu0 0
        %892 = vmatpush1.bf16.xpose.msra.mxu0 0
        %893 = vmatprep.subr.bf16.mxu0 0
        %894 = vmatpush1.bf16.xpose.msra.mxu0 %v877
        %895 = vmatprep.subr.bf16.mxu0 0
        %896 = vmatpush2.bf16.xpose.msra.mxu0 0
        %897 = vmatprep.subr.bf16.mxu0 0
        %898 = vmatpush2.bf16.xpose.msra.mxu0 0
        %899 = vmatprep.subr.bf16.mxu0 0
        %900 = vmatpush2.bf16.xpose.msra.mxu0 0
        %901 = vmatprep.subr.bf16.mxu0 0
        %902 = vmatpush2.bf16.xpose.msra.mxu0 0
        %903 = vmatprep.subr.bf16.mxu0 0
        %904 = vmatpush2.bf16.xpose.msra.mxu0 0
        %905 = vmatprep.subr.bf16.mxu0 0
        %906 = vmatpush2.bf16.xpose.msra.mxu0 0
        %907 = vmatprep.subr.bf16.mxu0 0
        %908 = vmatpush2.bf16.xpose.msra.mxu0 0
        %909 = vmatprep.subr.bf16.mxu0 0
        %910 = vmatpush2.bf16.xpose.msra.mxu0 0
        %911 = vmatprep.mubr.bf16.mxu0 0
        %912 = vmatmul.mubr.bf16.gmra.mxu0 %v874
        %v913 = vpop.f32.mrf.mxu0
        %v914 = vadd.f32 %v871, %v913
        %v915 = vpop.f32.mrf.mxu0
        %v916 = vpop.f32.mrf.mxu0
        %v917 = vpop.f32.mrf.mxu0
        %918 = vdwg.mxu0
        %vm919 = vcmask 64512
        %v920 = vsel %vm919, %v914, -inf
        %921 = vmax.xlane.f32.xlu0 %v920
        %v922 = vpop.xlane.xlu0 %921
        %v923 = vsub.f32 %v914, %v922
        %v924 = vmul.f32 %v923, 1.442695
        %v925 = vpow.pop %v924
        %v926 = vsel %vm919, %v925, 0.0
        %927 = vadd.xlane.f32.xlu0 %v926
        %v928 = vpop.xlane.xlu0 %927
        %v929 = vrcp.pop %v928
        %v930 = vmul.f32 %v925, %v929
        %v931 = vpack.c.bf16 %v930, %v930
        %v933 = vsel %vm919, %v931, 0
        %vm935 = vcmask 1043456
        %v937 = vsel %vm935, %v850, 0
        %939 = vmatprep.subr.bf16.mxu0 0
        %940 = vmatpush1.bf16.msra.mxu0 0
        %941 = vmatprep.subr.bf16.mxu0 0
        %942 = vmatpush1.bf16.msra.mxu0 0
        %943 = vmatprep.subr.bf16.mxu0 0
        %944 = vmatpush1.bf16.msra.mxu0 0
        %945 = vmatprep.subr.bf16.mxu0 0
        %946 = vmatpush1.bf16.msra.mxu0 0
        %947 = vmatprep.subr.bf16.mxu0 0
        %948 = vmatpush1.bf16.msra.mxu0 0
        %949 = vmatprep.subr.bf16.mxu0 0
        %950 = vmatpush1.bf16.msra.mxu0 0
        %951 = vmatprep.subr.bf16.mxu0 0
        %952 = vmatpush1.bf16.msra.mxu0 0
        %953 = vmatprep.subr.bf16.mxu0 0
        %954 = vmatpush1.bf16.msra.mxu0 %v937
        %955 = vmatprep.subr.bf16.mxu0 0
        %956 = vmatpush2.bf16.msra.mxu0 0
        %957 = vmatprep.subr.bf16.mxu0 0
        %958 = vmatpush2.bf16.msra.mxu0 0
        %959 = vmatprep.subr.bf16.mxu0 0
        %960 = vmatpush2.bf16.msra.mxu0 0
        %961 = vmatprep.subr.bf16.mxu0 0
        %962 = vmatpush2.bf16.msra.mxu0 0
        %963 = vmatprep.subr.bf16.mxu0 0
        %964 = vmatpush2.bf16.msra.mxu0 0
        %965 = vmatprep.subr.bf16.mxu0 0
        %966 = vmatpush2.bf16.msra.mxu0 0
        %967 = vmatprep.subr.bf16.mxu0 0
        %968 = vmatpush2.bf16.msra.mxu0 0
        %969 = vmatprep.subr.bf16.mxu0 0
        %970 = vmatpush2.bf16.msra.mxu0 0
        %971 = vmatprep.mubr.bf16.mxu0 0
        %972 = vmatmul.mubr.bf16.gmra.mxu0 %v933
        %v973 = vpop.f32.mrf.mxu0
        %v974 = vadd.f32 0.0, %v973
        %v975 = vpop.f32.mrf.mxu0
        %v976 = vpop.f32.mrf.mxu0
        %v977 = vpop.f32.mrf.mxu0
        %978 = vdwg.mxu0
        %v979 = vpack.c.bf16 %v974, %v974
        %v984 = vunpack.c.l.b16 %v851
        %v985 = vunpack.c.l.b16 %v852
        %v986 = vunpack.c.l.b16 %v853
        %v987 = vunpack.c.l.b16 %v854
        %v988 = vpack.c.b16 %v985, %v984
        %v989 = vpack.c.b16 %v987, %v986
        %v993 = vsel %vm535, %v979, 0
        %995 = vmatprep.subr.bf16.mxu0 0
        %996 = vmatpush1.bf16.msra.mxu0 0
        %997 = vmatprep.subr.bf16.mxu0 0
        %998 = vmatpush1.bf16.msra.mxu0 0
        %999 = vmatprep.subr.bf16.mxu0 0
        %1000 = vmatpush1.bf16.msra.mxu0 0
        %1001 = vmatprep.subr.bf16.mxu0 0
        %1002 = vmatpush1.bf16.msra.mxu0 0
        %1003 = vmatprep.subr.bf16.mxu0 0
        %1004 = vmatpush1.bf16.msra.mxu0 0
        %1005 = vmatprep.subr.bf16.mxu0 0
        %1006 = vmatpush1.bf16.msra.mxu0 0
        %1007 = vmatprep.subr.bf16.mxu0 0
        %1008 = vmatpush1.bf16.msra.mxu0 %v989
        %1009 = vmatprep.subr.bf16.mxu0 0
        %1010 = vmatpush1.bf16.msra.mxu0 %v988
        %1011 = vmatprep.subr.bf16.mxu0 0
        %1012 = vmatpush2.bf16.msra.mxu0 0
        %1013 = vmatprep.subr.bf16.mxu0 0
        %1014 = vmatpush2.bf16.msra.mxu0 0
        %1015 = vmatprep.subr.bf16.mxu0 0
        %1016 = vmatpush2.bf16.msra.mxu0 0
        %1017 = vmatprep.subr.bf16.mxu0 0
        %1018 = vmatpush2.bf16.msra.mxu0 0
        %1019 = vmatprep.subr.bf16.mxu0 0
        %1020 = vmatpush2.bf16.msra.mxu0 0
        %1021 = vmatprep.subr.bf16.mxu0 0
        %1022 = vmatpush2.bf16.msra.mxu0 0
        %1023 = vmatprep.subr.bf16.mxu0 0
        %1024 = vmatpush2.bf16.msra.mxu0 0
        %1025 = vmatprep.subr.bf16.mxu0 0
        %1026 = vmatpush2.bf16.msra.mxu0 0
        %1027 = vmatprep.mubr.bf16.mxu0 0
        %1028 = vmatmul.mubr.bf16.gmra.mxu0 %v993
        %v1029 = vpop.f32.mrf.mxu0
        %v1030 = vadd.f32 0.0, %v1029
        %v1031 = vpop.f32.mrf.mxu0
        %v1032 = vpop.f32.mrf.mxu0
        %v1033 = vpop.f32.mrf.mxu0
        %1034 = vdwg.mxu0
        %v1035 = vlaneseq
        %v1036 = vshrl.u32 %v1035, 7
        %v1037 = vsub.s32 1, %v1036
        %v1038 = vrot.slane %v590, %v1037
        %v1039 = vadd.f32 %v1038, %v1030
        %1041 = vrot.lane.b32.xlu0 %v848, 96
        %v1042 = vpop.permute.xlu0 %1041
        %1044 = vrot.lane.b32.xlu0 %v849, 96
        %v1045 = vpop.permute.xlu0 %1044
        %v1047 = vsel %vm535, %v1042, 0
        %v1050 = vsel %vm535, %v1045, 0
        %1052 = vmatprep.subr.bf16.mxu0 0
        %1053 = vmatpush1.bf16.xpose.msra.mxu0 0
        %1054 = vmatprep.subr.bf16.mxu0 0
        %1055 = vmatpush1.bf16.xpose.msra.mxu0 0
        %1056 = vmatprep.subr.bf16.mxu0 0
        %1057 = vmatpush1.bf16.xpose.msra.mxu0 0
        %1058 = vmatprep.subr.bf16.mxu0 0
        %1059 = vmatpush1.bf16.xpose.msra.mxu0 0
        %1060 = vmatprep.subr.bf16.mxu0 0
        %1061 = vmatpush1.bf16.xpose.msra.mxu0 0
        %1062 = vmatprep.subr.bf16.mxu0 0
        %1063 = vmatpush1.bf16.xpose.msra.mxu0 0
        %1064 = vmatprep.subr.bf16.mxu0 0
        %1065 = vmatpush1.bf16.xpose.msra.mxu0 0
        %1066 = vmatprep.subr.bf16.mxu0 0
        %1067 = vmatpush1.bf16.xpose.msra.mxu0 %v1050
        %1068 = vmatprep.subr.bf16.mxu0 0
        %1069 = vmatpush2.bf16.xpose.msra.mxu0 0
        %1070 = vmatprep.subr.bf16.mxu0 0
        %1071 = vmatpush2.bf16.xpose.msra.mxu0 0
        %1072 = vmatprep.subr.bf16.mxu0 0
        %1073 = vmatpush2.bf16.xpose.msra.mxu0 0
        %1074 = vmatprep.subr.bf16.mxu0 0
        %1075 = vmatpush2.bf16.xpose.msra.mxu0 0
        %1076 = vmatprep.subr.bf16.mxu0 0
        %1077 = vmatpush2.bf16.xpose.msra.mxu0 0
        %1078 = vmatprep.subr.bf16.mxu0 0
        %1079 = vmatpush2.bf16.xpose.msra.mxu0 0
        %1080 = vmatprep.subr.bf16.mxu0 0
        %1081 = vmatpush2.bf16.xpose.msra.mxu0 0
        %1082 = vmatprep.subr.bf16.mxu0 0
        %1083 = vmatpush2.bf16.xpose.msra.mxu0 0
        %1084 = vmatprep.mubr.bf16.mxu0 0
        %1085 = vmatmul.mubr.bf16.gmra.mxu0 %v1047
        %v1086 = vpop.f32.mrf.mxu0
        %v1087 = vadd.f32 %v871, %v1086
        %v1088 = vpop.f32.mrf.mxu0
        %v1089 = vpop.f32.mrf.mxu0
        %v1090 = vpop.f32.mrf.mxu0
        %1091 = vdwg.mxu0
        %v1092 = vsel %vm919, %v1087, -inf
        %1093 = vmax.xlane.f32.xlu0 %v1092
        %v1094 = vpop.xlane.xlu0 %1093
        %v1095 = vsub.f32 %v1087, %v1094
        %v1096 = vmul.f32 %v1095, 1.442695
        %v1097 = vpow.pop %v1096
        %v1098 = vsel %vm919, %v1097, 0.0
        %1099 = vadd.xlane.f32.xlu0 %v1098
        %v1100 = vpop.xlane.xlu0 %1099
        %v1101 = vrcp.pop %v1100
        %v1102 = vmul.f32 %v1097, %v1101
        %v1103 = vpack.c.bf16 %v1102, %v1102
        %1105 = vrot.lane.b32.xlu0 %v850, 96
        %v1106 = vpop.permute.xlu0 %1105
        %v1108 = vsel %vm919, %v1103, 0
        %v1111 = vsel %vm935, %v1106, 0
        %1113 = vmatprep.subr.bf16.mxu0 0
        %1114 = vmatpush1.bf16.msra.mxu0 0
        %1115 = vmatprep.subr.bf16.mxu0 0
        %1116 = vmatpush1.bf16.msra.mxu0 0
        %1117 = vmatprep.subr.bf16.mxu0 0
        %1118 = vmatpush1.bf16.msra.mxu0 0
        %1119 = vmatprep.subr.bf16.mxu0 0
        %1120 = vmatpush1.bf16.msra.mxu0 0
        %1121 = vmatprep.subr.bf16.mxu0 0
        %1122 = vmatpush1.bf16.msra.mxu0 0
        %1123 = vmatprep.subr.bf16.mxu0 0
        %1124 = vmatpush1.bf16.msra.mxu0 0
        %1125 = vmatprep.subr.bf16.mxu0 0
        %1126 = vmatpush1.bf16.msra.mxu0 0
        %1127 = vmatprep.subr.bf16.mxu0 0
        %1128 = vmatpush1.bf16.msra.mxu0 %v1111
        %1129 = vmatprep.subr.bf16.mxu0 0
        %1130 = vmatpush2.bf16.msra.mxu0 0
        %1131 = vmatprep.subr.bf16.mxu0 0
        %1132 = vmatpush2.bf16.msra.mxu0 0
        %1133 = vmatprep.subr.bf16.mxu0 0
        %1134 = vmatpush2.bf16.msra.mxu0 0
        %1135 = vmatprep.subr.bf16.mxu0 0
        %1136 = vmatpush2.bf16.msra.mxu0 0
        %1137 = vmatprep.subr.bf16.mxu0 0
        %1138 = vmatpush2.bf16.msra.mxu0 0
        %1139 = vmatprep.subr.bf16.mxu0 0
        %1140 = vmatpush2.bf16.msra.mxu0 0
        %1141 = vmatprep.subr.bf16.mxu0 0
        %1142 = vmatpush2.bf16.msra.mxu0 0
        %1143 = vmatprep.subr.bf16.mxu0 0
        %1144 = vmatpush2.bf16.msra.mxu0 0
        %1145 = vmatprep.mubr.bf16.mxu0 0
        %1146 = vmatmul.mubr.bf16.gmra.mxu0 %v1108
        %v1147 = vpop.f32.mrf.mxu0
        %v1148 = vadd.f32 0.0, %v1147
        %v1149 = vpop.f32.mrf.mxu0
        %v1150 = vpop.f32.mrf.mxu0
        %v1151 = vpop.f32.mrf.mxu0
        %1152 = vdwg.mxu0
        %v1153 = vpack.c.bf16 %v1148, %v1148
        %v1158 = vunpack.c.l.b16 %v855
        %v1159 = vunpack.c.l.b16 %v856
        %v1160 = vunpack.c.l.b16 %v857
        %v1161 = vunpack.c.l.b16 %v858
        %v1162 = vpack.c.b16 %v1159, %v1158
        %v1163 = vpack.c.b16 %v1161, %v1160
        %v1167 = vsel %vm535, %v1153, 0
        %1169 = vmatprep.subr.bf16.mxu0 0
        %1170 = vmatpush1.bf16.msra.mxu0 0
        %1171 = vmatprep.subr.bf16.mxu0 0
        %1172 = vmatpush1.bf16.msra.mxu0 0
        %1173 = vmatprep.subr.bf16.mxu0 0
        %1174 = vmatpush1.bf16.msra.mxu0 0
        %1175 = vmatprep.subr.bf16.mxu0 0
        %1176 = vmatpush1.bf16.msra.mxu0 0
        %1177 = vmatprep.subr.bf16.mxu0 0
        %1178 = vmatpush1.bf16.msra.mxu0 0
        %1179 = vmatprep.subr.bf16.mxu0 0
        %1180 = vmatpush1.bf16.msra.mxu0 0
        %1181 = vmatprep.subr.bf16.mxu0 0
        %1182 = vmatpush1.bf16.msra.mxu0 %v1163
        %1183 = vmatprep.subr.bf16.mxu0 0
        %1184 = vmatpush1.bf16.msra.mxu0 %v1162
        %1185 = vmatprep.subr.bf16.mxu0 0
        %1186 = vmatpush2.bf16.msra.mxu0 0
        %1187 = vmatprep.subr.bf16.mxu0 0
        %1188 = vmatpush2.bf16.msra.mxu0 0
        %1189 = vmatprep.subr.bf16.mxu0 0
        %1190 = vmatpush2.bf16.msra.mxu0 0
        %1191 = vmatprep.subr.bf16.mxu0 0
        %1192 = vmatpush2.bf16.msra.mxu0 0
        %1193 = vmatprep.subr.bf16.mxu0 0
        %1194 = vmatpush2.bf16.msra.mxu0 0
        %1195 = vmatprep.subr.bf16.mxu0 0
        %1196 = vmatpush2.bf16.msra.mxu0 0
        %1197 = vmatprep.subr.bf16.mxu0 0
        %1198 = vmatpush2.bf16.msra.mxu0 0
        %1199 = vmatprep.subr.bf16.mxu0 0
        %1200 = vmatpush2.bf16.msra.mxu0 0
        %1201 = vmatprep.mubr.bf16.mxu0 0
        %1202 = vmatmul.mubr.bf16.gmra.mxu0 %v1167
        %v1203 = vpop.f32.mrf.mxu0
        %v1204 = vadd.f32 0.0, %v1203
        %v1205 = vpop.f32.mrf.mxu0
        %v1206 = vpop.f32.mrf.mxu0
        %v1207 = vpop.f32.mrf.mxu0
        %1208 = vdwg.mxu0
        %v1209 = vadd.f32 %v1039, %v1204
        %1210 = vrot.lane.b32.xlu0 %v848, 64
        %v1211 = vpop.permute.xlu0 %1210
        %1212 = vrot.lane.b32.xlu0 %v849, 64
        %v1213 = vpop.permute.xlu0 %1212
        %v1215 = vsel %vm535, %v1211, 0
        %v1218 = vsel %vm535, %v1213, 0
        %1220 = vmatprep.subr.bf16.mxu0 0
        %1221 = vmatpush1.bf16.xpose.msra.mxu0 0
        %1222 = vmatprep.subr.bf16.mxu0 0
        %1223 = vmatpush1.bf16.xpose.msra.mxu0 0
        %1224 = vmatprep.subr.bf16.mxu0 0
        %1225 = vmatpush1.bf16.xpose.msra.mxu0 0
        %1226 = vmatprep.subr.bf16.mxu0 0
        %1227 = vmatpush1.bf16.xpose.msra.mxu0 0
        %1228 = vmatprep.subr.bf16.mxu0 0
        %1229 = vmatpush1.bf16.xpose.msra.mxu0 0
        %1230 = vmatprep.subr.bf16.mxu0 0
        %1231 = vmatpush1.bf16.xpose.msra.mxu0 0
        %1232 = vmatprep.subr.bf16.mxu0 0
        %1233 = vmatpush1.bf16.xpose.msra.mxu0 0
        %1234 = vmatprep.subr.bf16.mxu0 0
        %1235 = vmatpush1.bf16.xpose.msra.mxu0 %v1218
        %1236 = vmatprep.subr.bf16.mxu0 0
        %1237 = vmatpush2.bf16.xpose.msra.mxu0 0
        %1238 = vmatprep.subr.bf16.mxu0 0
        %1239 = vmatpush2.bf16.xpose.msra.mxu0 0
        %1240 = vmatprep.subr.bf16.mxu0 0
        %1241 = vmatpush2.bf16.xpose.msra.mxu0 0
        %1242 = vmatprep.subr.bf16.mxu0 0
        %1243 = vmatpush2.bf16.xpose.msra.mxu0 0
        %1244 = vmatprep.subr.bf16.mxu0 0
        %1245 = vmatpush2.bf16.xpose.msra.mxu0 0
        %1246 = vmatprep.subr.bf16.mxu0 0
        %1247 = vmatpush2.bf16.xpose.msra.mxu0 0
        %1248 = vmatprep.subr.bf16.mxu0 0
        %1249 = vmatpush2.bf16.xpose.msra.mxu0 0
        %1250 = vmatprep.subr.bf16.mxu0 0
        %1251 = vmatpush2.bf16.xpose.msra.mxu0 0
        %1252 = vmatprep.mubr.bf16.mxu0 0
        %1253 = vmatmul.mubr.bf16.gmra.mxu0 %v1215
        %v1254 = vpop.f32.mrf.mxu0
        %v1255 = vadd.f32 %v871, %v1254
        %v1256 = vpop.f32.mrf.mxu0
        %v1257 = vpop.f32.mrf.mxu0
        %v1258 = vpop.f32.mrf.mxu0
        %1259 = vdwg.mxu0
        %v1260 = vsel %vm919, %v1255, -inf
        %1261 = vmax.xlane.f32.xlu0 %v1260
        %v1262 = vpop.xlane.xlu0 %1261
        %v1263 = vsub.f32 %v1255, %v1262
        %v1264 = vmul.f32 %v1263, 1.442695
        %v1265 = vpow.pop %v1264
        %v1266 = vsel %vm919, %v1265, 0.0
        %1267 = vadd.xlane.f32.xlu0 %v1266
        %v1268 = vpop.xlane.xlu0 %1267
        %v1269 = vrcp.pop %v1268
        %v1270 = vmul.f32 %v1265, %v1269
        %v1271 = vpack.c.bf16 %v1270, %v1270
        %1272 = vrot.lane.b32.xlu0 %v850, 64
        %v1273 = vpop.permute.xlu0 %1272
        %v1275 = vsel %vm919, %v1271, 0
        %v1278 = vsel %vm935, %v1273, 0
        %1280 = vmatprep.subr.bf16.mxu0 0
        %1281 = vmatpush1.bf16.msra.mxu0 0
        %1282 = vmatprep.subr.bf16.mxu0 0
        %1283 = vmatpush1.bf16.msra.mxu0 0
        %1284 = vmatprep.subr.bf16.mxu0 0
        %1285 = vmatpush1.bf16.msra.mxu0 0
        %1286 = vmatprep.subr.bf16.mxu0 0
        %1287 = vmatpush1.bf16.msra.mxu0 0
        %1288 = vmatprep.subr.bf16.mxu0 0
        %1289 = vmatpush1.bf16.msra.mxu0 0
        %1290 = vmatprep.subr.bf16.mxu0 0
        %1291 = vmatpush1.bf16.msra.mxu0 0
        %1292 = vmatprep.subr.bf16.mxu0 0
        %1293 = vmatpush1.bf16.msra.mxu0 0
        %1294 = vmatprep.subr.bf16.mxu0 0
        %1295 = vmatpush1.bf16.msra.mxu0 %v1278
        %1296 = vmatprep.subr.bf16.mxu0 0
        %1297 = vmatpush2.bf16.msra.mxu0 0
        %1298 = vmatprep.subr.bf16.mxu0 0
        %1299 = vmatpush2.bf16.msra.mxu0 0
        %1300 = vmatprep.subr.bf16.mxu0 0
        %1301 = vmatpush2.bf16.msra.mxu0 0
        %1302 = vmatprep.subr.bf16.mxu0 0
        %1303 = vmatpush2.bf16.msra.mxu0 0
        %1304 = vmatprep.subr.bf16.mxu0 0
        %1305 = vmatpush2.bf16.msra.mxu0 0
        %1306 = vmatprep.subr.bf16.mxu0 0
        %1307 = vmatpush2.bf16.msra.mxu0 0
        %1308 = vmatprep.subr.bf16.mxu0 0
        %1309 = vmatpush2.bf16.msra.mxu0 0
        %1310 = vmatprep.subr.bf16.mxu0 0
        %1311 = vmatpush2.bf16.msra.mxu0 0
        %1312 = vmatprep.mubr.bf16.mxu0 0
        %1313 = vmatmul.mubr.bf16.gmra.mxu0 %v1275
        %v1314 = vpop.f32.mrf.mxu0
        %v1315 = vadd.f32 0.0, %v1314
        %v1316 = vpop.f32.mrf.mxu0
        %v1317 = vpop.f32.mrf.mxu0
        %v1318 = vpop.f32.mrf.mxu0
        %1319 = vdwg.mxu0
        %v1320 = vpack.c.bf16 %v1315, %v1315
        %v1325 = vunpack.c.l.b16 %v859
        %v1326 = vunpack.c.l.b16 %v860
        %v1327 = vunpack.c.l.b16 %v861
        %v1328 = vunpack.c.l.b16 %v862
        %v1329 = vpack.c.b16 %v1326, %v1325
        %v1330 = vpack.c.b16 %v1328, %v1327
        %v1334 = vsel %vm535, %v1320, 0
        %1336 = vmatprep.subr.bf16.mxu0 0
        %1337 = vmatpush1.bf16.msra.mxu0 0
        %1338 = vmatprep.subr.bf16.mxu0 0
        %1339 = vmatpush1.bf16.msra.mxu0 0
        %1340 = vmatprep.subr.bf16.mxu0 0
        %1341 = vmatpush1.bf16.msra.mxu0 0
        %1342 = vmatprep.subr.bf16.mxu0 0
        %1343 = vmatpush1.bf16.msra.mxu0 0
        %1344 = vmatprep.subr.bf16.mxu0 0
        %1345 = vmatpush1.bf16.msra.mxu0 0
        %1346 = vmatprep.subr.bf16.mxu0 0
        %1347 = vmatpush1.bf16.msra.mxu0 0
        %1348 = vmatprep.subr.bf16.mxu0 0
        %1349 = vmatpush1.bf16.msra.mxu0 %v1330
        %1350 = vmatprep.subr.bf16.mxu0 0
        %1351 = vmatpush1.bf16.msra.mxu0 %v1329
        %1352 = vmatprep.subr.bf16.mxu0 0
        %1353 = vmatpush2.bf16.msra.mxu0 0
        %1354 = vmatprep.subr.bf16.mxu0 0
        %1355 = vmatpush2.bf16.msra.mxu0 0
        %1356 = vmatprep.subr.bf16.mxu0 0
        %1357 = vmatpush2.bf16.msra.mxu0 0
        %1358 = vmatprep.subr.bf16.mxu0 0
        %1359 = vmatpush2.bf16.msra.mxu0 0
        %1360 = vmatprep.subr.bf16.mxu0 0
        %1361 = vmatpush2.bf16.msra.mxu0 0
        %1362 = vmatprep.subr.bf16.mxu0 0
        %1363 = vmatpush2.bf16.msra.mxu0 0
        %1364 = vmatprep.subr.bf16.mxu0 0
        %1365 = vmatpush2.bf16.msra.mxu0 0
        %1366 = vmatprep.subr.bf16.mxu0 0
        %1367 = vmatpush2.bf16.msra.mxu0 0
        %1368 = vmatprep.mubr.bf16.mxu0 0
        %1369 = vmatmul.mubr.bf16.gmra.mxu0 %v1334
        %v1370 = vpop.f32.mrf.mxu0
        %v1371 = vadd.f32 0.0, %v1370
        %v1372 = vpop.f32.mrf.mxu0
        %v1373 = vpop.f32.mrf.mxu0
        %v1374 = vpop.f32.mrf.mxu0
        %1375 = vdwg.mxu0
        %v1376 = vadd.f32 %v1209, %v1371
        %1377 = vrot.lane.b32.xlu0 %v848, 32
        %v1378 = vpop.permute.xlu0 %1377
        %1379 = vrot.lane.b32.xlu0 %v849, 32
        %v1380 = vpop.permute.xlu0 %1379
        %v1382 = vsel %vm535, %v1378, 0
        %v1385 = vsel %vm535, %v1380, 0
        %1387 = vmatprep.subr.bf16.mxu0 0
        %1388 = vmatpush1.bf16.xpose.msra.mxu0 0
        %1389 = vmatprep.subr.bf16.mxu0 0
        %1390 = vmatpush1.bf16.xpose.msra.mxu0 0
        %1391 = vmatprep.subr.bf16.mxu0 0
        %1392 = vmatpush1.bf16.xpose.msra.mxu0 0
        %1393 = vmatprep.subr.bf16.mxu0 0
        %1394 = vmatpush1.bf16.xpose.msra.mxu0 0
        %1395 = vmatprep.subr.bf16.mxu0 0
        %1396 = vmatpush1.bf16.xpose.msra.mxu0 0
        %1397 = vmatprep.subr.bf16.mxu0 0
        %1398 = vmatpush1.bf16.xpose.msra.mxu0 0
        %1399 = vmatprep.subr.bf16.mxu0 0
        %1400 = vmatpush1.bf16.xpose.msra.mxu0 0
        %1401 = vmatprep.subr.bf16.mxu0 0
        %1402 = vmatpush1.bf16.xpose.msra.mxu0 %v1385
        %1403 = vmatprep.subr.bf16.mxu0 0
        %1404 = vmatpush2.bf16.xpose.msra.mxu0 0
        %1405 = vmatprep.subr.bf16.mxu0 0
        %1406 = vmatpush2.bf16.xpose.msra.mxu0 0
        %1407 = vmatprep.subr.bf16.mxu0 0
        %1408 = vmatpush2.bf16.xpose.msra.mxu0 0
        %1409 = vmatprep.subr.bf16.mxu0 0
        %1410 = vmatpush2.bf16.xpose.msra.mxu0 0
        %1411 = vmatprep.subr.bf16.mxu0 0
        %1412 = vmatpush2.bf16.xpose.msra.mxu0 0
        %1413 = vmatprep.subr.bf16.mxu0 0
        %1414 = vmatpush2.bf16.xpose.msra.mxu0 0
        %1415 = vmatprep.subr.bf16.mxu0 0
        %1416 = vmatpush2.bf16.xpose.msra.mxu0 0
        %1417 = vmatprep.subr.bf16.mxu0 0
        %1418 = vmatpush2.bf16.xpose.msra.mxu0 0
        %1419 = vmatprep.mubr.bf16.mxu0 0
        %1420 = vmatmul.mubr.bf16.gmra.mxu0 %v1382
        %v1421 = vpop.f32.mrf.mxu0
        %v1422 = vadd.f32 %v871, %v1421
        %v1423 = vpop.f32.mrf.mxu0
        %v1424 = vpop.f32.mrf.mxu0
        %v1425 = vpop.f32.mrf.mxu0
        %1426 = vdwg.mxu0
        %v1427 = vsel %vm919, %v1422, -inf
        %1428 = vmax.xlane.f32.xlu0 %v1427
        %v1429 = vpop.xlane.xlu0 %1428
        %v1430 = vsub.f32 %v1422, %v1429
        %v1431 = vmul.f32 %v1430, 1.442695
        %v1432 = vpow.pop %v1431
        %v1433 = vsel %vm919, %v1432, 0.0
        %1434 = vadd.xlane.f32.xlu0 %v1433
        %v1435 = vpop.xlane.xlu0 %1434
        %v1436 = vrcp.pop %v1435
        %v1437 = vmul.f32 %v1432, %v1436
        %v1438 = vpack.c.bf16 %v1437, %v1437
        %1439 = vrot.lane.b32.xlu0 %v850, 32
        %v1440 = vpop.permute.xlu0 %1439
        %v1442 = vsel %vm919, %v1438, 0
        %v1445 = vsel %vm935, %v1440, 0
        %1447 = vmatprep.subr.bf16.mxu0 0
        %1448 = vmatpush1.bf16.msra.mxu0 0
        %1449 = vmatprep.subr.bf16.mxu0 0
        %1450 = vmatpush1.bf16.msra.mxu0 0
        %1451 = vmatprep.subr.bf16.mxu0 0
        %1452 = vmatpush1.bf16.msra.mxu0 0
        %1453 = vmatprep.subr.bf16.mxu0 0
        %1454 = vmatpush1.bf16.msra.mxu0 0
        %1455 = vmatprep.subr.bf16.mxu0 0
        %1456 = vmatpush1.bf16.msra.mxu0 0
        %1457 = vmatprep.subr.bf16.mxu0 0
        %1458 = vmatpush1.bf16.msra.mxu0 0
        %1459 = vmatprep.subr.bf16.mxu0 0
        %1460 = vmatpush1.bf16.msra.mxu0 0
        %1461 = vmatprep.subr.bf16.mxu0 0
        %1462 = vmatpush1.bf16.msra.mxu0 %v1445
        %1463 = vmatprep.subr.bf16.mxu0 0
        %1464 = vmatpush2.bf16.msra.mxu0 0
        %1465 = vmatprep.subr.bf16.mxu0 0
        %1466 = vmatpush2.bf16.msra.mxu0 0
        %1467 = vmatprep.subr.bf16.mxu0 0
        %1468 = vmatpush2.bf16.msra.mxu0 0
        %1469 = vmatprep.subr.bf16.mxu0 0
        %1470 = vmatpush2.bf16.msra.mxu0 0
        %1471 = vmatprep.subr.bf16.mxu0 0
        %1472 = vmatpush2.bf16.msra.mxu0 0
        %1473 = vmatprep.subr.bf16.mxu0 0
        %1474 = vmatpush2.bf16.msra.mxu0 0
        %1475 = vmatprep.subr.bf16.mxu0 0
        %1476 = vmatpush2.bf16.msra.mxu0 0
        %1477 = vmatprep.subr.bf16.mxu0 0
        %1478 = vmatpush2.bf16.msra.mxu0 0
        %1479 = vmatprep.mubr.bf16.mxu0 0
        %1480 = vmatmul.mubr.bf16.gmra.mxu0 %v1442
        %v1481 = vpop.f32.mrf.mxu0
        %v1482 = vadd.f32 0.0, %v1481
        %v1483 = vpop.f32.mrf.mxu0
        %v1484 = vpop.f32.mrf.mxu0
        %v1485 = vpop.f32.mrf.mxu0
        %1486 = vdwg.mxu0
        %v1487 = vpack.c.bf16 %v1482, %v1482
        %v1492 = vunpack.c.l.b16 %v863
        %v1493 = vunpack.c.l.b16 %v864
        %v1494 = vunpack.c.l.b16 %v865
        %v1495 = vunpack.c.l.b16 %v866
        %v1496 = vpack.c.b16 %v1493, %v1492
        %v1497 = vpack.c.b16 %v1495, %v1494
        %v1501 = vsel %vm535, %v1487, 0
        %1503 = vmatprep.subr.bf16.mxu0 0
        %1504 = vmatpush1.bf16.msra.mxu0 0
        %1505 = vmatprep.subr.bf16.mxu0 0
        %1506 = vmatpush1.bf16.msra.mxu0 0
        %1507 = vmatprep.subr.bf16.mxu0 0
        %1508 = vmatpush1.bf16.msra.mxu0 0
        %1509 = vmatprep.subr.bf16.mxu0 0
        %1510 = vmatpush1.bf16.msra.mxu0 0
        %1511 = vmatprep.subr.bf16.mxu0 0
        %1512 = vmatpush1.bf16.msra.mxu0 0
        %1513 = vmatprep.subr.bf16.mxu0 0
        %1514 = vmatpush1.bf16.msra.mxu0 0
        %1515 = vmatprep.subr.bf16.mxu0 0
        %1516 = vmatpush1.bf16.msra.mxu0 %v1497
        %1517 = vmatprep.subr.bf16.mxu0 0
        %1518 = vmatpush1.bf16.msra.mxu0 %v1496
        %1519 = vmatprep.subr.bf16.mxu0 0
        %1520 = vmatpush2.bf16.msra.mxu0 0
        %1521 = vmatprep.subr.bf16.mxu0 0
        %1522 = vmatpush2.bf16.msra.mxu0 0
        %1523 = vmatprep.subr.bf16.mxu0 0
        %1524 = vmatpush2.bf16.msra.mxu0 0
        %1525 = vmatprep.subr.bf16.mxu0 0
        %1526 = vmatpush2.bf16.msra.mxu0 0
        %1527 = vmatprep.subr.bf16.mxu0 0
        %1528 = vmatpush2.bf16.msra.mxu0 0
        %1529 = vmatprep.subr.bf16.mxu0 0
        %1530 = vmatpush2.bf16.msra.mxu0 0
        %1531 = vmatprep.subr.bf16.mxu0 0
        %1532 = vmatpush2.bf16.msra.mxu0 0
        %1533 = vmatprep.subr.bf16.mxu0 0
        %1534 = vmatpush2.bf16.msra.mxu0 0
        %1535 = vmatprep.mubr.bf16.mxu0 0
        %1536 = vmatmul.mubr.bf16.gmra.mxu0 %v1501
        %v1537 = vpop.f32.mrf.mxu0
        %v1538 = vadd.f32 0.0, %v1537
        %v1539 = vpop.f32.mrf.mxu0
        %v1540 = vpop.f32.mrf.mxu0
        %v1541 = vpop.f32.mrf.mxu0
        %1542 = vdwg.mxu0
        %v1543 = vadd.f32 %v1376, %v1538
        %v1544 = vadd.f32 %v586, %v1543
        %1545 = vadd.xlane.f32.xlu0 %v1544
        %v1546 = vpop.xlane.xlu0 %1545
        %v1547 = vrcp.pop 128.0
        %v1548 = vmul.f32 %v1546, %v1547
        %v1549 = vsub.f32 %v1544, %v1548
        %v1550 = vmul.f32 %v1549, %v1549
        %1551 = vadd.xlane.f32.xlu0 %v1550
        %v1552 = vpop.xlane.xlu0 %1551
        %v1553 = vmul.f32 %v1552, %v1547
        %v1554 = vadd.f32 %v1553, 1e-05
        %v1555 = vrsqrt.pop %v1554
        %v1556 = vmul.f32 %v1549, %v1555
        %v1557 = vlaneseq
        %v1558 = vshrl.u32 %v1557, 7
        %v1559 = vsub.s32 2, %v1558
        %v1560 = vrot.slane %v590, %v1559
        %v1561 = vmul.f32 %v1556, %v1560
        %v1562 = vlaneseq
        %v1563 = vshrl.u32 %v1562, 7
        %v1564 = vsub.s32 3, %v1563
        %v1565 = vrot.slane %v590, %v1564
        %v1566 = vadd.f32 %v1561, %v1565
        %v1567 = vpack.c.bf16 %v1566, %v1566
        %v1568 = vld [vmem:[#allocation11] sm:$0xff]
        %v1569 = vld [vmem:[#allocation11 + $0x8] sm:$0xff]
        %v1570 = vld [vmem:[#allocation11 + $0x10] sm:$0xff]
        %v1571 = vld [vmem:[#allocation11 + $0x18] sm:$0xff]
        %v1572 = vld [vmem:[#allocation11 + $0x20] sm:$0xff]
        %v1573 = vld [vmem:[#allocation11 + $0x28] sm:$0xff]
        %v1574 = vld [vmem:[#allocation11 + $0x30] sm:$0xff]
        %v1575 = vld [vmem:[#allocation11 + $0x38] sm:$0xff]
        %v1576 = vld [vmem:[#allocation11 + $0x40] sm:$0xff]
        %v1577 = vld [vmem:[#allocation11 + $0x48] sm:$0xff]
        %v1578 = vld [vmem:[#allocation11 + $0x50] sm:$0xff]
        %v1579 = vld [vmem:[#allocation11 + $0x58] sm:$0xff]
        %v1580 = vld [vmem:[#allocation11 + $0x60] sm:$0xff]
        %v1581 = vld [vmem:[#allocation11 + $0x68] sm:$0xff]
        %v1582 = vld [vmem:[#allocation11 + $0x70] sm:$0xff]
        %v1583 = vld [vmem:[#allocation11 + $0x78] sm:$0xff]
        %v1584 = vlaneseq
        %v1585 = vshrl.u32 %v1584, 7
        %v1586 = vsub.s32 4, %v1585
        %v1587 = vrot.slane %v590, %v1586
        %v1588 = vlaneseq
        %v1589 = vshrl.u32 %v1588, 7
        %v1590 = vsub.s32 4, %v1589
        %v1591 = vrot.slane %v591, %v1590
        %v1608 = vunpack.c.l.b16 %v1568
        %v1609 = vunpack.c.h.b16 %v1568
        %v1610 = vunpack.c.l.b16 %v1569
        %v1611 = vunpack.c.h.b16 %v1569
        %v1612 = vunpack.c.l.b16 %v1570
        %v1613 = vunpack.c.h.b16 %v1570
        %v1614 = vunpack.c.l.b16 %v1571
        %v1615 = vunpack.c.h.b16 %v1571
        %v1616 = vunpack.c.l.b16 %v1572
        %v1617 = vunpack.c.h.b16 %v1572
        %v1618 = vunpack.c.l.b16 %v1573
        %v1619 = vunpack.c.h.b16 %v1573
        %v1620 = vunpack.c.l.b16 %v1574
        %v1621 = vunpack.c.h.b16 %v1574
        %v1622 = vunpack.c.l.b16 %v1575
        %v1623 = vunpack.c.h.b16 %v1575
        %v1624 = vunpack.c.l.b16 %v1576
        %v1625 = vunpack.c.h.b16 %v1576
        %v1626 = vunpack.c.l.b16 %v1577
        %v1627 = vunpack.c.h.b16 %v1577
        %v1628 = vunpack.c.l.b16 %v1578
        %v1629 = vunpack.c.h.b16 %v1578
        %v1630 = vunpack.c.l.b16 %v1579
        %v1631 = vunpack.c.h.b16 %v1579
        %v1632 = vunpack.c.l.b16 %v1580
        %v1633 = vunpack.c.h.b16 %v1580
        %v1634 = vunpack.c.l.b16 %v1581
        %v1635 = vunpack.c.h.b16 %v1581
        %v1636 = vunpack.c.l.b16 %v1582
        %v1637 = vunpack.c.h.b16 %v1582
        %v1638 = vunpack.c.l.b16 %v1583
        %v1639 = vunpack.c.h.b16 %v1583
        %v1640 = vpack.c.b16 %v1610, %v1608
        %v1641 = vpack.c.b16 %v1611, %v1609
        %v1642 = vpack.c.b16 %v1614, %v1612
        %v1643 = vpack.c.b16 %v1615, %v1613
        %v1644 = vpack.c.b16 %v1618, %v1616
        %v1645 = vpack.c.b16 %v1619, %v1617
        %v1646 = vpack.c.b16 %v1622, %v1620
        %v1647 = vpack.c.b16 %v1623, %v1621
        %v1648 = vpack.c.b16 %v1626, %v1624
        %v1649 = vpack.c.b16 %v1627, %v1625
        %v1650 = vpack.c.b16 %v1630, %v1628
        %v1651 = vpack.c.b16 %v1631, %v1629
        %v1652 = vpack.c.b16 %v1634, %v1632
        %v1653 = vpack.c.b16 %v1635, %v1633
        %v1654 = vpack.c.b16 %v1638, %v1636
        %v1655 = vpack.c.b16 %v1639, %v1637
        %1672 = vmatprep.subr.bf16.mxu0 %v1655
        %1673 = vmatpush1.bf16.msra.mxu0 %v1654
        %1674 = vmatprep.subr.bf16.mxu0 %v1653
        %1675 = vmatpush1.bf16.msra.mxu0 %v1652
        %1676 = vmatprep.subr.bf16.mxu0 %v1651
        %1677 = vmatpush1.bf16.msra.mxu0 %v1650
        %1678 = vmatprep.subr.bf16.mxu0 %v1649
        %1679 = vmatpush1.bf16.msra.mxu0 %v1648
        %1680 = vmatprep.subr.bf16.mxu0 %v1647
        %1681 = vmatpush1.bf16.msra.mxu0 %v1646
        %1682 = vmatprep.subr.bf16.mxu0 %v1645
        %1683 = vmatpush1.bf16.msra.mxu0 %v1644
        %1684 = vmatprep.subr.bf16.mxu0 %v1643
        %1685 = vmatpush1.bf16.msra.mxu0 %v1642
        %1686 = vmatprep.subr.bf16.mxu0 %v1641
        %1687 = vmatpush1.bf16.msra.mxu0 %v1640
        %1688 = vmatprep.subr.bf16.mxu0 0
        %1689 = vmatpush2.bf16.msra.mxu0 0
        %1690 = vmatprep.subr.bf16.mxu0 0
        %1691 = vmatpush2.bf16.msra.mxu0 0
        %1692 = vmatprep.subr.bf16.mxu0 0
        %1693 = vmatpush2.bf16.msra.mxu0 0
        %1694 = vmatprep.subr.bf16.mxu0 0
        %1695 = vmatpush2.bf16.msra.mxu0 0
        %1696 = vmatprep.subr.bf16.mxu0 0
        %1697 = vmatpush2.bf16.msra.mxu0 0
        %1698 = vmatprep.subr.bf16.mxu0 0
        %1699 = vmatpush2.bf16.msra.mxu0 0
        %1700 = vmatprep.subr.bf16.mxu0 0
        %1701 = vmatpush2.bf16.msra.mxu0 0
        %1702 = vmatprep.subr.bf16.mxu0 0
        %1703 = vmatpush2.bf16.msra.mxu0 0
        %1704 = vmatprep.mubr.bf16.mxu0 0
        %1705 = vmatmul.mubr.bf16.gmra.mxu0 %v1567
        %v1706 = vpop.f32.mrf.mxu0
        %v1707 = vadd.f32 %v1587, %v1706
        %v1708 = vpop.f32.mrf.mxu0
        %v1709 = vadd.f32 %v1591, %v1708
        %v1710 = vpop.f32.mrf.mxu0
        %v1711 = vpop.f32.mrf.mxu0
        %1712 = vdwg.mxu0
        %v1713 = vmax.f32 %v1707, 0.0
        %v1714 = vmax.f32 %v1709, 0.0
        %v1715 = vpack.c.bf16 %v1713, %v1713
        %v1716 = vpack.c.bf16 %v1714, %v1714
        %v1717 = vld [vmem:[#allocation13] sm:$0xf]
        %v1718 = vld [vmem:[#allocation13 + $0x4] sm:$0xf]
        %v1719 = vld [vmem:[#allocation13 + $0x8] sm:$0xf]
        %v1720 = vld [vmem:[#allocation13 + $0xc] sm:$0xf]
        %v1721 = vld [vmem:[#allocation13 + $0x10] sm:$0xf]
        %v1722 = vld [vmem:[#allocation13 + $0x14] sm:$0xf]
        %v1723 = vld [vmem:[#allocation13 + $0x18] sm:$0xf]
        %v1724 = vld [vmem:[#allocation13 + $0x1c] sm:$0xf]
        %v1725 = vld [vmem:[#allocation13 + $0x20] sm:$0xf]
        %v1726 = vld [vmem:[#allocation13 + $0x24] sm:$0xf]
        %v1727 = vld [vmem:[#allocation13 + $0x28] sm:$0xf]
        %v1728 = vld [vmem:[#allocation13 + $0x2c] sm:$0xf]
        %v1729 = vld [vmem:[#allocation13 + $0x30] sm:$0xf]
        %v1730 = vld [vmem:[#allocation13 + $0x34] sm:$0xf]
        %v1731 = vld [vmem:[#allocation13 + $0x38] sm:$0xf]
        %v1732 = vld [vmem:[#allocation13 + $0x3c] sm:$0xf]
        %v1733 = vld [vmem:[#allocation13 + $0x40] sm:$0xf]
        %v1734 = vld [vmem:[#allocation13 + $0x44] sm:$0xf]
        %v1735 = vld [vmem:[#allocation13 + $0x48] sm:$0xf]
        %v1736 = vld [vmem:[#allocation13 + $0x4c] sm:$0xf]
        %v1737 = vld [vmem:[#allocation13 + $0x50] sm:$0xf]
        %v1738 = vld [vmem:[#allocation13 + $0x54] sm:$0xf]
        %v1739 = vld [vmem:[#allocation13 + $0x58] sm:$0xf]
        %v1740 = vld [vmem:[#allocation13 + $0x5c] sm:$0xf]
        %v1741 = vld [vmem:[#allocation13 + $0x60] sm:$0xf]
        %v1742 = vld [vmem:[#allocation13 + $0x64] sm:$0xf]
        %v1743 = vld [vmem:[#allocation13 + $0x68] sm:$0xf]
        %v1744 = vld [vmem:[#allocation13 + $0x6c] sm:$0xf]
        %v1745 = vld [vmem:[#allocation13 + $0x70] sm:$0xf]
        %v1746 = vld [vmem:[#allocation13 + $0x74] sm:$0xf]
        %v1747 = vld [vmem:[#allocation13 + $0x78] sm:$0xf]
        %v1748 = vld [vmem:[#allocation13 + $0x7c] sm:$0xf]
        %v1749 = vlaneseq
        %v1750 = vshrl.u32 %v1749, 7
        %v1751 = vsub.s32 5, %v1750
        %v1752 = vrot.slane %v590, %v1751
        %v1785 = vunpack.c.l.b16 %v1717
        %v1786 = vunpack.c.l.b16 %v1718
        %v1787 = vunpack.c.l.b16 %v1719
        %v1788 = vunpack.c.l.b16 %v1720
        %v1789 = vunpack.c.l.b16 %v1721
        %v1790 = vunpack.c.l.b16 %v1722
        %v1791 = vunpack.c.l.b16 %v1723
        %v1792 = vunpack.c.l.b16 %v1724
        %v1793 = vunpack.c.l.b16 %v1725
        %v1794 = vunpack.c.l.b16 %v1726
        %v1795 = vunpack.c.l.b16 %v1727
        %v1796 = vunpack.c.l.b16 %v1728
        %v1797 = vunpack.c.l.b16 %v1729
        %v1798 = vunpack.c.l.b16 %v1730
        %v1799 = vunpack.c.l.b16 %v1731
        %v1800 = vunpack.c.l.b16 %v1732
        %v1801 = vunpack.c.l.b16 %v1733
        %v1802 = vunpack.c.l.b16 %v1734
        %v1803 = vunpack.c.l.b16 %v1735
        %v1804 = vunpack.c.l.b16 %v1736
        %v1805 = vunpack.c.l.b16 %v1737
        %v1806 = vunpack.c.l.b16 %v1738
        %v1807 = vunpack.c.l.b16 %v1739
        %v1808 = vunpack.c.l.b16 %v1740
        %v1809 = vunpack.c.l.b16 %v1741
        %v1810 = vunpack.c.l.b16 %v1742
        %v1811 = vunpack.c.l.b16 %v1743
        %v1812 = vunpack.c.l.b16 %v1744
        %v1813 = vunpack.c.l.b16 %v1745
        %v1814 = vunpack.c.l.b16 %v1746
        %v1815 = vunpack.c.l.b16 %v1747
        %v1816 = vunpack.c.l.b16 %v1748
        %v1817 = vpack.c.b16 %v1786, %v1785
        %v1818 = vpack.c.b16 %v1788, %v1787
        %v1819 = vpack.c.b16 %v1790, %v1789
        %v1820 = vpack.c.b16 %v1792, %v1791
        %v1821 = vpack.c.b16 %v1794, %v1793
        %v1822 = vpack.c.b16 %v1796, %v1795
        %v1823 = vpack.c.b16 %v1798, %v1797
        %v1824 = vpack.c.b16 %v1800, %v1799
        %v1825 = vpack.c.b16 %v1802, %v1801
        %v1826 = vpack.c.b16 %v1804, %v1803
        %v1827 = vpack.c.b16 %v1806, %v1805
        %v1828 = vpack.c.b16 %v1808, %v1807
        %v1829 = vpack.c.b16 %v1810, %v1809
        %v1830 = vpack.c.b16 %v1812, %v1811
        %v1831 = vpack.c.b16 %v1814, %v1813
        %v1832 = vpack.c.b16 %v1816, %v1815
        %1849 = vmatprep.subr.bf16.mxu0 0
        %1850 = vmatpush1.bf16.msra.mxu0 %v1824
        %1851 = vmatprep.subr.bf16.mxu0 0
        %1852 = vmatpush1.bf16.msra.mxu0 %v1823
        %1853 = vmatprep.subr.bf16.mxu0 0
        %1854 = vmatpush1.bf16.msra.mxu0 %v1822
        %1855 = vmatprep.subr.bf16.mxu0 0
        %1856 = vmatpush1.bf16.msra.mxu0 %v1821
        %1857 = vmatprep.subr.bf16.mxu0 0
        %1858 = vmatpush1.bf16.msra.mxu0 %v1820
        %1859 = vmatprep.subr.bf16.mxu0 0
        %1860 = vmatpush1.bf16.msra.mxu0 %v1819
        %1861 = vmatprep.subr.bf16.mxu0 0
        %1862 = vmatpush1.bf16.msra.mxu0 %v1818
        %1863 = vmatprep.subr.bf16.mxu0 0
        %1864 = vmatpush1.bf16.msra.mxu0 %v1817
        %1865 = vmatprep.subr.bf16.mxu0 0
        %1866 = vmatpush2.bf16.msra.mxu0 %v1832
        %1867 = vmatprep.subr.bf16.mxu0 0
        %1868 = vmatpush2.bf16.msra.mxu0 %v1831
        %1869 = vmatprep.subr.bf16.mxu0 0
        %1870 = vmatpush2.bf16.msra.mxu0 %v1830
        %1871 = vmatprep.subr.bf16.mxu0 0
        %1872 = vmatpush2.bf16.msra.mxu0 %v1829
        %1873 = vmatprep.subr.bf16.mxu0 0
        %1874 = vmatpush2.bf16.msra.mxu0 %v1828
        %1875 = vmatprep.subr.bf16.mxu0 0
        %1876 = vmatpush2.bf16.msra.mxu0 %v1827
        %1877 = vmatprep.subr.bf16.mxu0 0
        %1878 = vmatpush2.bf16.msra.mxu0 %v1826
        %1879 = vmatprep.subr.bf16.mxu0 0
        %1880 = vmatpush2.bf16.msra.mxu0 %v1825
        %1881 = vmatprep.mubr.bf16.mxu0 %v1716
        %1882 = vmatmul.mubr.bf16.gmra.mxu0 %v1715
        %v1883 = vpop.f32.mrf.mxu0
        %v1884 = vadd.f32 %v1752, %v1883
        %v1885 = vpop.f32.mrf.mxu0
        %v1886 = vpop.f32.mrf.mxu0
        %v1887 = vpop.f32.mrf.mxu0
        %1888 = vdwg.mxu0
        %v1889 = vadd.f32 %v1566, %v1884
        %1890 = vadd.xlane.f32.xlu0 %v1889
        %v1891 = vpop.xlane.xlu0 %1890
        %v1892 = vmul.f32 %v1891, %v1547
        %v1893 = vsub.f32 %v1889, %v1892
        %v1894 = vmul.f32 %v1893, %v1893
        %1895 = vadd.xlane.f32.xlu0 %v1894
        %v1896 = vpop.xlane.xlu0 %1895
        %v1897 = vmul.f32 %v1896, %v1547
        %v1898 = vadd.f32 %v1897, 1e-05
        %v1899 = vrsqrt.pop %v1898
        %v1900 = vmul.f32 %v1893, %v1899
        %v1901 = vlaneseq
        %v1902 = vshrl.u32 %v1901, 7
        %v1903 = vsub.s32 6, %v1902
        %v1904 = vrot.slane %v590, %v1903
        %v1905 = vmul.f32 %v1900, %v1904
        %v1906 = vlaneseq
        %v1907 = vshrl.u32 %v1906, 7
        %v1908 = vsub.s32 7, %v1907
        %v1909 = vrot.slane %v590, %v1908
        %v1910 = vadd.f32 %v1905, %v1909
        %s1911 = scalar_lea.vmem [#allocation14], 24
        %v1912 = vld [vmem:[%s1911] sm:$0xff]
        %v1913 = vld [vmem:[%s1911 + $0x8] sm:$0xff]
        %v1914 = vld [vmem:[%s1911 + $0x10] sm:$0xff]
        %v1915 = vpack.c.bf16 %v1910, %v1910
        %s1916 = scalar_lea.vmem [#allocation8], 192
        %v1917 = vld [vmem:[%s1916] sm:$0xff]
        %v1918 = vld [vmem:[%s1916 + $0x8] sm:$0xf]
        %v1919 = vld [vmem:[%s1916 + $0xc] sm:$0xff]
        %v1920 = vld [vmem:[%s1916 + $0x14] sm:$0xf]
        %v1921 = vld [vmem:[%s1916 + $0x18] sm:$0xff]
        %v1922 = vld [vmem:[%s1916 + $0x20] sm:$0xf]
        %v1923 = vld [vmem:[%s1916 + $0x24] sm:$0xff]
        %v1924 = vld [vmem:[%s1916 + $0x2c] sm:$0xf]
        %v1925 = vld [vmem:[%s1916 + $0x30] sm:$0xff]
        %v1926 = vld [vmem:[%s1916 + $0x38] sm:$0xf]
        %v1927 = vld [vmem:[%s1916 + $0x3c] sm:$0xff]
        %v1928 = vld [vmem:[%s1916 + $0x44] sm:$0xf]
        %v1929 = vld [vmem:[%s1916 + $0x48] sm:$0xff]
        %v1930 = vld [vmem:[%s1916 + $0x50] sm:$0xf]
        %v1931 = vld [vmem:[%s1916 + $0x54] sm:$0xff]
        %v1932 = vld [vmem:[%s1916 + $0x5c] sm:$0xf]
        %v1933 = vld [vmem:[%s1916 + $0x60] sm:$0xff]
        %v1934 = vld [vmem:[%s1916 + $0x68] sm:$0xf]
        %v1935 = vld [vmem:[%s1916 + $0x6c] sm:$0xff]
        %v1936 = vld [vmem:[%s1916 + $0x74] sm:$0xf]
        %v1937 = vld [vmem:[%s1916 + $0x78] sm:$0xff]
        %v1938 = vld [vmem:[%s1916 + $0x80] sm:$0xf]
        %v1939 = vld [vmem:[%s1916 + $0x84] sm:$0xff]
        %v1940 = vld [vmem:[%s1916 + $0x8c] sm:$0xf]
        %v1941 = vld [vmem:[%s1916 + $0x90] sm:$0xff]
        %v1942 = vld [vmem:[%s1916 + $0x98] sm:$0xf]
        %v1943 = vld [vmem:[%s1916 + $0x9c] sm:$0xff]
        %v1944 = vld [vmem:[%s1916 + $0xa4] sm:$0xf]
        %v1945 = vld [vmem:[%s1916 + $0xa8] sm:$0xff]
        %v1946 = vld [vmem:[%s1916 + $0xb0] sm:$0xf]
        %v1947 = vld [vmem:[%s1916 + $0xb4] sm:$0xff]
        %v1948 = vld [vmem:[%s1916 + $0xbc] sm:$0xf]
        %v1949 = vlaneseq
        %v1950 = vshrl.u32 %v1949, 7
        %v1951 = vsub.s32 0, %v1950
        %v1952 = vrot.slane %v1912, %v1951
        %v1953 = vlaneseq
        %v1954 = vshrl.u32 %v1953, 7
        %v1955 = vsub.s32 0, %v1954
        %v1956 = vrot.slane %v1913, %v1955
        %v1957 = vlaneseq
        %v1958 = vshrl.u32 %v1957, 7
        %v1959 = vsub.s32 0, %v1958
        %v1960 = vrot.slane %v1914, %v1959
        %v1993 = vunpack.c.l.b16 %v1917
        %v1994 = vunpack.c.h.b16 %v1917
        %v1995 = vunpack.c.l.b16 %v1918
        %v1996 = vunpack.c.l.b16 %v1919
        %v1997 = vunpack.c.h.b16 %v1919
        %v1998 = vunpack.c.l.b16 %v1920
        %v1999 = vunpack.c.l.b16 %v1921
        %v2000 = vunpack.c.h.b16 %v1921
        %v2001 = vunpack.c.l.b16 %v1922
        %v2002 = vunpack.c.l.b16 %v1923
        %v2003 = vunpack.c.h.b16 %v1923
        %v2004 = vunpack.c.l.b16 %v1924
        %v2005 = vunpack.c.l.b16 %v1925
        %v2006 = vunpack.c.h.b16 %v1925
        %v2007 = vunpack.c.l.b16 %v1926
        %v2008 = vunpack.c.l.b16 %v1927
        %v2009 = vunpack.c.h.b16 %v1927
        %v2010 = vunpack.c.l.b16 %v1928
        %v2011 = vunpack.c.l.b16 %v1929
        %v2012 = vunpack.c.h.b16 %v1929
        %v2013 = vunpack.c.l.b16 %v1930
        %v2014 = vunpack.c.l.b16 %v1931
        %v2015 = vunpack.c.h.b16 %v1931
        %v2016 = vunpack.c.l.b16 %v1932
        %v2017 = vunpack.c.l.b16 %v1933
        %v2018 = vunpack.c.h.b16 %v1933
        %v2019 = vunpack.c.l.b16 %v1934
        %v2020 = vunpack.c.l.b16 %v1935
        %v2021 = vunpack.c.h.b16 %v1935
        %v2022 = vunpack.c.l.b16 %v1936
        %v2023 = vunpack.c.l.b16 %v1937
        %v2024 = vunpack.c.h.b16 %v1937
        %v2025 = vunpack.c.l.b16 %v1938
        %v2026 = vunpack.c.l.b16 %v1939
        %v2027 = vunpack.c.h.b16 %v1939
        %v2028 = vunpack.c.l.b16 %v1940
        %v2029 = vunpack.c.l.b16 %v1941
        %v2030 = vunpack.c.h.b16 %v1941
        %v2031 = vunpack.c.l.b16 %v1942
        %v2032 = vunpack.c.l.b16 %v1943
        %v2033 = vunpack.c.h.b16 %v1943
        %v2034 = vunpack.c.l.b16 %v1944
        %v2035 = vunpack.c.l.b16 %v1945
        %v2036 = vunpack.c.h.b16 %v1945
        %v2037 = vunpack.c.l.b16 %v1946
        %v2038 = vunpack.c.l.b16 %v1947
        %v2039 = vunpack.c.h.b16 %v1947
        %v2040 = vunpack.c.l.b16 %v1948
        %v2041 = vpack.c.b16 %v1996, %v1993
        %v2042 = vpack.c.b16 %v1997, %v1994
        %v2043 = vpack.c.b16 %v1998, %v1995
        %v2044 = vpack.c.b16 %v2002, %v1999
        %v2045 = vpack.c.b16 %v2003, %v2000
        %v2046 = vpack.c.b16 %v2004, %v2001
        %v2047 = vpack.c.b16 %v2008, %v2005
        %v2048 = vpack.c.b16 %v2009, %v2006
        %v2049 = vpack.c.b16 %v2010, %v2007
        %v2050 = vpack.c.b16 %v2014, %v2011
        %v2051 = vpack.c.b16 %v2015, %v2012
        %v2052 = vpack.c.b16 %v2016, %v2013
        %v2053 = vpack.c.b16 %v2020, %v2017
        %v2054 = vpack.c.b16 %v2021, %v2018
        %v2055 = vpack.c.b16 %v2022, %v2019
        %v2056 = vpack.c.b16 %v2026, %v2023
        %v2057 = vpack.c.b16 %v2027, %v2024
        %v2058 = vpack.c.b16 %v2028, %v2025
        %v2059 = vpack.c.b16 %v2032, %v2029
        %v2060 = vpack.c.b16 %v2033, %v2030
        %v2061 = vpack.c.b16 %v2034, %v2031
        %v2062 = vpack.c.b16 %v2038, %v2035
        %v2063 = vpack.c.b16 %v2039, %v2036
        %v2064 = vpack.c.b16 %v2040, %v2037
        %2089 = vmatprep.subr.bf16.mxu0 %v2063
        %2090 = vmatpush1.bf16.msra.mxu0 %v2062
        %2091 = vmatprep.subr.bf16.mxu0 %v2060
        %2092 = vmatpush1.bf16.msra.mxu0 %v2059
        %2093 = vmatprep.subr.bf16.mxu0 %v2057
        %2094 = vmatpush1.bf16.msra.mxu0 %v2056
        %2095 = vmatprep.subr.bf16.mxu0 %v2054
        %2096 = vmatpush1.bf16.msra.mxu0 %v2053
        %2097 = vmatprep.subr.bf16.mxu0 %v2051
        %2098 = vmatpush1.bf16.msra.mxu0 %v2050
        %2099 = vmatprep.subr.bf16.mxu0 %v2048
        %2100 = vmatpush1.bf16.msra.mxu0 %v2047
        %2101 = vmatprep.subr.bf16.mxu0 %v2045
        %2102 = vmatpush1.bf16.msra.mxu0 %v2044
        %2103 = vmatprep.subr.bf16.mxu0 %v2042
        %2104 = vmatpush1.bf16.msra.mxu0 %v2041
        %2105 = vmatprep.subr.bf16.mxu0 0
        %2106 = vmatpush2.bf16.msra.mxu0 0
        %2107 = vmatprep.subr.bf16.mxu0 0
        %2108 = vmatpush2.bf16.msra.mxu0 0
        %2109 = vmatprep.subr.bf16.mxu0 0
        %2110 = vmatpush2.bf16.msra.mxu0 0
        %2111 = vmatprep.subr.bf16.mxu0 0
        %2112 = vmatpush2.bf16.msra.mxu0 0
        %2113 = vmatprep.subr.bf16.mxu0 0
        %2114 = vmatpush2.bf16.msra.mxu0 0
        %2115 = vmatprep.subr.bf16.mxu0 0
        %2116 = vmatpush2.bf16.msra.mxu0 0
        %2117 = vmatprep.subr.bf16.mxu0 0
        %2118 = vmatpush2.bf16.msra.mxu0 0
        %2119 = vmatprep.subr.bf16.mxu0 0
        %2120 = vmatpush2.bf16.msra.mxu0 0
        %2121 = vmatprep.mubr.bf16.mxu0 0
        %2122 = vmatmul.mubr.bf16.gmra.mxu0 %v1915
        %v2123 = vpop.f32.mrf.mxu0
        %v2124 = vadd.f32 %v1952, %v2123
        %v2125 = vpop.f32.mrf.mxu0
        %v2126 = vadd.f32 %v1956, %v2125
        %v2127 = vpop.f32.mrf.mxu0
        %v2128 = vpop.f32.mrf.mxu0
        %2129 = vdwg.mxu0
        %2130 = vmatprep.subr.bf16.mxu0 0
        %2131 = vmatpush1.bf16.msra.mxu0 %v2064
        %2132 = vmatprep.subr.bf16.mxu0 0
        %2133 = vmatpush1.bf16.msra.mxu0 %v2061
        %2134 = vmatprep.subr.bf16.mxu0 0
        %2135 = vmatpush1.bf16.msra.mxu0 %v2058
        %2136 = vmatprep.subr.bf16.mxu0 0
        %2137 = vmatpush1.bf16.msra.mxu0 %v2055
        %2138 = vmatprep.subr.bf16.mxu0 0
        %2139 = vmatpush1.bf16.msra.mxu0 %v2052
        %2140 = vmatprep.subr.bf16.mxu0 0
        %2141 = vmatpush1.bf16.msra.mxu0 %v2049
        %2142 = vmatprep.subr.bf16.mxu0 0
        %2143 = vmatpush1.bf16.msra.mxu0 %v2046
        %2144 = vmatprep.subr.bf16.mxu0 0
        %2145 = vmatpush1.bf16.msra.mxu0 %v2043
        %2146 = vmatprep.subr.bf16.mxu0 0
        %2147 = vmatpush2.bf16.msra.mxu0 0
        %2148 = vmatprep.subr.bf16.mxu0 0
        %2149 = vmatpush2.bf16.msra.mxu0 0
        %2150 = vmatprep.subr.bf16.mxu0 0
        %2151 = vmatpush2.bf16.msra.mxu0 0
        %2152 = vmatprep.subr.bf16.mxu0 0
        %2153 = vmatpush2.bf16.msra.mxu0 0
        %2154 = vmatprep.subr.bf16.mxu0 0
        %2155 = vmatpush2.bf16.msra.mxu0 0
        %2156 = vmatprep.subr.bf16.mxu0 0
        %2157 = vmatpush2.bf16.msra.mxu0 0
        %2158 = vmatprep.subr.bf16.mxu0 0
        %2159 = vmatpush2.bf16.msra.mxu0 0
        %2160 = vmatprep.subr.bf16.mxu0 0
        %2161 = vmatpush2.bf16.msra.mxu0 0
        %2162 = vmatprep.mubr.bf16.mxu0 0
        %2163 = vmatmul.mubr.bf16.gmra.mxu0 %v1915
        %v2164 = vpop.f32.mrf.mxu0
        %v2165 = vadd.f32 %v1960, %v2164
        %v2166 = vpop.f32.mrf.mxu0
        %v2167 = vpop.f32.mrf.mxu0
        %v2168 = vpop.f32.mrf.mxu0
        %2169 = vdwg.mxu0
        %v2170 = vmul.f32 %v2124, 0.17677669
        %v2171 = vpack.c.bf16 %v2170, %v2170
        %v2172 = vpack.c.bf16 %v2126, %v2126
        %v2173 = vpack.c.bf16 %v2165, %v2165
        %s2174 = scalar_lea.vmem [#allocation10], 64
        %v2175 = vld [vmem:[%s2174] sm:$0xf]
        %v2176 = vld [vmem:[%s2174 + $0x4] sm:$0xf]
        %v2177 = vld [vmem:[%s2174 + $0x8] sm:$0xf]
        %v2178 = vld [vmem:[%s2174 + $0xc] sm:$0xf]
        %v2179 = vld [vmem:[%s2174 + $0x10] sm:$0xf]
        %v2180 = vld [vmem:[%s2174 + $0x14] sm:$0xf]
        %v2181 = vld [vmem:[%s2174 + $0x18] sm:$0xf]
        %v2182 = vld [vmem:[%s2174 + $0x1c] sm:$0xf]
        %v2183 = vld [vmem:[%s2174 + $0x20] sm:$0xf]
        %v2184 = vld [vmem:[%s2174 + $0x24] sm:$0xf]
        %v2185 = vld [vmem:[%s2174 + $0x28] sm:$0xf]
        %v2186 = vld [vmem:[%s2174 + $0x2c] sm:$0xf]
        %v2187 = vld [vmem:[%s2174 + $0x30] sm:$0xf]
        %v2188 = vld [vmem:[%s2174 + $0x34] sm:$0xf]
        %v2189 = vld [vmem:[%s2174 + $0x38] sm:$0xf]
        %v2190 = vld [vmem:[%s2174 + $0x3c] sm:$0xf]
        %v2192 = vsel %vm535, %v2171, 0
        %v2195 = vsel %vm535, %v2172, 0
        %2197 = vmatprep.subr.bf16.mxu0 0
        %2198 = vmatpush1.bf16.xpose.msra.mxu0 0
        %2199 = vmatprep.subr.bf16.mxu0 0
        %2200 = vmatpush1.bf16.xpose.msra.mxu0 0
        %2201 = vmatprep.subr.bf16.mxu0 0
        %2202 = vmatpush1.bf16.xpose.msra.mxu0 0
        %2203 = vmatprep.subr.bf16.mxu0 0
        %2204 = vmatpush1.bf16.xpose.msra.mxu0 0
        %2205 = vmatprep.subr.bf16.mxu0 0
        %2206 = vmatpush1.bf16.xpose.msra.mxu0 0
        %2207 = vmatprep.subr.bf16.mxu0 0
        %2208 = vmatpush1.bf16.xpose.msra.mxu0 0
        %2209 = vmatprep.subr.bf16.mxu0 0
        %2210 = vmatpush1.bf16.xpose.msra.mxu0 0
        %2211 = vmatprep.subr.bf16.mxu0 0
        %2212 = vmatpush1.bf16.xpose.msra.mxu0 %v2195
        %2213 = vmatprep.subr.bf16.mxu0 0
        %2214 = vmatpush2.bf16.xpose.msra.mxu0 0
        %2215 = vmatprep.subr.bf16.mxu0 0
        %2216 = vmatpush2.bf16.xpose.msra.mxu0 0
        %2217 = vmatprep.subr.bf16.mxu0 0
        %2218 = vmatpush2.bf16.xpose.msra.mxu0 0
        %2219 = vmatprep.subr.bf16.mxu0 0
        %2220 = vmatpush2.bf16.xpose.msra.mxu0 0
        %2221 = vmatprep.subr.bf16.mxu0 0
        %2222 = vmatpush2.bf16.xpose.msra.mxu0 0
        %2223 = vmatprep.subr.bf16.mxu0 0
        %2224 = vmatpush2.bf16.xpose.msra.mxu0 0
        %2225 = vmatprep.subr.bf16.mxu0 0
        %2226 = vmatpush2.bf16.xpose.msra.mxu0 0
        %2227 = vmatprep.subr.bf16.mxu0 0
        %2228 = vmatpush2.bf16.xpose.msra.mxu0 0
        %2229 = vmatprep.mubr.bf16.mxu0 0
        %2230 = vmatmul.mubr.bf16.gmra.mxu0 %v2192
        %v2231 = vpop.f32.mrf.mxu0
        %v2232 = vadd.f32 %v871, %v2231
        %v2233 = vpop.f32.mrf.mxu0
        %v2234 = vpop.f32.mrf.mxu0
        %v2235 = vpop.f32.mrf.mxu0
        %2236 = vdwg.mxu0
        %v2237 = vsel %vm919, %v2232, -inf
        %2238 = vmax.xlane.f32.xlu0 %v2237
        %v2239 = vpop.xlane.xlu0 %2238
        %v2240 = vsub.f32 %v2232, %v2239
        %v2241 = vmul.f32 %v2240, 1.442695
        %v2242 = vpow.pop %v2241
        %v2243 = vsel %vm919, %v2242, 0.0
        %2244 = vadd.xlane.f32.xlu0 %v2243
        %v2245 = vpop.xlane.xlu0 %2244
        %v2246 = vrcp.pop %v2245
        %v2247 = vmul.f32 %v2242, %v2246
        %v2248 = vpack.c.bf16 %v2247, %v2247
        %v2250 = vsel %vm919, %v2248, 0
        %v2253 = vsel %vm935, %v2173, 0
        %2255 = vmatprep.subr.bf16.mxu0 0
        %2256 = vmatpush1.bf16.msra.mxu0 0
        %2257 = vmatprep.subr.bf16.mxu0 0
        %2258 = vmatpush1.bf16.msra.mxu0 0
        %2259 = vmatprep.subr.bf16.mxu0 0
        %2260 = vmatpush1.bf16.msra.mxu0 0
        %2261 = vmatprep.subr.bf16.mxu0 0
        %2262 = vmatpush1.bf16.msra.mxu0 0
        %2263 = vmatprep.subr.bf16.mxu0 0
        %2264 = vmatpush1.bf16.msra.mxu0 0
        %2265 = vmatprep.subr.bf16.mxu0 0
        %2266 = vmatpush1.bf16.msra.mxu0 0
        %2267 = vmatprep.subr.bf16.mxu0 0
        %2268 = vmatpush1.bf16.msra.mxu0 0
        %2269 = vmatprep.subr.bf16.mxu0 0
        %2270 = vmatpush1.bf16.msra.mxu0 %v2253
        %2271 = vmatprep.subr.bf16.mxu0 0
        %2272 = vmatpush2.bf16.msra.mxu0 0
        %2273 = vmatprep.subr.bf16.mxu0 0
        %2274 = vmatpush2.bf16.msra.mxu0 0
        %2275 = vmatprep.subr.bf16.mxu0 0
        %2276 = vmatpush2.bf16.msra.mxu0 0
        %2277 = vmatprep.subr.bf16.mxu0 0
        %2278 = vmatpush2.bf16.msra.mxu0 0
        %2279 = vmatprep.subr.bf16.mxu0 0
        %2280 = vmatpush2.bf16.msra.mxu0 0
        %2281 = vmatprep.subr.bf16.mxu0 0
        %2282 = vmatpush2.bf16.msra.mxu0 0
        %2283 = vmatprep.subr.bf16.mxu0 0
        %2284 = vmatpush2.bf16.msra.mxu0 0
        %2285 = vmatprep.subr.bf16.mxu0 0
        %2286 = vmatpush2.bf16.msra.mxu0 0
        %2287 = vmatprep.mubr.bf16.mxu0 0
        %2288 = vmatmul.mubr.bf16.gmra.mxu0 %v2250
        %v2289 = vpop.f32.mrf.mxu0
        %v2290 = vadd.f32 0.0, %v2289
        %v2291 = vpop.f32.mrf.mxu0
        %v2292 = vpop.f32.mrf.mxu0
        %v2293 = vpop.f32.mrf.mxu0
        %2294 = vdwg.mxu0
        %v2295 = vpack.c.bf16 %v2290, %v2290
        %v2300 = vunpack.c.l.b16 %v2175
        %v2301 = vunpack.c.l.b16 %v2176
        %v2302 = vunpack.c.l.b16 %v2177
        %v2303 = vunpack.c.l.b16 %v2178
        %v2304 = vpack.c.b16 %v2301, %v2300
        %v2305 = vpack.c.b16 %v2303, %v2302
        %v2309 = vsel %vm535, %v2295, 0
        %2311 = vmatprep.subr.bf16.mxu0 0
        %2312 = vmatpush1.bf16.msra.mxu0 0
        %2313 = vmatprep.subr.bf16.mxu0 0
        %2314 = vmatpush1.bf16.msra.mxu0 0
        %2315 = vmatprep.subr.bf16.mxu0 0
        %2316 = vmatpush1.bf16.msra.mxu0 0
        %2317 = vmatprep.subr.bf16.mxu0 0
        %2318 = vmatpush1.bf16.msra.mxu0 0
        %2319 = vmatprep.subr.bf16.mxu0 0
        %2320 = vmatpush1.bf16.msra.mxu0 0
        %2321 = vmatprep.subr.bf16.mxu0 0
        %2322 = vmatpush1.bf16.msra.mxu0 0
        %2323 = vmatprep.subr.bf16.mxu0 0
        %2324 = vmatpush1.bf16.msra.mxu0 %v2305
        %2325 = vmatprep.subr.bf16.mxu0 0
        %2326 = vmatpush1.bf16.msra.mxu0 %v2304
        %2327 = vmatprep.subr.bf16.mxu0 0
        %2328 = vmatpush2.bf16.msra.mxu0 0
        %2329 = vmatprep.subr.bf16.mxu0 0
        %2330 = vmatpush2.bf16.msra.mxu0 0
        %2331 = vmatprep.subr.bf16.mxu0 0
        %2332 = vmatpush2.bf16.msra.mxu0 0
        %2333 = vmatprep.subr.bf16.mxu0 0
        %2334 = vmatpush2.bf16.msra.mxu0 0
        %2335 = vmatprep.subr.bf16.mxu0 0
        %2336 = vmatpush2.bf16.msra.mxu0 0
        %2337 = vmatprep.subr.bf16.mxu0 0
        %2338 = vmatpush2.bf16.msra.mxu0 0
        %2339 = vmatprep.subr.bf16.mxu0 0
        %2340 = vmatpush2.bf16.msra.mxu0 0
        %2341 = vmatprep.subr.bf16.mxu0 0
        %2342 = vmatpush2.bf16.msra.mxu0 0
        %2343 = vmatprep.mubr.bf16.mxu0 0
        %2344 = vmatmul.mubr.bf16.gmra.mxu0 %v2309
        %v2345 = vpop.f32.mrf.mxu0
        %v2346 = vadd.f32 0.0, %v2345
        %v2347 = vpop.f32.mrf.mxu0
        %v2348 = vpop.f32.mrf.mxu0
        %v2349 = vpop.f32.mrf.mxu0
        %2350 = vdwg.mxu0
        %v2351 = vlaneseq
        %v2352 = vshrl.u32 %v2351, 7
        %v2353 = vsub.s32 1, %v2352
        %v2354 = vrot.slane %v1912, %v2353
        %v2355 = vadd.f32 %v2354, %v2346
        %2357 = vrot.lane.b32.xlu0 %v2171, 96
        %v2358 = vpop.permute.xlu0 %2357
        %2360 = vrot.lane.b32.xlu0 %v2172, 96
        %v2361 = vpop.permute.xlu0 %2360
        %v2363 = vsel %vm535, %v2358, 0
        %v2366 = vsel %vm535, %v2361, 0
        %2368 = vmatprep.subr.bf16.mxu0 0
        %2369 = vmatpush1.bf16.xpose.msra.mxu0 0
        %2370 = vmatprep.subr.bf16.mxu0 0
        %2371 = vmatpush1.bf16.xpose.msra.mxu0 0
        %2372 = vmatprep.subr.bf16.mxu0 0
        %2373 = vmatpush1.bf16.xpose.msra.mxu0 0
        %2374 = vmatprep.subr.bf16.mxu0 0
        %2375 = vmatpush1.bf16.xpose.msra.mxu0 0
        %2376 = vmatprep.subr.bf16.mxu0 0
        %2377 = vmatpush1.bf16.xpose.msra.mxu0 0
        %2378 = vmatprep.subr.bf16.mxu0 0
        %2379 = vmatpush1.bf16.xpose.msra.mxu0 0
        %2380 = vmatprep.subr.bf16.mxu0 0
        %2381 = vmatpush1.bf16.xpose.msra.mxu0 0
        %2382 = vmatprep.subr.bf16.mxu0 0
        %2383 = vmatpush1.bf16.xpose.msra.mxu0 %v2366
        %2384 = vmatprep.subr.bf16.mxu0 0
        %2385 = vmatpush2.bf16.xpose.msra.mxu0 0
        %2386 = vmatprep.subr.bf16.mxu0 0
        %2387 = vmatpush2.bf16.xpose.msra.mxu0 0
        %2388 = vmatprep.subr.bf16.mxu0 0
        %2389 = vmatpush2.bf16.xpose.msra.mxu0 0
        %2390 = vmatprep.subr.bf16.mxu0 0
        %2391 = vmatpush2.bf16.xpose.msra.mxu0 0
        %2392 = vmatprep.subr.bf16.mxu0 0
        %2393 = vmatpush2.bf16.xpose.msra.mxu0 0
        %2394 = vmatprep.subr.bf16.mxu0 0
        %2395 = vmatpush2.bf16.xpose.msra.mxu0 0
        %2396 = vmatprep.subr.bf16.mxu0 0
        %2397 = vmatpush2.bf16.xpose.msra.mxu0 0
        %2398 = vmatprep.subr.bf16.mxu0 0
        %2399 = vmatpush2.bf16.xpose.msra.mxu0 0
        %2400 = vmatprep.mubr.bf16.mxu0 0
        %2401 = vmatmul.mubr.bf16.gmra.mxu0 %v2363
        %v2402 = vpop.f32.mrf.mxu0
        %v2403 = vadd.f32 %v871, %v2402
        %v2404 = vpop.f32.mrf.mxu0
        %v2405 = vpop.f32.mrf.mxu0
        %v2406 = vpop.f32.mrf.mxu0
        %2407 = vdwg.mxu0
        %v2408 = vsel %vm919, %v2403, -inf
        %2409 = vmax.xlane.f32.xlu0 %v2408
        %v2410 = vpop.xlane.xlu0 %2409
        %v2411 = vsub.f32 %v2403, %v2410
        %v2412 = vmul.f32 %v2411, 1.442695
        %v2413 = vpow.pop %v2412
        %v2414 = vsel %vm919, %v2413, 0.0
        %2415 = vadd.xlane.f32.xlu0 %v2414
        %v2416 = vpop.xlane.xlu0 %2415
        %v2417 = vrcp.pop %v2416
        %v2418 = vmul.f32 %v2413, %v2417
        %v2419 = vpack.c.bf16 %v2418, %v2418
        %2421 = vrot.lane.b32.xlu0 %v2173, 96
        %v2422 = vpop.permute.xlu0 %2421
        %v2424 = vsel %vm919, %v2419, 0
        %v2427 = vsel %vm935, %v2422, 0
        %2429 = vmatprep.subr.bf16.mxu0 0
        %2430 = vmatpush1.bf16.msra.mxu0 0
        %2431 = vmatprep.subr.bf16.mxu0 0
        %2432 = vmatpush1.bf16.msra.mxu0 0
        %2433 = vmatprep.subr.bf16.mxu0 0
        %2434 = vmatpush1.bf16.msra.mxu0 0
        %2435 = vmatprep.subr.bf16.mxu0 0
        %2436 = vmatpush1.bf16.msra.mxu0 0
        %2437 = vmatprep.subr.bf16.mxu0 0
        %2438 = vmatpush1.bf16.msra.mxu0 0
        %2439 = vmatprep.subr.bf16.mxu0 0
        %2440 = vmatpush1.bf16.msra.mxu0 0
        %2441 = vmatprep.subr.bf16.mxu0 0
        %2442 = vmatpush1.bf16.msra.mxu0 0
        %2443 = vmatprep.subr.bf16.mxu0 0
        %2444 = vmatpush1.bf16.msra.mxu0 %v2427
        %2445 = vmatprep.subr.bf16.mxu0 0
        %2446 = vmatpush2.bf16.msra.mxu0 0
        %2447 = vmatprep.subr.bf16.mxu0 0
        %2448 = vmatpush2.bf16.msra.mxu0 0
        %2449 = vmatprep.subr.bf16.mxu0 0
        %2450 = vmatpush2.bf16.msra.mxu0 0
        %2451 = vmatprep.subr.bf16.mxu0 0
        %2452 = vmatpush2.bf16.msra.mxu0 0
        %2453 = vmatprep.subr.bf16.mxu0 0
        %2454 = vmatpush2.bf16.msra.mxu0 0
        %2455 = vmatprep.subr.bf16.mxu0 0
        %2456 = vmatpush2.bf16.msra.mxu0 0
        %2457 = vmatprep.subr.bf16.mxu0 0
        %2458 = vmatpush2.bf16.msra.mxu0 0
        %2459 = vmatprep.subr.bf16.mxu0 0
        %2460 = vmatpush2.bf16.msra.mxu0 0
        %2461 = vmatprep.mubr.bf16.mxu0 0
        %2462 = vmatmul.mubr.bf16.gmra.mxu0 %v2424
        %v2463 = vpop.f32.mrf.mxu0
        %v2464 = vadd.f32 0.0, %v2463
        %v2465 = vpop.f32.mrf.mxu0
        %v2466 = vpop.f32.mrf.mxu0
        %v2467 = vpop.f32.mrf.mxu0
        %2468 = vdwg.mxu0
        %v2469 = vpack.c.bf16 %v2464, %v2464
        %v2474 = vunpack.c.l.b16 %v2179
        %v2475 = vunpack.c.l.b16 %v2180
        %v2476 = vunpack.c.l.b16 %v2181
        %v2477 = vunpack.c.l.b16 %v2182
        %v2478 = vpack.c.b16 %v2475, %v2474
        %v2479 = vpack.c.b16 %v2477, %v2476
        %v2483 = vsel %vm535, %v2469, 0
        %2485 = vmatprep.subr.bf16.mxu0 0
        %2486 = vmatpush1.bf16.msra.mxu0 0
        %2487 = vmatprep.subr.bf16.mxu0 0
        %2488 = vmatpush1.bf16.msra.mxu0 0
        %2489 = vmatprep.subr.bf16.mxu0 0
        %2490 = vmatpush1.bf16.msra.mxu0 0
        %2491 = vmatprep.subr.bf16.mxu0 0
        %2492 = vmatpush1.bf16.msra.mxu0 0
        %2493 = vmatprep.subr.bf16.mxu0 0
        %2494 = vmatpush1.bf16.msra.mxu0 0
        %2495 = vmatprep.subr.bf16.mxu0 0
        %2496 = vmatpush1.bf16.msra.mxu0 0
        %2497 = vmatprep.subr.bf16.mxu0 0
        %2498 = vmatpush1.bf16.msra.mxu0 %v2479
        %2499 = vmatprep.subr.bf16.mxu0 0
        %2500 = vmatpush1.bf16.msra.mxu0 %v2478
        %2501 = vmatprep.subr.bf16.mxu0 0
        %2502 = vmatpush2.bf16.msra.mxu0 0
        %2503 = vmatprep.subr.bf16.mxu0 0
        %2504 = vmatpush2.bf16.msra.mxu0 0
        %2505 = vmatprep.subr.bf16.mxu0 0
        %2506 = vmatpush2.bf16.msra.mxu0 0
        %2507 = vmatprep.subr.bf16.mxu0 0
        %2508 = vmatpush2.bf16.msra.mxu0 0
        %2509 = vmatprep.subr.bf16.mxu0 0
        %2510 = vmatpush2.bf16.msra.mxu0 0
        %2511 = vmatprep.subr.bf16.mxu0 0
        %2512 = vmatpush2.bf16.msra.mxu0 0
        %2513 = vmatprep.subr.bf16.mxu0 0
        %2514 = vmatpush2.bf16.msra.mxu0 0
        %2515 = vmatprep.subr.bf16.mxu0 0
        %2516 = vmatpush2.bf16.msra.mxu0 0
        %2517 = vmatprep.mubr.bf16.mxu0 0
        %2518 = vmatmul.mubr.bf16.gmra.mxu0 %v2483
        %v2519 = vpop.f32.mrf.mxu0
        %v2520 = vadd.f32 0.0, %v2519
        %v2521 = vpop.f32.mrf.mxu0
        %v2522 = vpop.f32.mrf.mxu0
        %v2523 = vpop.f32.mrf.mxu0
        %2524 = vdwg.mxu0
        %v2525 = vadd.f32 %v2355, %v2520
        %2526 = vrot.lane.b32.xlu0 %v2171, 64
        %v2527 = vpop.permute.xlu0 %2526
        %2528 = vrot.lane.b32.xlu0 %v2172, 64
        %v2529 = vpop.permute.xlu0 %2528
        %v2531 = vsel %vm535, %v2527, 0
        %v2534 = vsel %vm535, %v2529, 0
        %2536 = vmatprep.subr.bf16.mxu0 0
        %2537 = vmatpush1.bf16.xpose.msra.mxu0 0
        %2538 = vmatprep.subr.bf16.mxu0 0
        %2539 = vmatpush1.bf16.xpose.msra.mxu0 0
        %2540 = vmatprep.subr.bf16.mxu0 0
        %2541 = vmatpush1.bf16.xpose.msra.mxu0 0
        %2542 = vmatprep.subr.bf16.mxu0 0
        %2543 = vmatpush1.bf16.xpose.msra.mxu0 0
        %2544 = vmatprep.subr.bf16.mxu0 0
        %2545 = vmatpush1.bf16.xpose.msra.mxu0 0
        %2546 = vmatprep.subr.bf16.mxu0 0
        %2547 = vmatpush1.bf16.xpose.msra.mxu0 0
        %2548 = vmatprep.subr.bf16.mxu0 0
        %2549 = vmatpush1.bf16.xpose.msra.mxu0 0
        %2550 = vmatprep.subr.bf16.mxu0 0
        %2551 = vmatpush1.bf16.xpose.msra.mxu0 %v2534
        %2552 = vmatprep.subr.bf16.mxu0 0
        %2553 = vmatpush2.bf16.xpose.msra.mxu0 0
        %2554 = vmatprep.subr.bf16.mxu0 0
        %2555 = vmatpush2.bf16.xpose.msra.mxu0 0
        %2556 = vmatprep.subr.bf16.mxu0 0
        %2557 = vmatpush2.bf16.xpose.msra.mxu0 0
        %2558 = vmatprep.subr.bf16.mxu0 0
        %2559 = vmatpush2.bf16.xpose.msra.mxu0 0
        %2560 = vmatprep.subr.bf16.mxu0 0
        %2561 = vmatpush2.bf16.xpose.msra.mxu0 0
        %2562 = vmatprep.subr.bf16.mxu0 0
        %2563 = vmatpush2.bf16.xpose.msra.mxu0 0
        %2564 = vmatprep.subr.bf16.mxu0 0
        %2565 = vmatpush2.bf16.xpose.msra.mxu0 0
        %2566 = vmatprep.subr.bf16.mxu0 0
        %2567 = vmatpush2.bf16.xpose.msra.mxu0 0
        %2568 = vmatprep.mubr.bf16.mxu0 0
        %2569 = vmatmul.mubr.bf16.gmra.mxu0 %v2531
        %v2570 = vpop.f32.mrf.mxu0
        %v2571 = vadd.f32 %v871, %v2570
        %v2572 = vpop.f32.mrf.mxu0
        %v2573 = vpop.f32.mrf.mxu0
        %v2574 = vpop.f32.mrf.mxu0
        %2575 = vdwg.mxu0
        %v2576 = vsel %vm919, %v2571, -inf
        %2577 = vmax.xlane.f32.xlu0 %v2576
        %v2578 = vpop.xlane.xlu0 %2577
        %v2579 = vsub.f32 %v2571, %v2578
        %v2580 = vmul.f32 %v2579, 1.442695
        %v2581 = vpow.pop %v2580
        %v2582 = vsel %vm919, %v2581, 0.0
        %2583 = vadd.xlane.f32.xlu0 %v2582
        %v2584 = vpop.xlane.xlu0 %2583
        %v2585 = vrcp.pop %v2584
        %v2586 = vmul.f32 %v2581, %v2585
        %v2587 = vpack.c.bf16 %v2586, %v2586
        %2588 = vrot.lane.b32.xlu0 %v2173, 64
        %v2589 = vpop.permute.xlu0 %2588
        %v2591 = vsel %vm919, %v2587, 0
        %v2594 = vsel %vm935, %v2589, 0
        %2596 = vmatprep.subr.bf16.mxu0 0
        %2597 = vmatpush1.bf16.msra.mxu0 0
        %2598 = vmatprep.subr.bf16.mxu0 0
        %2599 = vmatpush1.bf16.msra.mxu0 0
        %2600 = vmatprep.subr.bf16.mxu0 0
        %2601 = vmatpush1.bf16.msra.mxu0 0
        %2602 = vmatprep.subr.bf16.mxu0 0
        %2603 = vmatpush1.bf16.msra.mxu0 0
        %2604 = vmatprep.subr.bf16.mxu0 0
        %2605 = vmatpush1.bf16.msra.mxu0 0
        %2606 = vmatprep.subr.bf16.mxu0 0
        %2607 = vmatpush1.bf16.msra.mxu0 0
        %2608 = vmatprep.subr.bf16.mxu0 0
        %2609 = vmatpush1.bf16.msra.mxu0 0
        %2610 = vmatprep.subr.bf16.mxu0 0
        %2611 = vmatpush1.bf16.msra.mxu0 %v2594
        %2612 = vmatprep.subr.bf16.mxu0 0
        %2613 = vmatpush2.bf16.msra.mxu0 0
        %2614 = vmatprep.subr.bf16.mxu0 0
        %2615 = vmatpush2.bf16.msra.mxu0 0
        %2616 = vmatprep.subr.bf16.mxu0 0
        %2617 = vmatpush2.bf16.msra.mxu0 0
        %2618 = vmatprep.subr.bf16.mxu0 0
        %2619 = vmatpush2.bf16.msra.mxu0 0
        %2620 = vmatprep.subr.bf16.mxu0 0
        %2621 = vmatpush2.bf16.msra.mxu0 0
        %2622 = vmatprep.subr.bf16.mxu0 0
        %2623 = vmatpush2.bf16.msra.mxu0 0
        %2624 = vmatprep.subr.bf16.mxu0 0
        %2625 = vmatpush2.bf16.msra.mxu0 0
        %2626 = vmatprep.subr.bf16.mxu0 0
        %2627 = vmatpush2.bf16.msra.mxu0 0
        %2628 = vmatprep.mubr.bf16.mxu0 0
        %2629 = vmatmul.mubr.bf16.gmra.mxu0 %v2591
        %v2630 = vpop.f32.mrf.mxu0
        %v2631 = vadd.f32 0.0, %v2630
        %v2632 = vpop.f32.mrf.mxu0
        %v2633 = vpop.f32.mrf.mxu0
        %v2634 = vpop.f32.mrf.mxu0
        %2635 = vdwg.mxu0
        %v2636 = vpack.c.bf16 %v2631, %v2631
        %v2641 = vunpack.c.l.b16 %v2183
        %v2642 = vunpack.c.l.b16 %v2184
        %v2643 = vunpack.c.l.b16 %v2185
        %v2644 = vunpack.c.l.b16 %v2186
        %v2645 = vpack.c.b16 %v2642, %v2641
        %v2646 = vpack.c.b16 %v2644, %v2643
        %v2650 = vsel %vm535, %v2636, 0
        %2652 = vmatprep.subr.bf16.mxu0 0
        %2653 = vmatpush1.bf16.msra.mxu0 0
        %2654 = vmatprep.subr.bf16.mxu0 0
        %2655 = vmatpush1.bf16.msra.mxu0 0
        %2656 = vmatprep.subr.bf16.mxu0 0
        %2657 = vmatpush1.bf16.msra.mxu0 0
        %2658 = vmatprep.subr.bf16.mxu0 0
        %2659 = vmatpush1.bf16.msra.mxu0 0
        %2660 = vmatprep.subr.bf16.mxu0 0
        %2661 = vmatpush1.bf16.msra.mxu0 0
        %2662 = vmatprep.subr.bf16.mxu0 0
        %2663 = vmatpush1.bf16.msra.mxu0 0
        %2664 = vmatprep.subr.bf16.mxu0 0
        %2665 = vmatpush1.bf16.msra.mxu0 %v2646
        %2666 = vmatprep.subr.bf16.mxu0 0
        %2667 = vmatpush1.bf16.msra.mxu0 %v2645
        %2668 = vmatprep.subr.bf16.mxu0 0
        %2669 = vmatpush2.bf16.msra.mxu0 0
        %2670 = vmatprep.subr.bf16.mxu0 0
        %2671 = vmatpush2.bf16.msra.mxu0 0
        %2672 = vmatprep.subr.bf16.mxu0 0
        %2673 = vmatpush2.bf16.msra.mxu0 0
        %2674 = vmatprep.subr.bf16.mxu0 0
        %2675 = vmatpush2.bf16.msra.mxu0 0
        %2676 = vmatprep.subr.bf16.mxu0 0
        %2677 = vmatpush2.bf16.msra.mxu0 0
        %2678 = vmatprep.subr.bf16.mxu0 0
        %2679 = vmatpush2.bf16.msra.mxu0 0
        %2680 = vmatprep.subr.bf16.mxu0 0
        %2681 = vmatpush2.bf16.msra.mxu0 0
        %2682 = vmatprep.subr.bf16.mxu0 0
        %2683 = vmatpush2.bf16.msra.mxu0 0
        %2684 = vmatprep.mubr.bf16.mxu0 0
        %2685 = vmatmul.mubr.bf16.gmra.mxu0 %v2650
        %v2686 = vpop.f32.mrf.mxu0
        %v2687 = vadd.f32 0.0, %v2686
        %v2688 = vpop.f32.mrf.mxu0
        %v2689 = vpop.f32.mrf.mxu0
        %v2690 = vpop.f32.mrf.mxu0
        %2691 = vdwg.mxu0
        %v2692 = vadd.f32 %v2525, %v2687
        %2693 = vrot.lane.b32.xlu0 %v2171, 32
        %v2694 = vpop.permute.xlu0 %2693
        %2695 = vrot.lane.b32.xlu0 %v2172, 32
        %v2696 = vpop.permute.xlu0 %2695
        %v2698 = vsel %vm535, %v2694, 0
        %v2701 = vsel %vm535, %v2696, 0
        %2703 = vmatprep.subr.bf16.mxu0 0
        %2704 = vmatpush1.bf16.xpose.msra.mxu0 0
        %2705 = vmatprep.subr.bf16.mxu0 0
        %2706 = vmatpush1.bf16.xpose.msra.mxu0 0
        %2707 = vmatprep.subr.bf16.mxu0 0
        %2708 = vmatpush1.bf16.xpose.msra.mxu0 0
        %2709 = vmatprep.subr.bf16.mxu0 0
        %2710 = vmatpush1.bf16.xpose.msra.mxu0 0
        %2711 = vmatprep.subr.bf16.mxu0 0
        %2712 = vmatpush1.bf16.xpose.msra.mxu0 0
        %2713 = vmatprep.subr.bf16.mxu0 0
        %2714 = vmatpush1.bf16.xpose.msra.mxu0 0
        %2715 = vmatprep.subr.bf16.mxu0 0
        %2716 = vmatpush1.bf16.xpose.msra.mxu0 0
        %2717 = vmatprep.subr.bf16.mxu0 0
        %2718 = vmatpush1.bf16.xpose.msra.mxu0 %v2701
        %2719 = vmatprep.subr.bf16.mxu0 0
        %2720 = vmatpush2.bf16.xpose.msra.mxu0 0
        %2721 = vmatprep.subr.bf16.mxu0 0
        %2722 = vmatpush2.bf16.xpose.msra.mxu0 0
        %2723 = vmatprep.subr.bf16.mxu0 0
        %2724 = vmatpush2.bf16.xpose.msra.mxu0 0
        %2725 = vmatprep.subr.bf16.mxu0 0
        %2726 = vmatpush2.bf16.xpose.msra.mxu0 0
        %2727 = vmatprep.subr.bf16.mxu0 0
        %2728 = vmatpush2.bf16.xpose.msra.mxu0 0
        %2729 = vmatprep.subr.bf16.mxu0 0
        %2730 = vmatpush2.bf16.xpose.msra.mxu0 0
        %2731 = vmatprep.subr.bf16.mxu0 0
        %2732 = vmatpush2.bf16.xpose.msra.mxu0 0
        %2733 = vmatprep.subr.bf16.mxu0 0
        %2734 = vmatpush2.bf16.xpose.msra.mxu0 0
        %2735 = vmatprep.mubr.bf16.mxu0 0
        %2736 = vmatmul.mubr.bf16.gmra.mxu0 %v2698
        %v2737 = vpop.f32.mrf.mxu0
        %v2738 = vadd.f32 %v871, %v2737
        %v2739 = vpop.f32.mrf.mxu0
        %v2740 = vpop.f32.mrf.mxu0
        %v2741 = vpop.f32.mrf.mxu0
        %2742 = vdwg.mxu0
        %v2743 = vsel %vm919, %v2738, -inf
        %2744 = vmax.xlane.f32.xlu0 %v2743
        %v2745 = vpop.xlane.xlu0 %2744
        %v2746 = vsub.f32 %v2738, %v2745
        %v2747 = vmul.f32 %v2746, 1.442695
        %v2748 = vpow.pop %v2747
        %v2749 = vsel %vm919, %v2748, 0.0
        %2750 = vadd.xlane.f32.xlu0 %v2749
        %v2751 = vpop.xlane.xlu0 %2750
        %v2752 = vrcp.pop %v2751
        %v2753 = vmul.f32 %v2748, %v2752
        %v2754 = vpack.c.bf16 %v2753, %v2753
        %2755 = vrot.lane.b32.xlu0 %v2173, 32
        %v2756 = vpop.permute.xlu0 %2755
        %v2758 = vsel %vm919, %v2754, 0
        %v2761 = vsel %vm935, %v2756, 0
        %2763 = vmatprep.subr.bf16.mxu0 0
        %2764 = vmatpush1.bf16.msra.mxu0 0
        %2765 = vmatprep.subr.bf16.mxu0 0
        %2766 = vmatpush1.bf16.msra.mxu0 0
        %2767 = vmatprep.subr.bf16.mxu0 0
        %2768 = vmatpush1.bf16.msra.mxu0 0
        %2769 = vmatprep.subr.bf16.mxu0 0
        %2770 = vmatpush1.bf16.msra.mxu0 0
        %2771 = vmatprep.subr.bf16.mxu0 0
        %2772 = vmatpush1.bf16.msra.mxu0 0
        %2773 = vmatprep.subr.bf16.mxu0 0
        %2774 = vmatpush1.bf16.msra.mxu0 0
        %2775 = vmatprep.subr.bf16.mxu0 0
        %2776 = vmatpush1.bf16.msra.mxu0 0
        %2777 = vmatprep.subr.bf16.mxu0 0
        %2778 = vmatpush1.bf16.msra.mxu0 %v2761
        %2779 = vmatprep.subr.bf16.mxu0 0
        %2780 = vmatpush2.bf16.msra.mxu0 0
        %2781 = vmatprep.subr.bf16.mxu0 0
        %2782 = vmatpush2.bf16.msra.mxu0 0
        %2783 = vmatprep.subr.bf16.mxu0 0
        %2784 = vmatpush2.bf16.msra.mxu0 0
        %2785 = vmatprep.subr.bf16.mxu0 0
        %2786 = vmatpush2.bf16.msra.mxu0 0
        %2787 = vmatprep.subr.bf16.mxu0 0
        %2788 = vmatpush2.bf16.msra.mxu0 0
        %2789 = vmatprep.subr.bf16.mxu0 0
        %2790 = vmatpush2.bf16.msra.mxu0 0
        %2791 = vmatprep.subr.bf16.mxu0 0
        %2792 = vmatpush2.bf16.msra.mxu0 0
        %2793 = vmatprep.subr.bf16.mxu0 0
        %2794 = vmatpush2.bf16.msra.mxu0 0
        %2795 = vmatprep.mubr.bf16.mxu0 0
        %2796 = vmatmul.mubr.bf16.gmra.mxu0 %v2758
        %v2797 = vpop.f32.mrf.mxu0
        %v2798 = vadd.f32 0.0, %v2797
        %v2799 = vpop.f32.mrf.mxu0
        %v2800 = vpop.f32.mrf.mxu0
        %v2801 = vpop.f32.mrf.mxu0
        %2802 = vdwg.mxu0
        %v2803 = vpack.c.bf16 %v2798, %v2798
        %v2808 = vunpack.c.l.b16 %v2187
        %v2809 = vunpack.c.l.b16 %v2188
        %v2810 = vunpack.c.l.b16 %v2189
        %v2811 = vunpack.c.l.b16 %v2190
        %v2812 = vpack.c.b16 %v2809, %v2808
        %v2813 = vpack.c.b16 %v2811, %v2810
        %v2817 = vsel %vm535, %v2803, 0
        %2819 = vmatprep.subr.bf16.mxu0 0
        %2820 = vmatpush1.bf16.msra.mxu0 0
        %2821 = vmatprep.subr.bf16.mxu0 0
        %2822 = vmatpush1.bf16.msra.mxu0 0
        %2823 = vmatprep.subr.bf16.mxu0 0
        %2824 = vmatpush1.bf16.msra.mxu0 0
        %2825 = vmatprep.subr.bf16.mxu0 0
        %2826 = vmatpush1.bf16.msra.mxu0 0
        %2827 = vmatprep.subr.bf16.mxu0 0
        %2828 = vmatpush1.bf16.msra.mxu0 0
        %2829 = vmatprep.subr.bf16.mxu0 0
        %2830 = vmatpush1.bf16.msra.mxu0 0
        %2831 = vmatprep.subr.bf16.mxu0 0
        %2832 = vmatpush1.bf16.msra.mxu0 %v2813
        %2833 = vmatprep.subr.bf16.mxu0 0
        %2834 = vmatpush1.bf16.msra.mxu0 %v2812
        %2835 = vmatprep.subr.bf16.mxu0 0
        %2836 = vmatpush2.bf16.msra.mxu0 0
        %2837 = vmatprep.subr.bf16.mxu0 0
        %2838 = vmatpush2.bf16.msra.mxu0 0
        %2839 = vmatprep.subr.bf16.mxu0 0
        %2840 = vmatpush2.bf16.msra.mxu0 0
        %2841 = vmatprep.subr.bf16.mxu0 0
        %2842 = vmatpush2.bf16.msra.mxu0 0
        %2843 = vmatprep.subr.bf16.mxu0 0
        %2844 = vmatpush2.bf16.msra.mxu0 0
        %2845 = vmatprep.subr.bf16.mxu0 0
        %2846 = vmatpush2.bf16.msra.mxu0 0
        %2847 = vmatprep.subr.bf16.mxu0 0
        %2848 = vmatpush2.bf16.msra.mxu0 0
        %2849 = vmatprep.subr.bf16.mxu0 0
        %2850 = vmatpush2.bf16.msra.mxu0 0
        %2851 = vmatprep.mubr.bf16.mxu0 0
        %2852 = vmatmul.mubr.bf16.gmra.mxu0 %v2817
        %v2853 = vpop.f32.mrf.mxu0
        %v2854 = vadd.f32 0.0, %v2853
        %v2855 = vpop.f32.mrf.mxu0
        %v2856 = vpop.f32.mrf.mxu0
        %v2857 = vpop.f32.mrf.mxu0
        %2858 = vdwg.mxu0
        %v2859 = vadd.f32 %v2692, %v2854
        %v2860 = vadd.f32 %v1910, %v2859
        %2861 = vadd.xlane.f32.xlu0 %v2860
        %v2862 = vpop.xlane.xlu0 %2861
        %v2863 = vmul.f32 %v2862, %v1547
        %v2864 = vsub.f32 %v2860, %v2863
        %v2865 = vmul.f32 %v2864, %v2864
        %2866 = vadd.xlane.f32.xlu0 %v2865
        %v2867 = vpop.xlane.xlu0 %2866
        %v2868 = vmul.f32 %v2867, %v1547
        %v2869 = vadd.f32 %v2868, 1e-05
        %v2870 = vrsqrt.pop %v2869
        %v2871 = vmul.f32 %v2864, %v2870
        %v2872 = vlaneseq
        %v2873 = vshrl.u32 %v2872, 7
        %v2874 = vsub.s32 2, %v2873
        %v2875 = vrot.slane %v1912, %v2874
        %v2876 = vmul.f32 %v2871, %v2875
        %v2877 = vlaneseq
        %v2878 = vshrl.u32 %v2877, 7
        %v2879 = vsub.s32 3, %v2878
        %v2880 = vrot.slane %v1912, %v2879
        %v2881 = vadd.f32 %v2876, %v2880
        %v2882 = vpack.c.bf16 %v2881, %v2881
        %s2883 = scalar_lea.vmem [#allocation11], 128
        %v2884 = vld [vmem:[%s2883] sm:$0xff]
        %v2885 = vld [vmem:[%s2883 + $0x8] sm:$0xff]
        %v2886 = vld [vmem:[%s2883 + $0x10] sm:$0xff]
        %v2887 = vld [vmem:[%s2883 + $0x18] sm:$0xff]
        %v2888 = vld [vmem:[%s2883 + $0x20] sm:$0xff]
        %v2889 = vld [vmem:[%s2883 + $0x28] sm:$0xff]
        %v2890 = vld [vmem:[%s2883 + $0x30] sm:$0xff]
        %v2891 = vld [vmem:[%s2883 + $0x38] sm:$0xff]
        %v2892 = vld [vmem:[%s2883 + $0x40] sm:$0xff]
        %v2893 = vld [vmem:[%s2883 + $0x48] sm:$0xff]
        %v2894 = vld [vmem:[%s2883 + $0x50] sm:$0xff]
        %v2895 = vld [vmem:[%s2883 + $0x58] sm:$0xff]
        %v2896 = vld [vmem:[%s2883 + $0x60] sm:$0xff]
        %v2897 = vld [vmem:[%s2883 + $0x68] sm:$0xff]
        %v2898 = vld [vmem:[%s2883 + $0x70] sm:$0xff]
        %v2899 = vld [vmem:[%s2883 + $0x78] sm:$0xff]
        %v2900 = vlaneseq
        %v2901 = vshrl.u32 %v2900, 7
        %v2902 = vsub.s32 4, %v2901
        %v2903 = vrot.slane %v1912, %v2902
        %v2904 = vlaneseq
        %v2905 = vshrl.u32 %v2904, 7
        %v2906 = vsub.s32 4, %v2905
        %v2907 = vrot.slane %v1913, %v2906
        %v2924 = vunpack.c.l.b16 %v2884
        %v2925 = vunpack.c.h.b16 %v2884
        %v2926 = vunpack.c.l.b16 %v2885
        %v2927 = vunpack.c.h.b16 %v2885
        %v2928 = vunpack.c.l.b16 %v2886
        %v2929 = vunpack.c.h.b16 %v2886
        %v2930 = vunpack.c.l.b16 %v2887
        %v2931 = vunpack.c.h.b16 %v2887
        %v2932 = vunpack.c.l.b16 %v2888
        %v2933 = vunpack.c.h.b16 %v2888
        %v2934 = vunpack.c.l.b16 %v2889
        %v2935 = vunpack.c.h.b16 %v2889
        %v2936 = vunpack.c.l.b16 %v2890
        %v2937 = vunpack.c.h.b16 %v2890
        %v2938 = vunpack.c.l.b16 %v2891
        %v2939 = vunpack.c.h.b16 %v2891
        %v2940 = vunpack.c.l.b16 %v2892
        %v2941 = vunpack.c.h.b16 %v2892
        %v2942 = vunpack.c.l.b16 %v2893
        %v2943 = vunpack.c.h.b16 %v2893
        %v2944 = vunpack.c.l.b16 %v2894
        %v2945 = vunpack.c.h.b16 %v2894
        %v2946 = vunpack.c.l.b16 %v2895
        %v2947 = vunpack.c.h.b16 %v2895
        %v2948 = vunpack.c.l.b16 %v2896
        %v2949 = vunpack.c.h.b16 %v2896
        %v2950 = vunpack.c.l.b16 %v2897
        %v2951 = vunpack.c.h.b16 %v2897
        %v2952 = vunpack.c.l.b16 %v2898
        %v2953 = vunpack.c.h.b16 %v2898
        %v2954 = vunpack.c.l.b16 %v2899
        %v2955 = vunpack.c.h.b16 %v2899
        %v2956 = vpack.c.b16 %v2926, %v2924
        %v2957 = vpack.c.b16 %v2927, %v2925
        %v2958 = vpack.c.b16 %v2930, %v2928
        %v2959 = vpack.c.b16 %v2931, %v2929
        %v2960 = vpack.c.b16 %v2934, %v2932
        %v2961 = vpack.c.b16 %v2935, %v2933
        %v2962 = vpack.c.b16 %v2938, %v2936
        %v2963 = vpack.c.b16 %v2939, %v2937
        %v2964 = vpack.c.b16 %v2942, %v2940
        %v2965 = vpack.c.b16 %v2943, %v2941
        %v2966 = vpack.c.b16 %v2946, %v2944
        %v2967 = vpack.c.b16 %v2947, %v2945
        %v2968 = vpack.c.b16 %v2950, %v2948
        %v2969 = vpack.c.b16 %v2951, %v2949
        %v2970 = vpack.c.b16 %v2954, %v2952
        %v2971 = vpack.c.b16 %v2955, %v2953
        %2988 = vmatprep.subr.bf16.mxu0 %v2971
        %2989 = vmatpush1.bf16.msra.mxu0 %v2970
        %2990 = vmatprep.subr.bf16.mxu0 %v2969
        %2991 = vmatpush1.bf16.msra.mxu0 %v2968
        %2992 = vmatprep.subr.bf16.mxu0 %v2967
        %2993 = vmatpush1.bf16.msra.mxu0 %v2966
        %2994 = vmatprep.subr.bf16.mxu0 %v2965
        %2995 = vmatpush1.bf16.msra.mxu0 %v2964
        %2996 = vmatprep.subr.bf16.mxu0 %v2963
        %2997 = vmatpush1.bf16.msra.mxu0 %v2962
        %2998 = vmatprep.subr.bf16.mxu0 %v2961
        %2999 = vmatpush1.bf16.msra.mxu0 %v2960
        %3000 = vmatprep.subr.bf16.mxu0 %v2959
        %3001 = vmatpush1.bf16.msra.mxu0 %v2958
        %3002 = vmatprep.subr.bf16.mxu0 %v2957
        %3003 = vmatpush1.bf16.msra.mxu0 %v2956
        %3004 = vmatprep.subr.bf16.mxu0 0
        %3005 = vmatpush2.bf16.msra.mxu0 0
        %3006 = vmatprep.subr.bf16.mxu0 0
        %3007 = vmatpush2.bf16.msra.mxu0 0
        %3008 = vmatprep.subr.bf16.mxu0 0
        %3009 = vmatpush2.bf16.msra.mxu0 0
        %3010 = vmatprep.subr.bf16.mxu0 0
        %3011 = vmatpush2.bf16.msra.mxu0 0
        %3012 = vmatprep.subr.bf16.mxu0 0
        %3013 = vmatpush2.bf16.msra.mxu0 0
        %3014 = vmatprep.subr.bf16.mxu0 0
        %3015 = vmatpush2.bf16.msra.mxu0 0
        %3016 = vmatprep.subr.bf16.mxu0 0
        %3017 = vmatpush2.bf16.msra.mxu0 0
        %3018 = vmatprep.subr.bf16.mxu0 0
        %3019 = vmatpush2.bf16.msra.mxu0 0
        %3020 = vmatprep.mubr.bf16.mxu0 0
        %3021 = vmatmul.mubr.bf16.gmra.mxu0 %v2882
        %v3022 = vpop.f32.mrf.mxu0
        %v3023 = vadd.f32 %v2903, %v3022
        %v3024 = vpop.f32.mrf.mxu0
        %v3025 = vadd.f32 %v2907, %v3024
        %v3026 = vpop.f32.mrf.mxu0
        %v3027 = vpop.f32.mrf.mxu0
        %3028 = vdwg.mxu0
        %v3029 = vmax.f32 %v3023, 0.0
        %v3030 = vmax.f32 %v3025, 0.0
        %v3031 = vpack.c.bf16 %v3029, %v3029
        %v3032 = vpack.c.bf16 %v3030, %v3030
        %s3033 = scalar_lea.vmem [#allocation13], 128
        %v3034 = vld [vmem:[%s3033] sm:$0xf]
        %v3035 = vld [vmem:[%s3033 + $0x4] sm:$0xf]
        %v3036 = vld [vmem:[%s3033 + $0x8] sm:$0xf]
        %v3037 = vld [vmem:[%s3033 + $0xc] sm:$0xf]
        %v3038 = vld [vmem:[%s3033 + $0x10] sm:$0xf]
        %v3039 = vld [vmem:[%s3033 + $0x14] sm:$0xf]
        %v3040 = vld [vmem:[%s3033 + $0x18] sm:$0xf]
        %v3041 = vld [vmem:[%s3033 + $0x1c] sm:$0xf]
        %v3042 = vld [vmem:[%s3033 + $0x20] sm:$0xf]
        %v3043 = vld [vmem:[%s3033 + $0x24] sm:$0xf]
        %v3044 = vld [vmem:[%s3033 + $0x28] sm:$0xf]
        %v3045 = vld [vmem:[%s3033 + $0x2c] sm:$0xf]
        %v3046 = vld [vmem:[%s3033 + $0x30] sm:$0xf]
        %v3047 = vld [vmem:[%s3033 + $0x34] sm:$0xf]
        %v3048 = vld [vmem:[%s3033 + $0x38] sm:$0xf]
        %v3049 = vld [vmem:[%s3033 + $0x3c] sm:$0xf]
        %v3050 = vld [vmem:[%s3033 + $0x40] sm:$0xf]
        %v3051 = vld [vmem:[%s3033 + $0x44] sm:$0xf]
        %v3052 = vld [vmem:[%s3033 + $0x48] sm:$0xf]
        %v3053 = vld [vmem:[%s3033 + $0x4c] sm:$0xf]
        %v3054 = vld [vmem:[%s3033 + $0x50] sm:$0xf]
        %v3055 = vld [vmem:[%s3033 + $0x54] sm:$0xf]
        %v3056 = vld [vmem:[%s3033 + $0x58] sm:$0xf]
        %v3057 = vld [vmem:[%s3033 + $0x5c] sm:$0xf]
        %v3058 = vld [vmem:[%s3033 + $0x60] sm:$0xf]
        %v3059 = vld [vmem:[%s3033 + $0x64] sm:$0xf]
        %v3060 = vld [vmem:[%s3033 + $0x68] sm:$0xf]
        %v3061 = vld [vmem:[%s3033 + $0x6c] sm:$0xf]
        %v3062 = vld [vmem:[%s3033 + $0x70] sm:$0xf]
        %v3063 = vld [vmem:[%s3033 + $0x74] sm:$0xf]
        %v3064 = vld [vmem:[%s3033 + $0x78] sm:$0xf]
        %v3065 = vld [vmem:[%s3033 + $0x7c] sm:$0xf]
        %v3066 = vlaneseq
        %v3067 = vshrl.u32 %v3066, 7
        %v3068 = vsub.s32 5, %v3067
        %v3069 = vrot.slane %v1912, %v3068
        %v3102 = vunpack.c.l.b16 %v3034
        %v3103 = vunpack.c.l.b16 %v3035
        %v3104 = vunpack.c.l.b16 %v3036
        %v3105 = vunpack.c.l.b16 %v3037
        %v3106 = vunpack.c.l.b16 %v3038
        %v3107 = vunpack.c.l.b16 %v3039
        %v3108 = vunpack.c.l.b16 %v3040
        %v3109 = vunpack.c.l.b16 %v3041
        %v3110 = vunpack.c.l.b16 %v3042
        %v3111 = vunpack.c.l.b16 %v3043
        %v3112 = vunpack.c.l.b16 %v3044
        %v3113 = vunpack.c.l.b16 %v3045
        %v3114 = vunpack.c.l.b16 %v3046
        %v3115 = vunpack.c.l.b16 %v3047
        %v3116 = vunpack.c.l.b16 %v3048
        %v3117 = vunpack.c.l.b16 %v3049
        %v3118 = vunpack.c.l.b16 %v3050
        %v3119 = vunpack.c.l.b16 %v3051
        %v3120 = vunpack.c.l.b16 %v3052
        %v3121 = vunpack.c.l.b16 %v3053
        %v3122 = vunpack.c.l.b16 %v3054
        %v3123 = vunpack.c.l.b16 %v3055
        %v3124 = vunpack.c.l.b16 %v3056
        %v3125 = vunpack.c.l.b16 %v3057
        %v3126 = vunpack.c.l.b16 %v3058
        %v3127 = vunpack.c.l.b16 %v3059
        %v3128 = vunpack.c.l.b16 %v3060
        %v3129 = vunpack.c.l.b16 %v3061
        %v3130 = vunpack.c.l.b16 %v3062
        %v3131 = vunpack.c.l.b16 %v3063
        %v3132 = vunpack.c.l.b16 %v3064
        %v3133 = vunpack.c.l.b16 %v3065
        %v3134 = vpack.c.b16 %v3103, %v3102
        %v3135 = vpack.c.b16 %v3105, %v3104
        %v3136 = vpack.c.b16 %v3107, %v3106
        %v3137 = vpack.c.b16 %v3109, %v3108
        %v3138 = vpack.c.b16 %v3111, %v3110
        %v3139 = vpack.c.b16 %v3113, %v3112
        %v3140 = vpack.c.b16 %v3115, %v3114
        %v3141 = vpack.c.b16 %v3117, %v3116
        %v3142 = vpack.c.b16 %v3119, %v3118
        %v3143 = vpack.c.b16 %v3121, %v3120
        %v3144 = vpack.c.b16 %v3123, %v3122
        %v3145 = vpack.c.b16 %v3125, %v3124
        %v3146 = vpack.c.b16 %v3127, %v3126
        %v3147 = vpack.c.b16 %v3129, %v3128
        %v3148 = vpack.c.b16 %v3131, %v3130
        %v3149 = vpack.c.b16 %v3133, %v3132
        %3166 = vmatprep.subr.bf16.mxu0 0
        %3167 = vmatpush1.bf16.msra.mxu0 %v3141
        %3168 = vmatprep.subr.bf16.mxu0 0
        %3169 = vmatpush1.bf16.msra.mxu0 %v3140
        %3170 = vmatprep.subr.bf16.mxu0 0
        %3171 = vmatpush1.bf16.msra.mxu0 %v3139
        %3172 = vmatprep.subr.bf16.mxu0 0
        %3173 = vmatpush1.bf16.msra.mxu0 %v3138
        %3174 = vmatprep.subr.bf16.mxu0 0
        %3175 = vmatpush1.bf16.msra.mxu0 %v3137
        %3176 = vmatprep.subr.bf16.mxu0 0
        %3177 = vmatpush1.bf16.msra.mxu0 %v3136
        %3178 = vmatprep.subr.bf16.mxu0 0
        %3179 = vmatpush1.bf16.msra.mxu0 %v3135
        %3180 = vmatprep.subr.bf16.mxu0 0
        %3181 = vmatpush1.bf16.msra.mxu0 %v3134
        %3182 = vmatprep.subr.bf16.mxu0 0
        %3183 = vmatpush2.bf16.msra.mxu0 %v3149
        %3184 = vmatprep.subr.bf16.mxu0 0
        %3185 = vmatpush2.bf16.msra.mxu0 %v3148
        %3186 = vmatprep.subr.bf16.mxu0 0
        %3187 = vmatpush2.bf16.msra.mxu0 %v3147
        %3188 = vmatprep.subr.bf16.mxu0 0
        %3189 = vmatpush2.bf16.msra.mxu0 %v3146
        %3190 = vmatprep.subr.bf16.mxu0 0
        %3191 = vmatpush2.bf16.msra.mxu0 %v3145
        %3192 = vmatprep.subr.bf16.mxu0 0
        %3193 = vmatpush2.bf16.msra.mxu0 %v3144
        %3194 = vmatprep.subr.bf16.mxu0 0
        %3195 = vmatpush2.bf16.msra.mxu0 %v3143
        %3196 = vmatprep.subr.bf16.mxu0 0
        %3197 = vmatpush2.bf16.msra.mxu0 %v3142
        %3198 = vmatprep.mubr.bf16.mxu0 %v3032
        %3199 = vmatmul.mubr.bf16.gmra.mxu0 %v3031
        %v3200 = vpop.f32.mrf.mxu0
        %v3201 = vadd.f32 %v3069, %v3200
        %v3202 = vpop.f32.mrf.mxu0
        %v3203 = vpop.f32.mrf.mxu0
        %v3204 = vpop.f32.mrf.mxu0
        %3205 = vdwg.mxu0
        %v3206 = vadd.f32 %v2881, %v3201
        %3207 = vadd.xlane.f32.xlu0 %v3206
        %v3208 = vpop.xlane.xlu0 %3207
        %v3209 = vmul.f32 %v3208, %v1547
        %v3210 = vsub.f32 %v3206, %v3209
        %v3211 = vmul.f32 %v3210, %v3210
        %3212 = vadd.xlane.f32.xlu0 %v3211
        %v3213 = vpop.xlane.xlu0 %3212
        %v3214 = vmul.f32 %v3213, %v1547
        %v3215 = vadd.f32 %v3214, 1e-05
        %v3216 = vrsqrt.pop %v3215
        %v3217 = vmul.f32 %v3210, %v3216
        %v3218 = vlaneseq
        %v3219 = vshrl.u32 %v3218, 7
        %v3220 = vsub.s32 6, %v3219
        %v3221 = vrot.slane %v1912, %v3220
        %v3222 = vmul.f32 %v3217, %v3221
        %v3223 = vlaneseq
        %v3224 = vshrl.u32 %v3223, 7
        %v3225 = vsub.s32 7, %v3224
        %v3226 = vrot.slane %v1912, %v3225
        %v3227 = vadd.f32 %v3222, %v3226
        %v3228 = vrot.slane %v3227, 4
        %v3229 = vadd.f32 %v3227, %v3228
        %v3230 = vrot.slane %v3229, 2
        %v3231 = vadd.f32 %v3229, %v3230
        %v3232 = vrot.slane %v3231, 1
        %v3233 = vadd.f32 %v3231, %v3232
        %v3234 = vrcp.pop 8.0
        %v3235 = vmul.f32 %v3233, %v3234
        %3236 = vst [vmem:[%s505] sm:$0x1] %v3235
        %s3237 = sand.u32 %s266, 1
        %s3238 = scalar_lea.sflag [#allocation4], %s3237
        %s3239 = sand.u32 %s266, 1
        %s3240 = scalar_lea.vmem [#allocation16], %s3239
        // Predicated region
        $region93: #{tpu_custom_call.1} parent=59 // pred_check
          %p3241 = pneg %p276
        $region94: #{tpu_custom_call.1} parent=59 // pred_check_branch
          %3243 = sbr.rel (%p3241) target = $region96
        $region95: #{tpu_custom_call.1} parent=59 // pred_region
          %s3245 = ssub.s32 16, 16
          %3246 = vsyncadd %s3238, %s3245
          %s3247 = smul.addr %s33, 16
          %s3248 = scalar_lea.hbm %s10, %s3247
          %s3250 = sshll.u32 %s3240, 4
          %s3251 = int_to_ptr.vmem [resolvable:$true] %s3250
          %3253 = dma.vmem_to_hbm [thread:$0]  %s3251, 16, %s3248, %s3238
        $region96: #{tpu_custom_call.1} parent=59 // pred_fallthru
          _
      $region60: #{tpu_custom_call.1} parent=5 // pred_fallthru
        _
      %p3254 = scmp.le.s32.totalorder 2, %s28
      // Predicated region
      $region97: #{tpu_custom_call.1} parent=5 // pred_check
        %p3255 = pneg %p3254
      $region98: #{tpu_custom_call.1} parent=5 // pred_check_branch
        %3257 = sbr.rel (%p3255) target = $region100
      $region99: #{tpu_custom_call.1} parent=5 // pred_region
        %s3258 = ssub.s32 %s28, 2
        // Predicated region
        $region101: #{tpu_custom_call.1} parent=99 // pred_check
          %p3259 = pneg %p282
        $region102: #{tpu_custom_call.1} parent=99 // pred_check_branch
          %3261 = sbr.rel (%p3259) target = $region104
        $region103: #{tpu_custom_call.1} parent=99 // pred_region
          %s3262 = sand.u32 %s267, 1
          %s3263 = scalar_lea.sflag [#allocation4], %s3262
          %s3264 = sand.u32 %s267, 1
          %s3265 = scalar_lea.vmem [#allocation16], %s3264
          %3266 = dma.done %s3263, 16
        $region104: #{tpu_custom_call.1} parent=99 // pred_fallthru
          _
      $region100: #{tpu_custom_call.1} parent=5 // pred_fallthru
        _
    $region6: #{tpu_custom_call.1} parent=1 // loop_footer
      %s32 = sadd.s32 1, %s28
    $region7: #{tpu_custom_call.1} parent=1 // loop_footer_branch
      %27 = sbr.rel target = $region3
    $region8: #{tpu_custom_call.1} parent=1 // loop_exit
      _
    %3267 = vsyncpa [#allocation3], 1
    %s3268 = scalar_lea.sflag [#allocation3], 1
    %3269 = vsyncpa %s3268, 1
    %3270 = vsyncpa [#allocation6], 1
    %s3271 = scalar_lea.sflag [#allocation6], 1
    %3272 = vsyncpa %s3271, 1
    %3273 = vsyncpa [#allocation9], 1
    %3274 = vsyncpa [#allocation12], 1
    %3275 = vsyncpa [#allocation15], 1
    %3276 = vsyncpa [#allocation4], 1
    %s3277 = scalar_lea.sflag [#allocation4], 1
    %3278 = vsyncpa %s3277, 1

</llo_original>
